<compile_context>
chip_gen: v5e
topology: v5e:2x2
jax: 0.10.0
libtpu: 0.0.40
codegen_flags: <defaults>
</compile_context>

<pallas_src>
import functools

import numpy as np
import jax
import jax.numpy as jnp
from jax.experimental import pallas as pl
from jax.experimental.pallas import tpu as pltpu


# Static (shape-independent) dedup table: the 36 (tap k, output-parity q) im2col slots map
# onto only 16 distinct (source-parity, lane-shift, border-mask) pieces.
def _build_combos():
    combos = {}
    for kh in range(3):
        for kw in range(3):
            k = kh * 3 + kw
            dh, dw = kh - 1, kw - 1
            for a in range(2):
                for b in range(2):
                    q = 2 * a + b
                    sh, sw = a + dh, b + dw
                    ph, cah = sh % 2, sh // 2
                    pw, caw = sw % 2, sw // 2
                    combos.setdefault((ph, cah, pw, caw), []).append((k, q))
    return tuple((key, tuple(users)) for key, users in combos.items())


_COMBOS = _build_combos()


# ----------------------------- Pallas kernel -----------------------------

def _complex_down_kernel(
    xr_ref, xi_ref, masks_ref, valid_ref,
    w1_ref, b1_ref, bn1_ref,
    w2_ref, b2_ref, bn2_ref,
    outr_ref, outi_ref,
    slab_ref,
    *, Wo, n_valid, mask_stats):
    f32 = jnp.float32
    bf16 = jnp.bfloat16
    Cp = xr_ref.shape[0]
    M = xr_ref.shape[1]
    Mo = M // 4
    eps = 1e-5

    # Hoisted, pre-broadcast border masks (JAX does not CSE broadcast_in_dim).
    masks = masks_ref[...]                          # (9, Mo) f32
    bmask = {}
    for (_, cah, _, caw), _users in _COMBOS:
        if cah != 0 or caw != 0:
            mk = (cah + 1) * 3 + (caw + 1)
            if mk not in bmask:
                bmask[mk] = jnp.broadcast_to(masks[mk:mk + 1, :], (Cp, Mo))

    def build_slab(zr, zi):
        """Fill slab_ref (18*Cp, M) bf16 with the stacked [real; imag] im2col slab of a
        3x3 'same' conv in the polyphase-block layout.  Slot (tap k, parity q) holds, at
        output lane m, the input value at spatial offset (k//3 - 1, k%3 - 1), 0 off-image."""
        for (ph, cah, pw, caw), users in _COMBOS:
            qs = 2 * ph + pw                        # source parity block
            pr = zr[:, qs * Mo:(qs + 1) * Mo]
            pi = zi[:, qs * Mo:(qs + 1) * Mo]
            delta = cah * Wo + caw                  # within-block lane shift
            if delta != 0:
                shift = (-delta) % Mo
                pr = pltpu.roll(pr, shift=shift, axis=1)
                pi = pltpu.roll(pi, shift=shift, axis=1)
            if cah != 0 or caw != 0:                # zero the padding=1 border
                m = bmask[(cah + 1) * 3 + (caw + 1)]
                pr = pr * m
                pi = pi * m
            pr = pr.astype(bf16)
            pi = pi.astype(bf16)
            for (k, q) in users:                    # dedup: one piece, many slab slots
                slab_ref[k * Cp:(k + 1) * Cp, q * Mo:(q + 1) * Mo] = pr
                slab_ref[(9 + k) * Cp:(10 + k) * Cp, q * Mo:(q + 1) * Mo] = pi

    def cconv(zr, zi, w_ref, b_ref):
        # ComplexConv2d as one 2x2-block matmul: [yr; yi] = [[Wr,-Wi],[Wi,Wr]] @ [zr9; zi9].
        build_slab(zr, zi)
        y = jnp.dot(w_ref[...], slab_ref[...], preferred_element_type=f32) + b_ref[...]
        return y[0:Cp, :], y[Cp:2 * Cp, :]

    def cbn_relu(zr, zi, bn_ref):
        # ComplexBatchNorm2d (training-mode batch stats, affine) + complex_relu, with
        # centering/whitening/affine folded into per-channel [[a_rr,a_ri],[a_ir,a_ii]] + c.
        if mask_stats:
            vm = valid_ref[...]                     # (1, M): 1 on real lanes, 0 on padding
            zr_s = zr * vm
            zi_s = zi * vm
        else:
            zr_s, zi_s = zr, zi
        inv_n = 1.0 / float(n_valid)
        mr = jnp.sum(zr_s, axis=1, keepdims=True) * inv_n
        mi = jnp.sum(zi_s, axis=1, keepdims=True) * inv_n
        crr = jnp.sum(zr_s * zr, axis=1, keepdims=True) * inv_n - mr * mr + eps
        cii = jnp.sum(zi_s * zi, axis=1, keepdims=True) * inv_n - mi * mi + eps
        cri = jnp.sum(zr_s * zi, axis=1, keepdims=True) * inv_n - mr * mi

        s = jnp.sqrt(crr * cii - cri * cri)
        t = jnp.sqrt(crr + cii + 2.0 * s)
        inv_st = 1.0 / (s * t)                      # per-channel scalar: exact, negligible
        rrr = (cii + s) * inv_st
        rii = (crr + s) * inv_st
        rri = -cri * inv_st

        bn = bn_ref[...]                            # (Cp, 5) = [Wrr, Wii, Wri, Br, Bi]
        wrr, wii, wri = bn[:, 0:1], bn[:, 1:2], bn[:, 2:3]
        beta_r, beta_i = bn[:, 3:4], bn[:, 4:5]
        a_rr = wrr * rrr + wri * rri
        a_ri = wrr * rri + wri * rii
        a_ir = wri * rrr + wii * rri
        a_ii = wri * rri + wii * rii
        c_r = beta_r - a_rr * mr - a_ri * mi
        c_i = beta_i - a_ir * mr - a_ii * mi
        or_ = jnp.maximum(a_rr * zr + a_ri * zi + c_r, 0.0)
        oi_ = jnp.maximum(a_ir * zr + a_ii * zi + c_i, 0.0)
        return or_, oi_

    # ComplexDoubleConv: (conv -> bn -> complex_relu) x 2
    yr, yi = cconv(xr_ref[...], xi_ref[...], w1_ref, b1_ref)
    yr, yi = cbn_relu(yr, yi, bn1_ref)
    yr, yi = cconv(yr, yi, w2_ref, b2_ref)
    yr, yi = cbn_relu(yr, yi, bn2_ref)

    # PseudoComplexAvgPool2d(2): the 4 window positions are the 4 parity lane blocks.
    outr_ref[...] = 0.25 * (yr[:, 0:Mo] + yr[:, Mo:2 * Mo]
                            + yr[:, 2 * Mo:3 * Mo] + yr[:, 3 * Mo:4 * Mo])
    outi_ref[...] = 0.25 * (yi[:, 0:Mo] + yi[:, Mo:2 * Mo]
                            + yi[:, 2 * Mo:3 * Mo] + yi[:, 3 * Mo:4 * Mo])


# ------------------------------ glue (host) ------------------------------

def _round_up(x, m):
    return (x + m - 1) // m * m


@functools.lru_cache(maxsize=None)
def _border_masks_np(n_img, Ho, Wo, Mo):
    """(9, Mo) masks: row (cah+1)*3+(caw+1) is 1 where the pooled coord (ho+cah, wo+caw)
    lies inside the image (reproduces the conv's zero padding), plus a (1, 4*Mo)
    valid-lane mask for lane padding."""
    j = np.arange(Mo)
    wo = j % Wo
    ho = (j // Wo) % Ho
    masks = np.zeros((9, Mo), np.float32)
    for cah in (-1, 0, 1):
        for caw in (-1, 0, 1):
            ok = (ho + cah >= 0) & (ho + cah < Ho) & (wo + caw >= 0) & (wo + caw < Wo)
            masks[(cah + 1) * 3 + (caw + 1)] = ok
    valid_lane = (j < n_img * Ho * Wo).astype(np.float32)
    valid = np.tile(valid_lane[None, :], (1, 4))          # (1, 4*Mo)
    return masks, valid


def _pack_block_conv(wr, wi, br, bi, Cp):
    """PyTorch-layout complex conv (wr/wi: (Co,Ci,3,3), br/bi: (Co,)) -> block-matmul form:
    W = [[Wr, -Wi], [Wi, Wr]] as (2Cp, 18Cp) bf16 (column = half*9Cp + (kh*3+kw)*Cp + ci)
    and bias (2Cp, 1) f32 = [br - bi; br + bi] (channel/column zero-padded to Cp)."""
    co, ci = wr.shape[0], wr.shape[1]

    def pad_pack(w):
        w = jnp.pad(w, ((0, Cp - co), (0, Cp - ci), (0, 0), (0, 0)))
        return jnp.transpose(w, (0, 2, 3, 1)).reshape(Cp, 9 * Cp)

    wr_p, wi_p = pad_pack(wr), pad_pack(wi)
    w_block = jnp.concatenate(
        [jnp.concatenate([wr_p, -wi_p], axis=1),
         jnp.concatenate([wi_p, wr_p], axis=1)], axis=0).astype(jnp.bfloat16)
    br_p = jnp.pad(br, (0, Cp - co))
    bi_p = jnp.pad(bi, (0, Cp - co))
    b_block = jnp.concatenate([br_p - bi_p, br_p + bi_p]).reshape(2 * Cp, 1)
    return w_block, b_block.astype(jnp.float32)


def _pack_bn(w, b, Cp):
    c = w.shape[0]
    w = jnp.pad(w, ((0, Cp - c), (0, 0)))
    b = jnp.pad(b, ((0, Cp - c), (0, 0)))
    return jnp.concatenate([w, b], axis=1).astype(jnp.float32)    # (Cp, 5)


@jax.jit
def complex_down(x, params):
    """x: complex64 NCHW (like the PyTorch module). Returns complex64 (N, Cout, H/2, W/2)."""
    N, Cin, H, W = x.shape
    Ho, Wo = H // 2, W // 2
    Cmid = params["w1r"].shape[0]
    Cout = params["w2r"].shape[0]
    Cp = _round_up(max(Cin, Cmid, Cout), 16)     # bf16 sublane tile = 16 rows
    Mo_valid = N * Ho * Wo
    Mo = _round_up(Mo_valid, 128)                # lane tile = 128
    M = 4 * Mo

    def to_blocks(v):
        # NCHW -> (Cp, 4*Mo): m = (2*(h%2)+(w%2))*Mo + (n*Ho + h//2)*Wo + (w//2)
        C = v.shape[1]
        v = v.reshape(N, C, Ho, 2, Wo, 2).transpose(1, 3, 5, 0, 2, 4)   # (C,2,2,N,Ho,Wo)
        v = v.reshape(C, 4, Mo_valid)
        v = jnp.pad(v, ((0, Cp - C), (0, 0), (0, Mo - Mo_valid)))
        return v.reshape(Cp, M).astype(jnp.float32)

    xr = to_blocks(jnp.real(x))
    xi = to_blocks(jnp.imag(x))
    masks_np, valid_np = _border_masks_np(N, Ho, Wo, Mo)
    masks = jnp.asarray(masks_np)
    valid = jnp.asarray(valid_np)

    w1, b1 = _pack_block_conv(params["w1r"], params["w1i"], params["b1r"], params["b1i"], Cp)
    w2, b2 = _pack_block_conv(params["w2r"], params["w2i"], params["b2r"], params["b2i"], Cp)
    bn1 = _pack_bn(params["bn1_w"], params["bn1_b"], Cp)
    bn2 = _pack_bn(params["bn2_w"], params["bn2_b"], Cp)

    # VMEM budget: one bf16 [real; imag] im2col slab + f32 activations/temporaries.
    slab_bytes = 18 * Cp * M * 2
    act_bytes = Cp * M * 4
    est = slab_bytes + 14 * act_bytes + 2 * (2 * Cp) * (18 * Cp) * 2 + 10 * M * 4
    vmem_limit = int(min(max(2 * est, 32 * 1024 * 1024), 56 * 1024 * 1024))

    vmem = pl.BlockSpec(memory_space=pltpu.MemorySpace.VMEM)
    kernel = functools.partial(
        _complex_down_kernel, Wo=Wo, n_valid=4 * Mo_valid,
        mask_stats=(Mo_valid != Mo))

    outr, outi = pl.pallas_call(
        kernel,
        out_shape=(jax.ShapeDtypeStruct((Cp, Mo), jnp.float32),
                   jax.ShapeDtypeStruct((Cp, Mo), jnp.float32)),
        in_specs=[vmem] * 10,
        out_specs=(vmem, vmem),
        scratch_shapes=[pltpu.VMEM((18 * Cp, M), jnp.bfloat16)],
        compiler_params=pltpu.CompilerParams(vmem_limit_bytes=vmem_limit),
    )(xr, xi, masks, valid, w1, b1, bn1, w2, b2, bn2)

    def from_blocks(o):
        o = o[:Cout, :Mo_valid].reshape(Cout, N, Ho, Wo)
        return o.transpose(1, 0, 2, 3)

    return jax.lax.complex(from_blocks(outr), from_blocks(outi))


# -------------------------- pure-JAX f32 reference --------------------------

def _ref_complex_conv(xr, xi, wr, wi, br, bi):
    dn = ("NCHW", "OIHW", "NCHW")

    def conv(v, w, b):
        y = jax.lax.conv_general_dilated(v, w, (1, 1), ((1, 1), (1, 1)),
                                         dimension_numbers=dn,
                                         precision=jax.lax.Precision.HIGHEST)
        return y + b.reshape(1, -1, 1, 1)

    return (conv(xr, wr, br) - conv(xi, wi, bi),
            conv(xi, wr, br) + conv(xr, wi, bi))


def _ref_complex_bn_relu(zr, zi, w, b, eps=1e-5):
    ax = (0, 2, 3)

    def bc(v):
        return v.reshape(1, -1, 1, 1)

    mr, mi = zr.mean(ax), zi.mean(ax)
    cr, ci = zr - bc(mr), zi - bc(mi)
    crr = (cr * cr).mean(ax) + eps
    cii = (ci * ci).mean(ax) + eps
    cri = (cr * ci).mean(ax)
    s = jnp.sqrt(crr * cii - cri * cri)
    t = jnp.sqrt(crr + cii + 2.0 * s)
    ist = 1.0 / (s * t)
    rrr, rii, rri = (cii + s) * ist, (crr + s) * ist, -cri * ist
    nr = bc(rrr) * cr + bc(rri) * ci
    ni = bc(rii) * ci + bc(rri) * cr
    or_ = bc(w[:, 0]) * nr + bc(w[:, 2]) * ni + bc(b[:, 0])
    oi_ = bc(w[:, 2]) * nr + bc(w[:, 1]) * ni + bc(b[:, 1])
    return jnp.maximum(or_, 0.0), jnp.maximum(oi_, 0.0)


@jax.jit
def complex_down_ref(x, params):
    yr, yi = _ref_complex_conv(jnp.real(x), jnp.imag(x),
                               params["w1r"], params["w1i"], params["b1r"], params["b1i"])
    yr, yi = _ref_complex_bn_relu(yr, yi, params["bn1_w"], params["bn1_b"])
    yr, yi = _ref_complex_conv(yr, yi,
                               params["w2r"], params["w2i"], params["b2r"], params["b2i"])
    yr, yi = _ref_complex_bn_relu(yr, yi, params["bn2_w"], params["bn2_b"])

    def pool(v):
        n, c, h, w = v.shape
        return v.reshape(n, c, h // 2, 2, w // 2, 2).mean(axis=(3, 5))

    return jax.lax.complex(pool(yr), pool(yi))


def init_params(key, in_ch, out_ch):
    """Parameters matching ComplexDoubleConv(in_ch, out_ch) (mid_ch = out_ch)."""
    mid_ch = out_ch
    ks = jax.random.split(key, 8)

    def conv_w(k, ci, co):
        fan_in = ci * 9
        return jax.random.normal(k, (co, ci, 3, 3), jnp.float32) / np.sqrt(float(fan_in))

    def bn_w(c):
        # complexPyTorch init: weight[:, :2] = sqrt(2), weight[:, 2] = 0, bias = 0
        w = np.zeros((c, 3), np.float32)
        w[:, 0] = np.sqrt(2.0)
        w[:, 1] = np.sqrt(2.0)
        return jnp.asarray(w)

    return {
        "w1r": conv_w(ks[0], in_ch, mid_ch),
        "w1i": conv_w(ks[1], in_ch, mid_ch),
        "b1r": 0.1 * jax.random.normal(ks[2], (mid_ch,), jnp.float32),
        "b1i": 0.1 * jax.random.normal(ks[3], (mid_ch,), jnp.float32),
        "bn1_w": bn_w(mid_ch),
        "bn1_b": jnp.zeros((mid_ch, 2), jnp.float32),
        "w2r": conv_w(ks[4], mid_ch, out_ch),
        "w2i": conv_w(ks[5], mid_ch, out_ch),
        "b2r": 0.1 * jax.random.normal(ks[6], (out_ch,), jnp.float32),
        "b2i": 0.1 * jax.random.normal(ks[7], (out_ch,), jnp.float32),
        "bn2_w": bn_w(out_ch),
        "bn2_b": jnp.zeros((out_ch, 2), jnp.float32),
    }


if __name__ == "__main__":
    key = jax.random.PRNGKey(0)
    N, Cin, Cout, H, W = 2, 4, 8, 16, 16

    kx_r, kx_i, kp = jax.random.split(key, 3)
    x_real = jax.random.normal(kx_r, (N, Cin, H, W), jnp.float32)
    x_imag = jax.random.normal(kx_i, (N, Cin, H, W), jnp.float32)
    x = jax.lax.complex(x_real, x_imag)   # complex64 NCHW, like the torch module

    params = init_params(kp, Cin, Cout)

    out = jax.block_until_ready(complex_down(x, params))
    assert out.shape == (N, Cout, H // 2, W // 2), out.shape
    assert out.dtype == jnp.complex64, out.dtype

    ref = jax.block_until_ready(complex_down_ref(x, params))
    np.testing.assert_allclose(np.asarray(jnp.real(out)), np.asarray(jnp.real(ref)),
                               rtol=5e-2, atol=5e-2)
    np.testing.assert_allclose(np.asarray(jnp.imag(out)), np.asarray(jnp.imag(ref)),
                               rtol=5e-2, atol=5e-2)
    print("KERNEL_OK")
</pallas_src>

<mosaic_0001>
module attributes {stable_mosaic.version = 11 : i64} {
  func.func @_complex_down_kernel(%arg0: memref<16x512xf32, #tpu.memory_space<vmem>>, %arg1: memref<16x512xf32, #tpu.memory_space<vmem>>, %arg2: memref<9x128xf32, #tpu.memory_space<vmem>>, %arg3: memref<1x512xf32, #tpu.memory_space<vmem>>, %arg4: memref<32x288xbf16, #tpu.memory_space<vmem>>, %arg5: memref<32x1xf32, #tpu.memory_space<vmem>>, %arg6: memref<16x5xf32, #tpu.memory_space<vmem>>, %arg7: memref<32x288xbf16, #tpu.memory_space<vmem>>, %arg8: memref<32x1xf32, #tpu.memory_space<vmem>>, %arg9: memref<16x5xf32, #tpu.memory_space<vmem>>, %arg10: memref<16x128xf32, #tpu.memory_space<vmem>>, %arg11: memref<16x128xf32, #tpu.memory_space<vmem>>, %arg12: memref<288x512xbf16, #tpu.memory_space<vmem>>) attributes {dimension_semantics = [], scalar_prefetch = 0 : i64, scratch_operands = 1 : i64, tpu.core_type = #tpu.core_type<tc>} {
    %c0 = arith.constant 0 : index
    %c0_0 = arith.constant 0 : index
    %0 = vector.load %arg2[%c0, %c0_0] : memref<9x128xf32, #tpu.memory_space<vmem>>, vector<9x128xf32>
    %1 = vector.extract_strided_slice %0 {offsets = [0, 0], sizes = [1, 128], strides = [1, 1]} : vector<9x128xf32> to vector<1x128xf32>
    %2 = vector.shape_cast %1 : vector<1x128xf32> to vector<1x128xf32>
    %3 = vector.broadcast %2 : vector<1x128xf32> to vector<16x128xf32>
    %4 = vector.extract_strided_slice %0 {offsets = [1, 0], sizes = [1, 128], strides = [1, 1]} : vector<9x128xf32> to vector<1x128xf32>
    %5 = vector.shape_cast %4 : vector<1x128xf32> to vector<1x128xf32>
    %6 = vector.broadcast %5 : vector<1x128xf32> to vector<16x128xf32>
    %7 = vector.extract_strided_slice %0 {offsets = [3, 0], sizes = [1, 128], strides = [1, 1]} : vector<9x128xf32> to vector<1x128xf32>
    %8 = vector.shape_cast %7 : vector<1x128xf32> to vector<1x128xf32>
    %9 = vector.broadcast %8 : vector<1x128xf32> to vector<16x128xf32>
    %10 = vector.extract_strided_slice %0 {offsets = [2, 0], sizes = [1, 128], strides = [1, 1]} : vector<9x128xf32> to vector<1x128xf32>
    %11 = vector.shape_cast %10 : vector<1x128xf32> to vector<1x128xf32>
    %12 = vector.broadcast %11 : vector<1x128xf32> to vector<16x128xf32>
    %13 = vector.extract_strided_slice %0 {offsets = [5, 0], sizes = [1, 128], strides = [1, 1]} : vector<9x128xf32> to vector<1x128xf32>
    %14 = vector.shape_cast %13 : vector<1x128xf32> to vector<1x128xf32>
    %15 = vector.broadcast %14 : vector<1x128xf32> to vector<16x128xf32>
    %16 = vector.extract_strided_slice %0 {offsets = [6, 0], sizes = [1, 128], strides = [1, 1]} : vector<9x128xf32> to vector<1x128xf32>
    %17 = vector.shape_cast %16 : vector<1x128xf32> to vector<1x128xf32>
    %18 = vector.broadcast %17 : vector<1x128xf32> to vector<16x128xf32>
    %19 = vector.extract_strided_slice %0 {offsets = [7, 0], sizes = [1, 128], strides = [1, 1]} : vector<9x128xf32> to vector<1x128xf32>
    %20 = vector.shape_cast %19 : vector<1x128xf32> to vector<1x128xf32>
    %21 = vector.broadcast %20 : vector<1x128xf32> to vector<16x128xf32>
    %22 = vector.extract_strided_slice %0 {offsets = [8, 0], sizes = [1, 128], strides = [1, 1]} : vector<9x128xf32> to vector<1x128xf32>
    %23 = vector.shape_cast %22 : vector<1x128xf32> to vector<1x128xf32>
    %24 = vector.broadcast %23 : vector<1x128xf32> to vector<16x128xf32>
    %c0_1 = arith.constant 0 : index
    %c0_2 = arith.constant 0 : index
    %25 = vector.load %arg0[%c0_1, %c0_2] : memref<16x512xf32, #tpu.memory_space<vmem>>, vector<16x512xf32>
    %c0_3 = arith.constant 0 : index
    %c0_4 = arith.constant 0 : index
    %26 = vector.load %arg1[%c0_3, %c0_4] : memref<16x512xf32, #tpu.memory_space<vmem>>, vector<16x512xf32>
    %27 = vector.extract_strided_slice %25 {offsets = [0, 384], sizes = [16, 128], strides = [1, 1]} : vector<16x512xf32> to vector<16x128xf32>
    %28 = vector.extract_strided_slice %26 {offsets = [0, 384], sizes = [16, 128], strides = [1, 1]} : vector<16x512xf32> to vector<16x128xf32>
    %c9_i32 = arith.constant 9 : i32
    %29 = tpu.dynamic_rotate %27 by %c9_i32 dim 1 : vector<16x128xf32>, i32 -> vector<16x128xf32>
    %c9_i32_5 = arith.constant 9 : i32
    %30 = tpu.dynamic_rotate %28 by %c9_i32_5 dim 1 : vector<16x128xf32>, i32 -> vector<16x128xf32>
    %31 = arith.mulf %29, %3 : vector<16x128xf32>
    %32 = arith.mulf %30, %3 : vector<16x128xf32>
    %33 = arith.truncf %31 : vector<16x128xf32> to vector<16x128xbf16>
    %34 = arith.truncf %32 : vector<16x128xf32> to vector<16x128xbf16>
    %c0_6 = arith.constant 0 : index
    %c0_7 = arith.constant 0 : index
    %35 = vector.load %arg12[%c0_6, %c0_7] : memref<288x512xbf16, #tpu.memory_space<vmem>>, vector<16x128xbf16>
    tpu.vector_store %arg12[%c0_6, %c0_7], %33 {strides = array<i32>} : memref<288x512xbf16, #tpu.memory_space<vmem>>, vector<16x128xbf16>,
    %c144 = arith.constant 144 : index
    %c0_8 = arith.constant 0 : index
    %36 = vector.load %arg12[%c144, %c0_8] : memref<288x512xbf16, #tpu.memory_space<vmem>>, vector<16x128xbf16>
    tpu.vector_store %arg12[%c144, %c0_8], %34 {strides = array<i32>} : memref<288x512xbf16, #tpu.memory_space<vmem>>, vector<16x128xbf16>,
    %37 = vector.extract_strided_slice %25 {offsets = [0, 256], sizes = [16, 128], strides = [1, 1]} : vector<16x512xf32> to vector<16x128xf32>
    %38 = vector.extract_strided_slice %26 {offsets = [0, 256], sizes = [16, 128], strides = [1, 1]} : vector<16x512xf32> to vector<16x128xf32>
    %c8_i32 = arith.constant 8 : i32
    %39 = tpu.dynamic_rotate %37 by %c8_i32 dim 1 : vector<16x128xf32>, i32 -> vector<16x128xf32>
    %c8_i32_9 = arith.constant 8 : i32
    %40 = tpu.dynamic_rotate %38 by %c8_i32_9 dim 1 : vector<16x128xf32>, i32 -> vector<16x128xf32>
    %41 = arith.mulf %39, %6 : vector<16x128xf32>
    %42 = arith.mulf %40, %6 : vector<16x128xf32>
    %43 = arith.truncf %41 : vector<16x128xf32> to vector<16x128xbf16>
    %44 = arith.truncf %42 : vector<16x128xf32> to vector<16x128xbf16>
    %c0_10 = arith.constant 0 : index
    %c128 = arith.constant 128 : index
    %45 = vector.load %arg12[%c0_10, %c128] : memref<288x512xbf16, #tpu.memory_space<vmem>>, vector<16x128xbf16>
    tpu.vector_store %arg12[%c0_10, %c128], %43 {strides = array<i32>} : memref<288x512xbf16, #tpu.memory_space<vmem>>, vector<16x128xbf16>,
    %c144_11 = arith.constant 144 : index
    %c128_12 = arith.constant 128 : index
    %46 = vector.load %arg12[%c144_11, %c128_12] : memref<288x512xbf16, #tpu.memory_space<vmem>>, vector<16x128xbf16>
    tpu.vector_store %arg12[%c144_11, %c128_12], %44 {strides = array<i32>} : memref<288x512xbf16, #tpu.memory_space<vmem>>, vector<16x128xbf16>,
    %c16 = arith.constant 16 : index
    %c0_13 = arith.constant 0 : index
    %47 = vector.load %arg12[%c16, %c0_13] : memref<288x512xbf16, #tpu.memory_space<vmem>>, vector<16x128xbf16>
    tpu.vector_store %arg12[%c16, %c0_13], %43 {strides = array<i32>} : memref<288x512xbf16, #tpu.memory_space<vmem>>, vector<16x128xbf16>,
    %c160 = arith.constant 160 : index
    %c0_14 = arith.constant 0 : index
    %48 = vector.load %arg12[%c160, %c0_14] : memref<288x512xbf16, #tpu.memory_space<vmem>>, vector<16x128xbf16>
    tpu.vector_store %arg12[%c160, %c0_14], %44 {strides = array<i32>} : memref<288x512xbf16, #tpu.memory_space<vmem>>, vector<16x128xbf16>,
    %49 = vector.extract_strided_slice %25 {offsets = [0, 128], sizes = [16, 128], strides = [1, 1]} : vector<16x512xf32> to vector<16x128xf32>
    %50 = vector.extract_strided_slice %26 {offsets = [0, 128], sizes = [16, 128], strides = [1, 1]} : vector<16x512xf32> to vector<16x128xf32>
    %c1_i32 = arith.constant 1 : i32
    %51 = tpu.dynamic_rotate %49 by %c1_i32 dim 1 : vector<16x128xf32>, i32 -> vector<16x128xf32>
    %c1_i32_15 = arith.constant 1 : i32
    %52 = tpu.dynamic_rotate %50 by %c1_i32_15 dim 1 : vector<16x128xf32>, i32 -> vector<16x128xf32>
    %53 = arith.mulf %51, %9 : vector<16x128xf32>
    %54 = arith.mulf %52, %9 : vector<16x128xf32>
    %55 = arith.truncf %53 : vector<16x128xf32> to vector<16x128xbf16>
    %56 = arith.truncf %54 : vector<16x128xf32> to vector<16x128xbf16>
    %c0_16 = arith.constant 0 : index
    %c256 = arith.constant 256 : index
    %57 = vector.load %arg12[%c0_16, %c256] : memref<288x512xbf16, #tpu.memory_space<vmem>>, vector<16x128xbf16>
    tpu.vector_store %arg12[%c0_16, %c256], %55 {strides = array<i32>} : memref<288x512xbf16, #tpu.memory_space<vmem>>, vector<16x128xbf16>,
    %c144_17 = arith.constant 144 : index
    %c256_18 = arith.constant 256 : index
    %58 = vector.load %arg12[%c144_17, %c256_18] : memref<288x512xbf16, #tpu.memory_space<vmem>>, vector<16x128xbf16>
    tpu.vector_store %arg12[%c144_17, %c256_18], %56 {strides = array<i32>} : memref<288x512xbf16, #tpu.memory_space<vmem>>, vector<16x128xbf16>,
    %c48 = arith.constant 48 : index
    %c0_19 = arith.constant 0 : index
    %59 = vector.load %arg12[%c48, %c0_19] : memref<288x512xbf16, #tpu.memory_space<vmem>>, vector<16x128xbf16>
    tpu.vector_store %arg12[%c48, %c0_19], %55 {strides = array<i32>} : memref<288x512xbf16, #tpu.memory_space<vmem>>, vector<16x128xbf16>,
    %c192 = arith.constant 192 : index
    %c0_20 = arith.constant 0 : index
    %60 = vector.load %arg12[%c192, %c0_20] : memref<288x512xbf16, #tpu.memory_space<vmem>>, vector<16x128xbf16>
    tpu.vector_store %arg12[%c192, %c0_20], %56 {strides = array<i32>} : memref<288x512xbf16, #tpu.memory_space<vmem>>, vector<16x128xbf16>,
    %61 = vector.extract_strided_slice %25 {offsets = [0, 0], sizes = [16, 128], strides = [1, 1]} : vector<16x512xf32> to vector<16x128xf32>
    %62 = vector.extract_strided_slice %26 {offsets = [0, 0], sizes = [16, 128], strides = [1, 1]} : vector<16x512xf32> to vector<16x128xf32>
    %63 = arith.truncf %61 : vector<16x128xf32> to vector<16x128xbf16>
    %64 = arith.truncf %62 : vector<16x128xf32> to vector<16x128xbf16>
    %c0_21 = arith.constant 0 : index
    %c384 = arith.constant 384 : index
    %65 = vector.load %arg12[%c0_21, %c384] : memref<288x512xbf16, #tpu.memory_space<vmem>>, vector<16x128xbf16>
    tpu.vector_store %arg12[%c0_21, %c384], %63 {strides = array<i32>} : memref<288x512xbf16, #tpu.memory_space<vmem>>, vector<16x128xbf16>,
    %c144_22 = arith.constant 144 : index
    %c384_23 = arith.constant 384 : index
    %66 = vector.load %arg12[%c144_22, %c384_23] : memref<288x512xbf16, #tpu.memory_space<vmem>>, vector<16x128xbf16>
    tpu.vector_store %arg12[%c144_22, %c384_23], %64 {strides = array<i32>} : memref<288x512xbf16, #tpu.memory_space<vmem>>, vector<16x128xbf16>,
    %c16_24 = arith.constant 16 : index
    %c256_25 = arith.constant 256 : index
    %67 = vector.load %arg12[%c16_24, %c256_25] : memref<288x512xbf16, #tpu.memory_space<vmem>>, vector<16x128xbf16>
    tpu.vector_store %arg12[%c16_24, %c256_25], %63 {strides = array<i32>} : memref<288x512xbf16, #tpu.memory_space<vmem>>, vector<16x128xbf16>,
    %c160_26 = arith.constant 160 : index
    %c256_27 = arith.constant 256 : index
    %68 = vector.load %arg12[%c160_26, %c256_27] : memref<288x512xbf16, #tpu.memory_space<vmem>>, vector<16x128xbf16>
    tpu.vector_store %arg12[%c160_26, %c256_27], %64 {strides = array<i32>} : memref<288x512xbf16, #tpu.memory_space<vmem>>, vector<16x128xbf16>,
    %c48_28 = arith.constant 48 : index
    %c128_29 = arith.constant 128 : index
    %69 = vector.load %arg12[%c48_28, %c128_29] : memref<288x512xbf16, #tpu.memory_space<vmem>>, vector<16x128xbf16>
    tpu.vector_store %arg12[%c48_28, %c128_29], %63 {strides = array<i32>} : memref<288x512xbf16, #tpu.memory_space<vmem>>, vector<16x128xbf16>,
    %c192_30 = arith.constant 192 : index
    %c128_31 = arith.constant 128 : index
    %70 = vector.load %arg12[%c192_30, %c128_31] : memref<288x512xbf16, #tpu.memory_space<vmem>>, vector<16x128xbf16>
    tpu.vector_store %arg12[%c192_30, %c128_31], %64 {strides = array<i32>} : memref<288x512xbf16, #tpu.memory_space<vmem>>, vector<16x128xbf16>,
    %c64 = arith.constant 64 : index
    %c0_32 = arith.constant 0 : index
    %71 = vector.load %arg12[%c64, %c0_32] : memref<288x512xbf16, #tpu.memory_space<vmem>>, vector<16x128xbf16>
    tpu.vector_store %arg12[%c64, %c0_32], %63 {strides = array<i32>} : memref<288x512xbf16, #tpu.memory_space<vmem>>, vector<16x128xbf16>,
    %c208 = arith.constant 208 : index
    %c0_33 = arith.constant 0 : index
    %72 = vector.load %arg12[%c208, %c0_33] : memref<288x512xbf16, #tpu.memory_space<vmem>>, vector<16x128xbf16>
    tpu.vector_store %arg12[%c208, %c0_33], %64 {strides = array<i32>} : memref<288x512xbf16, #tpu.memory_space<vmem>>, vector<16x128xbf16>,
    %73 = vector.extract_strided_slice %25 {offsets = [0, 384], sizes = [16, 128], strides = [1, 1]} : vector<16x512xf32> to vector<16x128xf32>
    %74 = vector.extract_strided_slice %26 {offsets = [0, 384], sizes = [16, 128], strides = [1, 1]} : vector<16x512xf32> to vector<16x128xf32>
    %c8_i32_34 = arith.constant 8 : i32
    %75 = tpu.dynamic_rotate %73 by %c8_i32_34 dim 1 : vector<16x128xf32>, i32 -> vector<16x128xf32>
    %c8_i32_35 = arith.constant 8 : i32
    %76 = tpu.dynamic_rotate %74 by %c8_i32_35 dim 1 : vector<16x128xf32>, i32 -> vector<16x128xf32>
    %77 = arith.mulf %75, %6 : vector<16x128xf32>
    %78 = arith.mulf %76, %6 : vector<16x128xf32>
    %79 = arith.truncf %77 : vector<16x128xf32> to vector<16x128xbf16>
    %80 = arith.truncf %78 : vector<16x128xf32> to vector<16x128xbf16>
    %c16_36 = arith.constant 16 : index
    %c128_37 = arith.constant 128 : index
    %81 = vector.load %arg12[%c16_36, %c128_37] : memref<288x512xbf16, #tpu.memory_space<vmem>>, vector<16x128xbf16>
    tpu.vector_store %arg12[%c16_36, %c128_37], %79 {strides = array<i32>} : memref<288x512xbf16, #tpu.memory_space<vmem>>, vector<16x128xbf16>,
    %c160_38 = arith.constant 160 : index
    %c128_39 = arith.constant 128 : index
    %82 = vector.load %arg12[%c160_38, %c128_39] : memref<288x512xbf16, #tpu.memory_space<vmem>>, vector<16x128xbf16>
    tpu.vector_store %arg12[%c160_38, %c128_39], %80 {strides = array<i32>} : memref<288x512xbf16, #tpu.memory_space<vmem>>, vector<16x128xbf16>,
    %c32 = arith.constant 32 : index
    %c0_40 = arith.constant 0 : index
    %83 = vector.load %arg12[%c32, %c0_40] : memref<288x512xbf16, #tpu.memory_space<vmem>>, vector<16x128xbf16>
    tpu.vector_store %arg12[%c32, %c0_40], %79 {strides = array<i32>} : memref<288x512xbf16, #tpu.memory_space<vmem>>, vector<16x128xbf16>,
    %c176 = arith.constant 176 : index
    %c0_41 = arith.constant 0 : index
    %84 = vector.load %arg12[%c176, %c0_41] : memref<288x512xbf16, #tpu.memory_space<vmem>>, vector<16x128xbf16>
    tpu.vector_store %arg12[%c176, %c0_41], %80 {strides = array<i32>} : memref<288x512xbf16, #tpu.memory_space<vmem>>, vector<16x128xbf16>,
    %85 = vector.extract_strided_slice %25 {offsets = [0, 128], sizes = [16, 128], strides = [1, 1]} : vector<16x512xf32> to vector<16x128xf32>
    %86 = vector.extract_strided_slice %26 {offsets = [0, 128], sizes = [16, 128], strides = [1, 1]} : vector<16x512xf32> to vector<16x128xf32>
    %87 = arith.truncf %85 : vector<16x128xf32> to vector<16x128xbf16>
    %88 = arith.truncf %86 : vector<16x128xf32> to vector<16x128xbf16>
    %c16_42 = arith.constant 16 : index
    %c384_43 = arith.constant 384 : index
    %89 = vector.load %arg12[%c16_42, %c384_43] : memref<288x512xbf16, #tpu.memory_space<vmem>>, vector<16x128xbf16>
    tpu.vector_store %arg12[%c16_42, %c384_43], %87 {strides = array<i32>} : memref<288x512xbf16, #tpu.memory_space<vmem>>, vector<16x128xbf16>,
    %c160_44 = arith.constant 160 : index
    %c384_45 = arith.constant 384 : index
    %90 = vector.load %arg12[%c160_44, %c384_45] : memref<288x512xbf16, #tpu.memory_space<vmem>>, vector<16x128xbf16>
    tpu.vector_store %arg12[%c160_44, %c384_45], %88 {strides = array<i32>} : memref<288x512xbf16, #tpu.memory_space<vmem>>, vector<16x128xbf16>,
    %c32_46 = arith.constant 32 : index
    %c256_47 = arith.constant 256 : index
    %91 = vector.load %arg12[%c32_46, %c256_47] : memref<288x512xbf16, #tpu.memory_space<vmem>>, vector<16x128xbf16>
    tpu.vector_store %arg12[%c32_46, %c256_47], %87 {strides = array<i32>} : memref<288x512xbf16, #tpu.memory_space<vmem>>, vector<16x128xbf16>,
    %c176_48 = arith.constant 176 : index
    %c256_49 = arith.constant 256 : index
    %92 = vector.load %arg12[%c176_48, %c256_49] : memref<288x512xbf16, #tpu.memory_space<vmem>>, vector<16x128xbf16>
    tpu.vector_store %arg12[%c176_48, %c256_49], %88 {strides = array<i32>} : memref<288x512xbf16, #tpu.memory_space<vmem>>, vector<16x128xbf16>,
    %c64_50 = arith.constant 64 : index
    %c128_51 = arith.constant 128 : index
    %93 = vector.load %arg12[%c64_50, %c128_51] : memref<288x512xbf16, #tpu.memory_space<vmem>>, vector<16x128xbf16>
    tpu.vector_store %arg12[%c64_50, %c128_51], %87 {strides = array<i32>} : memref<288x512xbf16, #tpu.memory_space<vmem>>, vector<16x128xbf16>,
    %c208_52 = arith.constant 208 : index
    %c128_53 = arith.constant 128 : index
    %94 = vector.load %arg12[%c208_52, %c128_53] : memref<288x512xbf16, #tpu.memory_space<vmem>>, vector<16x128xbf16>
    tpu.vector_store %arg12[%c208_52, %c128_53], %88 {strides = array<i32>} : memref<288x512xbf16, #tpu.memory_space<vmem>>, vector<16x128xbf16>,
    %c80 = arith.constant 80 : index
    %c0_54 = arith.constant 0 : index
    %95 = vector.load %arg12[%c80, %c0_54] : memref<288x512xbf16, #tpu.memory_space<vmem>>, vector<16x128xbf16>
    tpu.vector_store %arg12[%c80, %c0_54], %87 {strides = array<i32>} : memref<288x512xbf16, #tpu.memory_space<vmem>>, vector<16x128xbf16>,
    %c224 = arith.constant 224 : index
    %c0_55 = arith.constant 0 : index
    %96 = vector.load %arg12[%c224, %c0_55] : memref<288x512xbf16, #tpu.memory_space<vmem>>, vector<16x128xbf16>
    tpu.vector_store %arg12[%c224, %c0_55], %88 {strides = array<i32>} : memref<288x512xbf16, #tpu.memory_space<vmem>>, vector<16x128xbf16>,
    %97 = vector.extract_strided_slice %25 {offsets = [0, 256], sizes = [16, 128], strides = [1, 1]} : vector<16x512xf32> to vector<16x128xf32>
    %98 = vector.extract_strided_slice %26 {offsets = [0, 256], sizes = [16, 128], strides = [1, 1]} : vector<16x512xf32> to vector<16x128xf32>
    %c7_i32 = arith.constant 7 : i32
    %99 = tpu.dynamic_rotate %97 by %c7_i32 dim 1 : vector<16x128xf32>, i32 -> vector<16x128xf32>
    %c7_i32_56 = arith.constant 7 : i32
    %100 = tpu.dynamic_rotate %98 by %c7_i32_56 dim 1 : vector<16x128xf32>, i32 -> vector<16x128xf32>
    %101 = arith.mulf %99, %12 : vector<16x128xf32>
    %102 = arith.mulf %100, %12 : vector<16x128xf32>
    %103 = arith.truncf %101 : vector<16x128xf32> to vector<16x128xbf16>
    %104 = arith.truncf %102 : vector<16x128xf32> to vector<16x128xbf16>
    %c32_57 = arith.constant 32 : index
    %c128_58 = arith.constant 128 : index
    %105 = vector.load %arg12[%c32_57, %c128_58] : memref<288x512xbf16, #tpu.memory_space<vmem>>, vector<16x128xbf16>
    tpu.vector_store %arg12[%c32_57, %c128_58], %103 {strides = array<i32>} : memref<288x512xbf16, #tpu.memory_space<vmem>>, vector<16x128xbf16>,
    %c176_59 = arith.constant 176 : index
    %c128_60 = arith.constant 128 : index
    %106 = vector.load %arg12[%c176_59, %c128_60] : memref<288x512xbf16, #tpu.memory_space<vmem>>, vector<16x128xbf16>
    tpu.vector_store %arg12[%c176_59, %c128_60], %104 {strides = array<i32>} : memref<288x512xbf16, #tpu.memory_space<vmem>>, vector<16x128xbf16>,
    %107 = vector.extract_strided_slice %25 {offsets = [0, 0], sizes = [16, 128], strides = [1, 1]} : vector<16x512xf32> to vector<16x128xf32>
    %108 = vector.extract_strided_slice %26 {offsets = [0, 0], sizes = [16, 128], strides = [1, 1]} : vector<16x512xf32> to vector<16x128xf32>
    %c127_i32 = arith.constant 127 : i32
    %109 = tpu.dynamic_rotate %107 by %c127_i32 dim 1 : vector<16x128xf32>, i32 -> vector<16x128xf32>
    %c127_i32_61 = arith.constant 127 : i32
    %110 = tpu.dynamic_rotate %108 by %c127_i32_61 dim 1 : vector<16x128xf32>, i32 -> vector<16x128xf32>
    %111 = arith.mulf %109, %15 : vector<16x128xf32>
    %112 = arith.mulf %110, %15 : vector<16x128xf32>
    %113 = arith.truncf %111 : vector<16x128xf32> to vector<16x128xbf16>
    %114 = arith.truncf %112 : vector<16x128xf32> to vector<16x128xbf16>
    %c32_62 = arith.constant 32 : index
    %c384_63 = arith.constant 384 : index
    %115 = vector.load %arg12[%c32_62, %c384_63] : memref<288x512xbf16, #tpu.memory_space<vmem>>, vector<16x128xbf16>
    tpu.vector_store %arg12[%c32_62, %c384_63], %113 {strides = array<i32>} : memref<288x512xbf16, #tpu.memory_space<vmem>>, vector<16x128xbf16>,
    %c176_64 = arith.constant 176 : index
    %c384_65 = arith.constant 384 : index
    %116 = vector.load %arg12[%c176_64, %c384_65] : memref<288x512xbf16, #tpu.memory_space<vmem>>, vector<16x128xbf16>
    tpu.vector_store %arg12[%c176_64, %c384_65], %114 {strides = array<i32>} : memref<288x512xbf16, #tpu.memory_space<vmem>>, vector<16x128xbf16>,
    %c80_66 = arith.constant 80 : index
    %c128_67 = arith.constant 128 : index
    %117 = vector.load %arg12[%c80_66, %c128_67] : memref<288x512xbf16, #tpu.memory_space<vmem>>, vector<16x128xbf16>
    tpu.vector_store %arg12[%c80_66, %c128_67], %113 {strides = array<i32>} : memref<288x512xbf16, #tpu.memory_space<vmem>>, vector<16x128xbf16>,
    %c224_68 = arith.constant 224 : index
    %c128_69 = arith.constant 128 : index
    %118 = vector.load %arg12[%c224_68, %c128_69] : memref<288x512xbf16, #tpu.memory_space<vmem>>, vector<16x128xbf16>
    tpu.vector_store %arg12[%c224_68, %c128_69], %114 {strides = array<i32>} : memref<288x512xbf16, #tpu.memory_space<vmem>>, vector<16x128xbf16>,
    %119 = vector.extract_strided_slice %25 {offsets = [0, 384], sizes = [16, 128], strides = [1, 1]} : vector<16x512xf32> to vector<16x128xf32>
    %120 = vector.extract_strided_slice %26 {offsets = [0, 384], sizes = [16, 128], strides = [1, 1]} : vector<16x512xf32> to vector<16x128xf32>
    %c1_i32_70 = arith.constant 1 : i32
    %121 = tpu.dynamic_rotate %119 by %c1_i32_70 dim 1 : vector<16x128xf32>, i32 -> vector<16x128xf32>
    %c1_i32_71 = arith.constant 1 : i32
    %122 = tpu.dynamic_rotate %120 by %c1_i32_71 dim 1 : vector<16x128xf32>, i32 -> vector<16x128xf32>
    %123 = arith.mulf %121, %9 : vector<16x128xf32>
    %124 = arith.mulf %122, %9 : vector<16x128xf32>
    %125 = arith.truncf %123 : vector<16x128xf32> to vector<16x128xbf16>
    %126 = arith.truncf %124 : vector<16x128xf32> to vector<16x128xbf16>
    %c48_72 = arith.constant 48 : index
    %c256_73 = arith.constant 256 : index
    %127 = vector.load %arg12[%c48_72, %c256_73] : memref<288x512xbf16, #tpu.memory_space<vmem>>, vector<16x128xbf16>
    tpu.vector_store %arg12[%c48_72, %c256_73], %125 {strides = array<i32>} : memref<288x512xbf16, #tpu.memory_space<vmem>>, vector<16x128xbf16>,
    %c192_74 = arith.constant 192 : index
    %c256_75 = arith.constant 256 : index
    %128 = vector.load %arg12[%c192_74, %c256_75] : memref<288x512xbf16, #tpu.memory_space<vmem>>, vector<16x128xbf16>
    tpu.vector_store %arg12[%c192_74, %c256_75], %126 {strides = array<i32>} : memref<288x512xbf16, #tpu.memory_space<vmem>>, vector<16x128xbf16>,
    %c96 = arith.constant 96 : index
    %c0_76 = arith.constant 0 : index
    %129 = vector.load %arg12[%c96, %c0_76] : memref<288x512xbf16, #tpu.memory_space<vmem>>, vector<16x128xbf16>
    tpu.vector_store %arg12[%c96, %c0_76], %125 {strides = array<i32>} : memref<288x512xbf16, #tpu.memory_space<vmem>>, vector<16x128xbf16>,
    %c240 = arith.constant 240 : index
    %c0_77 = arith.constant 0 : index
    %130 = vector.load %arg12[%c240, %c0_77] : memref<288x512xbf16, #tpu.memory_space<vmem>>, vector<16x128xbf16>
    tpu.vector_store %arg12[%c240, %c0_77], %126 {strides = array<i32>} : memref<288x512xbf16, #tpu.memory_space<vmem>>, vector<16x128xbf16>,
    %131 = vector.extract_strided_slice %25 {offsets = [0, 256], sizes = [16, 128], strides = [1, 1]} : vector<16x512xf32> to vector<16x128xf32>
    %132 = vector.extract_strided_slice %26 {offsets = [0, 256], sizes = [16, 128], strides = [1, 1]} : vector<16x512xf32> to vector<16x128xf32>
    %133 = arith.truncf %131 : vector<16x128xf32> to vector<16x128xbf16>
    %134 = arith.truncf %132 : vector<16x128xf32> to vector<16x128xbf16>
    %c48_78 = arith.constant 48 : index
    %c384_79 = arith.constant 384 : index
    %135 = vector.load %arg12[%c48_78, %c384_79] : memref<288x512xbf16, #tpu.memory_space<vmem>>, vector<16x128xbf16>
    tpu.vector_store %arg12[%c48_78, %c384_79], %133 {strides = array<i32>} : memref<288x512xbf16, #tpu.memory_space<vmem>>, vector<16x128xbf16>,
    %c192_80 = arith.constant 192 : index
    %c384_81 = arith.constant 384 : index
    %136 = vector.load %arg12[%c192_80, %c384_81] : memref<288x512xbf16, #tpu.memory_space<vmem>>, vector<16x128xbf16>
    tpu.vector_store %arg12[%c192_80, %c384_81], %134 {strides = array<i32>} : memref<288x512xbf16, #tpu.memory_space<vmem>>, vector<16x128xbf16>,
    %c64_82 = arith.constant 64 : index
    %c256_83 = arith.constant 256 : index
    %137 = vector.load %arg12[%c64_82, %c256_83] : memref<288x512xbf16, #tpu.memory_space<vmem>>, vector<16x128xbf16>
    tpu.vector_store %arg12[%c64_82, %c256_83], %133 {strides = array<i32>} : memref<288x512xbf16, #tpu.memory_space<vmem>>, vector<16x128xbf16>,
    %c208_84 = arith.constant 208 : index
    %c256_85 = arith.constant 256 : index
    %138 = vector.load %arg12[%c208_84, %c256_85] : memref<288x512xbf16, #tpu.memory_space<vmem>>, vector<16x128xbf16>
    tpu.vector_store %arg12[%c208_84, %c256_85], %134 {strides = array<i32>} : memref<288x512xbf16, #tpu.memory_space<vmem>>, vector<16x128xbf16>,
    %c96_86 = arith.constant 96 : index
    %c128_87 = arith.constant 128 : index
    %139 = vector.load %arg12[%c96_86, %c128_87] : memref<288x512xbf16, #tpu.memory_space<vmem>>, vector<16x128xbf16>
    tpu.vector_store %arg12[%c96_86, %c128_87], %133 {strides = array<i32>} : memref<288x512xbf16, #tpu.memory_space<vmem>>, vector<16x128xbf16>,
    %c240_88 = arith.constant 240 : index
    %c128_89 = arith.constant 128 : index
    %140 = vector.load %arg12[%c240_88, %c128_89] : memref<288x512xbf16, #tpu.memory_space<vmem>>, vector<16x128xbf16>
    tpu.vector_store %arg12[%c240_88, %c128_89], %134 {strides = array<i32>} : memref<288x512xbf16, #tpu.memory_space<vmem>>, vector<16x128xbf16>,
    %c112 = arith.constant 112 : index
    %c0_90 = arith.constant 0 : index
    %141 = vector.load %arg12[%c112, %c0_90] : memref<288x512xbf16, #tpu.memory_space<vmem>>, vector<16x128xbf16>
    tpu.vector_store %arg12[%c112, %c0_90], %133 {strides = array<i32>} : memref<288x512xbf16, #tpu.memory_space<vmem>>, vector<16x128xbf16>,
    %c256_91 = arith.constant 256 : index
    %c0_92 = arith.constant 0 : index
    %142 = vector.load %arg12[%c256_91, %c0_92] : memref<288x512xbf16, #tpu.memory_space<vmem>>, vector<16x128xbf16>
    tpu.vector_store %arg12[%c256_91, %c0_92], %134 {strides = array<i32>} : memref<288x512xbf16, #tpu.memory_space<vmem>>, vector<16x128xbf16>,
    %143 = vector.extract_strided_slice %25 {offsets = [0, 384], sizes = [16, 128], strides = [1, 1]} : vector<16x512xf32> to vector<16x128xf32>
    %144 = vector.extract_strided_slice %26 {offsets = [0, 384], sizes = [16, 128], strides = [1, 1]} : vector<16x512xf32> to vector<16x128xf32>
    %145 = arith.truncf %143 : vector<16x128xf32> to vector<16x128xbf16>
    %146 = arith.truncf %144 : vector<16x128xf32> to vector<16x128xbf16>
    %c64_93 = arith.constant 64 : index
    %c384_94 = arith.constant 384 : index
    %147 = vector.load %arg12[%c64_93, %c384_94] : memref<288x512xbf16, #tpu.memory_space<vmem>>, vector<16x128xbf16>
    tpu.vector_store %arg12[%c64_93, %c384_94], %145 {strides = array<i32>} : memref<288x512xbf16, #tpu.memory_space<vmem>>, vector<16x128xbf16>,
    %c208_95 = arith.constant 208 : index
    %c384_96 = arith.constant 384 : index
    %148 = vector.load %arg12[%c208_95, %c384_96] : memref<288x512xbf16, #tpu.memory_space<vmem>>, vector<16x128xbf16>
    tpu.vector_store %arg12[%c208_95, %c384_96], %146 {strides = array<i32>} : memref<288x512xbf16, #tpu.memory_space<vmem>>, vector<16x128xbf16>,
    %c80_97 = arith.constant 80 : index
    %c256_98 = arith.constant 256 : index
    %149 = vector.load %arg12[%c80_97, %c256_98] : memref<288x512xbf16, #tpu.memory_space<vmem>>, vector<16x128xbf16>
    tpu.vector_store %arg12[%c80_97, %c256_98], %145 {strides = array<i32>} : memref<288x512xbf16, #tpu.memory_space<vmem>>, vector<16x128xbf16>,
    %c224_99 = arith.constant 224 : index
    %c256_100 = arith.constant 256 : index
    %150 = vector.load %arg12[%c224_99, %c256_100] : memref<288x512xbf16, #tpu.memory_space<vmem>>, vector<16x128xbf16>
    tpu.vector_store %arg12[%c224_99, %c256_100], %146 {strides = array<i32>} : memref<288x512xbf16, #tpu.memory_space<vmem>>, vector<16x128xbf16>,
    %c112_101 = arith.constant 112 : index
    %c128_102 = arith.constant 128 : index
    %151 = vector.load %arg12[%c112_101, %c128_102] : memref<288x512xbf16, #tpu.memory_space<vmem>>, vector<16x128xbf16>
    tpu.vector_store %arg12[%c112_101, %c128_102], %145 {strides = array<i32>} : memref<288x512xbf16, #tpu.memory_space<vmem>>, vector<16x128xbf16>,
    %c256_103 = arith.constant 256 : index
    %c128_104 = arith.constant 128 : index
    %152 = vector.load %arg12[%c256_103, %c128_104] : memref<288x512xbf16, #tpu.memory_space<vmem>>, vector<16x128xbf16>
    tpu.vector_store %arg12[%c256_103, %c128_104], %146 {strides = array<i32>} : memref<288x512xbf16, #tpu.memory_space<vmem>>, vector<16x128xbf16>,
    %c128_105 = arith.constant 128 : index
    %c0_106 = arith.constant 0 : index
    %153 = vector.load %arg12[%c128_105, %c0_106] : memref<288x512xbf16, #tpu.memory_space<vmem>>, vector<16x128xbf16>
    tpu.vector_store %arg12[%c128_105, %c0_106], %145 {strides = array<i32>} : memref<288x512xbf16, #tpu.memory_space<vmem>>, vector<16x128xbf16>,
    %c272 = arith.constant 272 : index
    %c0_107 = arith.constant 0 : index
    %154 = vector.load %arg12[%c272, %c0_107] : memref<288x512xbf16, #tpu.memory_space<vmem>>, vector<16x128xbf16>
    tpu.vector_store %arg12[%c272, %c0_107], %146 {strides = array<i32>} : memref<288x512xbf16, #tpu.memory_space<vmem>>, vector<16x128xbf16>,
    %155 = vector.extract_strided_slice %25 {offsets = [0, 256], sizes = [16, 128], strides = [1, 1]} : vector<16x512xf32> to vector<16x128xf32>
    %156 = vector.extract_strided_slice %26 {offsets = [0, 256], sizes = [16, 128], strides = [1, 1]} : vector<16x512xf32> to vector<16x128xf32>
    %c127_i32_108 = arith.constant 127 : i32
    %157 = tpu.dynamic_rotate %155 by %c127_i32_108 dim 1 : vector<16x128xf32>, i32 -> vector<16x128xf32>
    %c127_i32_109 = arith.constant 127 : i32
    %158 = tpu.dynamic_rotate %156 by %c127_i32_109 dim 1 : vector<16x128xf32>, i32 -> vector<16x128xf32>
    %159 = arith.mulf %157, %15 : vector<16x128xf32>
    %160 = arith.mulf %158, %15 : vector<16x128xf32>
    %161 = arith.truncf %159 : vector<16x128xf32> to vector<16x128xbf16>
    %162 = arith.truncf %160 : vector<16x128xf32> to vector<16x128xbf16>
    %c80_110 = arith.constant 80 : index
    %c384_111 = arith.constant 384 : index
    %163 = vector.load %arg12[%c80_110, %c384_111] : memref<288x512xbf16, #tpu.memory_space<vmem>>, vector<16x128xbf16>
    tpu.vector_store %arg12[%c80_110, %c384_111], %161 {strides = array<i32>} : memref<288x512xbf16, #tpu.memory_space<vmem>>, vector<16x128xbf16>,
    %c224_112 = arith.constant 224 : index
    %c384_113 = arith.constant 384 : index
    %164 = vector.load %arg12[%c224_112, %c384_113] : memref<288x512xbf16, #tpu.memory_space<vmem>>, vector<16x128xbf16>
    tpu.vector_store %arg12[%c224_112, %c384_113], %162 {strides = array<i32>} : memref<288x512xbf16, #tpu.memory_space<vmem>>, vector<16x128xbf16>,
    %c128_114 = arith.constant 128 : index
    %c128_115 = arith.constant 128 : index
    %165 = vector.load %arg12[%c128_114, %c128_115] : memref<288x512xbf16, #tpu.memory_space<vmem>>, vector<16x128xbf16>
    tpu.vector_store %arg12[%c128_114, %c128_115], %161 {strides = array<i32>} : memref<288x512xbf16, #tpu.memory_space<vmem>>, vector<16x128xbf16>,
    %c272_116 = arith.constant 272 : index
    %c128_117 = arith.constant 128 : index
    %166 = vector.load %arg12[%c272_116, %c128_117] : memref<288x512xbf16, #tpu.memory_space<vmem>>, vector<16x128xbf16>
    tpu.vector_store %arg12[%c272_116, %c128_117], %162 {strides = array<i32>} : memref<288x512xbf16, #tpu.memory_space<vmem>>, vector<16x128xbf16>,
    %167 = vector.extract_strided_slice %25 {offsets = [0, 128], sizes = [16, 128], strides = [1, 1]} : vector<16x512xf32> to vector<16x128xf32>
    %168 = vector.extract_strided_slice %26 {offsets = [0, 128], sizes = [16, 128], strides = [1, 1]} : vector<16x512xf32> to vector<16x128xf32>
    %c121_i32 = arith.constant 121 : i32
    %169 = tpu.dynamic_rotate %167 by %c121_i32 dim 1 : vector<16x128xf32>, i32 -> vector<16x128xf32>
    %c121_i32_118 = arith.constant 121 : i32
    %170 = tpu.dynamic_rotate %168 by %c121_i32_118 dim 1 : vector<16x128xf32>, i32 -> vector<16x128xf32>
    %171 = arith.mulf %169, %18 : vector<16x128xf32>
    %172 = arith.mulf %170, %18 : vector<16x128xf32>
    %173 = arith.truncf %171 : vector<16x128xf32> to vector<16x128xbf16>
    %174 = arith.truncf %172 : vector<16x128xf32> to vector<16x128xbf16>
    %c96_119 = arith.constant 96 : index
    %c256_120 = arith.constant 256 : index
    %175 = vector.load %arg12[%c96_119, %c256_120] : memref<288x512xbf16, #tpu.memory_space<vmem>>, vector<16x128xbf16>
    tpu.vector_store %arg12[%c96_119, %c256_120], %173 {strides = array<i32>} : memref<288x512xbf16, #tpu.memory_space<vmem>>, vector<16x128xbf16>,
    %c240_121 = arith.constant 240 : index
    %c256_122 = arith.constant 256 : index
    %176 = vector.load %arg12[%c240_121, %c256_122] : memref<288x512xbf16, #tpu.memory_space<vmem>>, vector<16x128xbf16>
    tpu.vector_store %arg12[%c240_121, %c256_122], %174 {strides = array<i32>} : memref<288x512xbf16, #tpu.memory_space<vmem>>, vector<16x128xbf16>,
    %177 = vector.extract_strided_slice %25 {offsets = [0, 0], sizes = [16, 128], strides = [1, 1]} : vector<16x512xf32> to vector<16x128xf32>
    %178 = vector.extract_strided_slice %26 {offsets = [0, 0], sizes = [16, 128], strides = [1, 1]} : vector<16x512xf32> to vector<16x128xf32>
    %c120_i32 = arith.constant 120 : i32
    %179 = tpu.dynamic_rotate %177 by %c120_i32 dim 1 : vector<16x128xf32>, i32 -> vector<16x128xf32>
    %c120_i32_123 = arith.constant 120 : i32
    %180 = tpu.dynamic_rotate %178 by %c120_i32_123 dim 1 : vector<16x128xf32>, i32 -> vector<16x128xf32>
    %181 = arith.mulf %179, %21 : vector<16x128xf32>
    %182 = arith.mulf %180, %21 : vector<16x128xf32>
    %183 = arith.truncf %181 : vector<16x128xf32> to vector<16x128xbf16>
    %184 = arith.truncf %182 : vector<16x128xf32> to vector<16x128xbf16>
    %c96_124 = arith.constant 96 : index
    %c384_125 = arith.constant 384 : index
    %185 = vector.load %arg12[%c96_124, %c384_125] : memref<288x512xbf16, #tpu.memory_space<vmem>>, vector<16x128xbf16>
    tpu.vector_store %arg12[%c96_124, %c384_125], %183 {strides = array<i32>} : memref<288x512xbf16, #tpu.memory_space<vmem>>, vector<16x128xbf16>,
    %c240_126 = arith.constant 240 : index
    %c384_127 = arith.constant 384 : index
    %186 = vector.load %arg12[%c240_126, %c384_127] : memref<288x512xbf16, #tpu.memory_space<vmem>>, vector<16x128xbf16>
    tpu.vector_store %arg12[%c240_126, %c384_127], %184 {strides = array<i32>} : memref<288x512xbf16, #tpu.memory_space<vmem>>, vector<16x128xbf16>,
    %c112_128 = arith.constant 112 : index
    %c256_129 = arith.constant 256 : index
    %187 = vector.load %arg12[%c112_128, %c256_129] : memref<288x512xbf16, #tpu.memory_space<vmem>>, vector<16x128xbf16>
    tpu.vector_store %arg12[%c112_128, %c256_129], %183 {strides = array<i32>} : memref<288x512xbf16, #tpu.memory_space<vmem>>, vector<16x128xbf16>,
    %c256_130 = arith.constant 256 : index
    %c256_131 = arith.constant 256 : index
    %188 = vector.load %arg12[%c256_130, %c256_131] : memref<288x512xbf16, #tpu.memory_space<vmem>>, vector<16x128xbf16>
    tpu.vector_store %arg12[%c256_130, %c256_131], %184 {strides = array<i32>} : memref<288x512xbf16, #tpu.memory_space<vmem>>, vector<16x128xbf16>,
    %189 = vector.extract_strided_slice %25 {offsets = [0, 128], sizes = [16, 128], strides = [1, 1]} : vector<16x512xf32> to vector<16x128xf32>
    %190 = vector.extract_strided_slice %26 {offsets = [0, 128], sizes = [16, 128], strides = [1, 1]} : vector<16x512xf32> to vector<16x128xf32>
    %c120_i32_132 = arith.constant 120 : i32
    %191 = tpu.dynamic_rotate %189 by %c120_i32_132 dim 1 : vector<16x128xf32>, i32 -> vector<16x128xf32>
    %c120_i32_133 = arith.constant 120 : i32
    %192 = tpu.dynamic_rotate %190 by %c120_i32_133 dim 1 : vector<16x128xf32>, i32 -> vector<16x128xf32>
    %193 = arith.mulf %191, %21 : vector<16x128xf32>
    %194 = arith.mulf %192, %21 : vector<16x128xf32>
    %195 = arith.truncf %193 : vector<16x128xf32> to vector<16x128xbf16>
    %196 = arith.truncf %194 : vector<16x128xf32> to vector<16x128xbf16>
    %c112_134 = arith.constant 112 : index
    %c384_135 = arith.constant 384 : index
    %197 = vector.load %arg12[%c112_134, %c384_135] : memref<288x512xbf16, #tpu.memory_space<vmem>>, vector<16x128xbf16>
    tpu.vector_store %arg12[%c112_134, %c384_135], %195 {strides = array<i32>} : memref<288x512xbf16, #tpu.memory_space<vmem>>, vector<16x128xbf16>,
    %c256_136 = arith.constant 256 : index
    %c384_137 = arith.constant 384 : index
    %198 = vector.load %arg12[%c256_136, %c384_137] : memref<288x512xbf16, #tpu.memory_space<vmem>>, vector<16x128xbf16>
    tpu.vector_store %arg12[%c256_136, %c384_137], %196 {strides = array<i32>} : memref<288x512xbf16, #tpu.memory_space<vmem>>, vector<16x128xbf16>,
    %c128_138 = arith.constant 128 : index
    %c256_139 = arith.constant 256 : index
    %199 = vector.load %arg12[%c128_138, %c256_139] : memref<288x512xbf16, #tpu.memory_space<vmem>>, vector<16x128xbf16>
    tpu.vector_store %arg12[%c128_138, %c256_139], %195 {strides = array<i32>} : memref<288x512xbf16, #tpu.memory_space<vmem>>, vector<16x128xbf16>,
    %c272_140 = arith.constant 272 : index
    %c256_141 = arith.constant 256 : index
    %200 = vector.load %arg12[%c272_140, %c256_141] : memref<288x512xbf16, #tpu.memory_space<vmem>>, vector<16x128xbf16>
    tpu.vector_store %arg12[%c272_140, %c256_141], %196 {strides = array<i32>} : memref<288x512xbf16, #tpu.memory_space<vmem>>, vector<16x128xbf16>,
    %201 = vector.extract_strided_slice %25 {offsets = [0, 0], sizes = [16, 128], strides = [1, 1]} : vector<16x512xf32> to vector<16x128xf32>
    %202 = vector.extract_strided_slice %26 {offsets = [0, 0], sizes = [16, 128], strides = [1, 1]} : vector<16x512xf32> to vector<16x128xf32>
    %c119_i32 = arith.constant 119 : i32
    %203 = tpu.dynamic_rotate %201 by %c119_i32 dim 1 : vector<16x128xf32>, i32 -> vector<16x128xf32>
    %c119_i32_142 = arith.constant 119 : i32
    %204 = tpu.dynamic_rotate %202 by %c119_i32_142 dim 1 : vector<16x128xf32>, i32 -> vector<16x128xf32>
    %205 = arith.mulf %203, %24 : vector<16x128xf32>
    %206 = arith.mulf %204, %24 : vector<16x128xf32>
    %207 = arith.truncf %205 : vector<16x128xf32> to vector<16x128xbf16>
    %208 = arith.truncf %206 : vector<16x128xf32> to vector<16x128xbf16>
    %c128_143 = arith.constant 128 : index
    %c384_144 = arith.constant 384 : index
    %209 = vector.load %arg12[%c128_143, %c384_144] : memref<288x512xbf16, #tpu.memory_space<vmem>>, vector<16x128xbf16>
    tpu.vector_store %arg12[%c128_143, %c384_144], %207 {strides = array<i32>} : memref<288x512xbf16, #tpu.memory_space<vmem>>, vector<16x128xbf16>,
    %c272_145 = arith.constant 272 : index
    %c384_146 = arith.constant 384 : index
    %210 = vector.load %arg12[%c272_145, %c384_146] : memref<288x512xbf16, #tpu.memory_space<vmem>>, vector<16x128xbf16>
    tpu.vector_store %arg12[%c272_145, %c384_146], %208 {strides = array<i32>} : memref<288x512xbf16, #tpu.memory_space<vmem>>, vector<16x128xbf16>,
    %c0_147 = arith.constant 0 : index
    %c0_148 = arith.constant 0 : index
    %211 = vector.load %arg4[%c0_147, %c0_148] : memref<32x288xbf16, #tpu.memory_space<vmem>>, vector<32x288xbf16>
    %c0_149 = arith.constant 0 : index
    %c0_150 = arith.constant 0 : index
    %212 = vector.load %arg12[%c0_149, %c0_150] : memref<288x512xbf16, #tpu.memory_space<vmem>>, vector<288x512xbf16>
    %cst = arith.constant dense<0.000000e+00> : vector<32x512xf32>
    %213 = tpu.matmul %211, %212, %cst {dimension_numbers = #tpu.dot_dimension_numbers<[1], [0], [0], [1], [0, 0, 1, 1], [], []>} : vector<32x288xbf16>, vector<288x512xbf16>, vector<32x512xf32> -> vector<32x512xf32>
    %c0_151 = arith.constant 0 : index
    %c0_152 = arith.constant 0 : index
    %214 = vector.load %arg5[%c0_151, %c0_152] : memref<32x1xf32, #tpu.memory_space<vmem>>, vector<32x1xf32>
    %215 = vector.broadcast %214 : vector<32x1xf32> to vector<32x512xf32>
    %216 = arith.addf %213, %215 : vector<32x512xf32>
    %217 = vector.extract_strided_slice %216 {offsets = [0, 0], sizes = [16, 512], strides = [1, 1]} : vector<32x512xf32> to vector<16x512xf32>
    %218 = vector.extract_strided_slice %216 {offsets = [16, 0], sizes = [16, 512], strides = [1, 1]} : vector<32x512xf32> to vector<16x512xf32>
    %cst_153 = arith.constant dense<0.000000e+00> : vector<16xf32>
    %219 = vector.multi_reduction <add>, %217, %cst_153 [1] : vector<16x512xf32> to vector<16xf32>
    %220 = vector.shape_cast %219 : vector<16xf32> to vector<16x1xf32>
    %cst_154 = arith.constant 0.001953125 : f32
    %221 = vector.broadcast %cst_154 : f32 to vector<16x1xf32>
    %222 = arith.mulf %220, %221 : vector<16x1xf32>
    %cst_155 = arith.constant dense<0.000000e+00> : vector<16xf32>
    %223 = vector.multi_reduction <add>, %218, %cst_155 [1] : vector<16x512xf32> to vector<16xf32>
    %224 = vector.shape_cast %223 : vector<16xf32> to vector<16x1xf32>
    %cst_156 = arith.constant 0.001953125 : f32
    %225 = vector.broadcast %cst_156 : f32 to vector<16x1xf32>
    %226 = arith.mulf %224, %225 : vector<16x1xf32>
    %227 = arith.mulf %217, %217 : vector<16x512xf32>
    %cst_157 = arith.constant dense<0.000000e+00> : vector<16xf32>
    %228 = vector.multi_reduction <add>, %227, %cst_157 [1] : vector<16x512xf32> to vector<16xf32>
    %229 = vector.shape_cast %228 : vector<16xf32> to vector<16x1xf32>
    %cst_158 = arith.constant 0.001953125 : f32
    %230 = vector.broadcast %cst_158 : f32 to vector<16x1xf32>
    %231 = arith.mulf %229, %230 : vector<16x1xf32>
    %232 = arith.mulf %222, %222 : vector<16x1xf32>
    %233 = arith.subf %231, %232 : vector<16x1xf32>
    %cst_159 = arith.constant 9.99999974E-6 : f32
    %234 = vector.broadcast %cst_159 : f32 to vector<16x1xf32>
    %235 = arith.addf %233, %234 : vector<16x1xf32>
    %236 = arith.mulf %218, %218 : vector<16x512xf32>
    %cst_160 = arith.constant dense<0.000000e+00> : vector<16xf32>
    %237 = vector.multi_reduction <add>, %236, %cst_160 [1] : vector<16x512xf32> to vector<16xf32>
    %238 = vector.shape_cast %237 : vector<16xf32> to vector<16x1xf32>
    %cst_161 = arith.constant 0.001953125 : f32
    %239 = vector.broadcast %cst_161 : f32 to vector<16x1xf32>
    %240 = arith.mulf %238, %239 : vector<16x1xf32>
    %241 = arith.mulf %226, %226 : vector<16x1xf32>
    %242 = arith.subf %240, %241 : vector<16x1xf32>
    %cst_162 = arith.constant 9.99999974E-6 : f32
    %243 = vector.broadcast %cst_162 : f32 to vector<16x1xf32>
    %244 = arith.addf %242, %243 : vector<16x1xf32>
    %245 = arith.mulf %217, %218 : vector<16x512xf32>
    %cst_163 = arith.constant dense<0.000000e+00> : vector<16xf32>
    %246 = vector.multi_reduction <add>, %245, %cst_163 [1] : vector<16x512xf32> to vector<16xf32>
    %247 = vector.shape_cast %246 : vector<16xf32> to vector<16x1xf32>
    %cst_164 = arith.constant 0.001953125 : f32
    %248 = vector.broadcast %cst_164 : f32 to vector<16x1xf32>
    %249 = arith.mulf %247, %248 : vector<16x1xf32>
    %250 = arith.mulf %222, %226 : vector<16x1xf32>
    %251 = arith.subf %249, %250 : vector<16x1xf32>
    %252 = arith.mulf %235, %244 : vector<16x1xf32>
    %253 = arith.mulf %251, %251 : vector<16x1xf32>
    %254 = arith.subf %252, %253 : vector<16x1xf32>
    %255 = math.sqrt %254 : vector<16x1xf32>
    %256 = arith.addf %235, %244 : vector<16x1xf32>
    %cst_165 = arith.constant 2.000000e+00 : f32
    %257 = vector.broadcast %cst_165 : f32 to vector<16x1xf32>
    %258 = arith.mulf %257, %255 : vector<16x1xf32>
    %259 = arith.addf %256, %258 : vector<16x1xf32>
    %260 = math.sqrt %259 : vector<16x1xf32>
    %261 = arith.mulf %255, %260 : vector<16x1xf32>
    %cst_166 = arith.constant 1.000000e+00 : f32
    %262 = vector.broadcast %cst_166 : f32 to vector<16x1xf32>
    %263 = arith.divf %262, %261 : vector<16x1xf32>
    %264 = arith.addf %244, %255 : vector<16x1xf32>
    %265 = arith.mulf %264, %263 : vector<16x1xf32>
    %266 = arith.addf %235, %255 : vector<16x1xf32>
    %267 = arith.mulf %266, %263 : vector<16x1xf32>
    %cst_167 = arith.constant 0.000000e+00 : f32
    %268 = vector.broadcast %cst_167 : f32 to vector<16x1xf32>
    %269 = arith.subf %268, %251 : vector<16x1xf32>
    %270 = arith.mulf %269, %263 : vector<16x1xf32>
    %c0_168 = arith.constant 0 : index
    %c0_169 = arith.constant 0 : index
    %271 = vector.load %arg6[%c0_168, %c0_169] : memref<16x5xf32, #tpu.memory_space<vmem>>, vector<16x5xf32>
    %272 = vector.extract_strided_slice %271 {offsets = [0, 0], sizes = [16, 1], strides = [1, 1]} : vector<16x5xf32> to vector<16x1xf32>
    %273 = vector.extract_strided_slice %271 {offsets = [0, 1], sizes = [16, 1], strides = [1, 1]} : vector<16x5xf32> to vector<16x1xf32>
    %274 = vector.extract_strided_slice %271 {offsets = [0, 2], sizes = [16, 1], strides = [1, 1]} : vector<16x5xf32> to vector<16x1xf32>
    %275 = vector.extract_strided_slice %271 {offsets = [0, 3], sizes = [16, 1], strides = [1, 1]} : vector<16x5xf32> to vector<16x1xf32>
    %276 = vector.extract_strided_slice %271 {offsets = [0, 4], sizes = [16, 1], strides = [1, 1]} : vector<16x5xf32> to vector<16x1xf32>
    %277 = arith.mulf %272, %265 : vector<16x1xf32>
    %278 = arith.mulf %274, %270 : vector<16x1xf32>
    %279 = arith.addf %277, %278 : vector<16x1xf32>
    %280 = arith.mulf %272, %270 : vector<16x1xf32>
    %281 = arith.mulf %274, %267 : vector<16x1xf32>
    %282 = arith.addf %280, %281 : vector<16x1xf32>
    %283 = arith.mulf %274, %265 : vector<16x1xf32>
    %284 = arith.mulf %273, %270 : vector<16x1xf32>
    %285 = arith.addf %283, %284 : vector<16x1xf32>
    %286 = arith.mulf %274, %270 : vector<16x1xf32>
    %287 = arith.mulf %273, %267 : vector<16x1xf32>
    %288 = arith.addf %286, %287 : vector<16x1xf32>
    %289 = arith.mulf %279, %222 : vector<16x1xf32>
    %290 = arith.subf %275, %289 : vector<16x1xf32>
    %291 = arith.mulf %282, %226 : vector<16x1xf32>
    %292 = arith.subf %290, %291 : vector<16x1xf32>
    %293 = arith.mulf %285, %222 : vector<16x1xf32>
    %294 = arith.subf %276, %293 : vector<16x1xf32>
    %295 = arith.mulf %288, %226 : vector<16x1xf32>
    %296 = arith.subf %294, %295 : vector<16x1xf32>
    %297 = vector.broadcast %279 : vector<16x1xf32> to vector<16x512xf32>
    %298 = arith.mulf %297, %217 : vector<16x512xf32>
    %299 = vector.broadcast %282 : vector<16x1xf32> to vector<16x512xf32>
    %300 = arith.mulf %299, %218 : vector<16x512xf32>
    %301 = arith.addf %298, %300 : vector<16x512xf32>
    %302 = vector.broadcast %292 : vector<16x1xf32> to vector<16x512xf32>
    %303 = arith.addf %301, %302 : vector<16x512xf32>
    %cst_170 = arith.constant 0.000000e+00 : f32
    %304 = vector.broadcast %cst_170 : f32 to vector<16x512xf32>
    %305 = arith.maximumf %303, %304 : vector<16x512xf32>
    %306 = vector.broadcast %285 : vector<16x1xf32> to vector<16x512xf32>
    %307 = arith.mulf %306, %217 : vector<16x512xf32>
    %308 = vector.broadcast %288 : vector<16x1xf32> to vector<16x512xf32>
    %309 = arith.mulf %308, %218 : vector<16x512xf32>
    %310 = arith.addf %307, %309 : vector<16x512xf32>
    %311 = vector.broadcast %296 : vector<16x1xf32> to vector<16x512xf32>
    %312 = arith.addf %310, %311 : vector<16x512xf32>
    %cst_171 = arith.constant 0.000000e+00 : f32
    %313 = vector.broadcast %cst_171 : f32 to vector<16x512xf32>
    %314 = arith.maximumf %312, %313 : vector<16x512xf32>
    %315 = vector.extract_strided_slice %305 {offsets = [0, 384], sizes = [16, 128], strides = [1, 1]} : vector<16x512xf32> to vector<16x128xf32>
    %316 = vector.extract_strided_slice %314 {offsets = [0, 384], sizes = [16, 128], strides = [1, 1]} : vector<16x512xf32> to vector<16x128xf32>
    %c9_i32_172 = arith.constant 9 : i32
    %317 = tpu.dynamic_rotate %315 by %c9_i32_172 dim 1 : vector<16x128xf32>, i32 -> vector<16x128xf32>
    %c9_i32_173 = arith.constant 9 : i32
    %318 = tpu.dynamic_rotate %316 by %c9_i32_173 dim 1 : vector<16x128xf32>, i32 -> vector<16x128xf32>
    %319 = arith.mulf %317, %3 : vector<16x128xf32>
    %320 = arith.mulf %318, %3 : vector<16x128xf32>
    %321 = arith.truncf %319 : vector<16x128xf32> to vector<16x128xbf16>
    %322 = arith.truncf %320 : vector<16x128xf32> to vector<16x128xbf16>
    %c0_174 = arith.constant 0 : index
    %c0_175 = arith.constant 0 : index
    %323 = vector.load %arg12[%c0_174, %c0_175] : memref<288x512xbf16, #tpu.memory_space<vmem>>, vector<16x128xbf16>
    tpu.vector_store %arg12[%c0_174, %c0_175], %321 {strides = array<i32>} : memref<288x512xbf16, #tpu.memory_space<vmem>>, vector<16x128xbf16>,
    %c144_176 = arith.constant 144 : index
    %c0_177 = arith.constant 0 : index
    %324 = vector.load %arg12[%c144_176, %c0_177] : memref<288x512xbf16, #tpu.memory_space<vmem>>, vector<16x128xbf16>
    tpu.vector_store %arg12[%c144_176, %c0_177], %322 {strides = array<i32>} : memref<288x512xbf16, #tpu.memory_space<vmem>>, vector<16x128xbf16>,
    %325 = vector.extract_strided_slice %305 {offsets = [0, 256], sizes = [16, 128], strides = [1, 1]} : vector<16x512xf32> to vector<16x128xf32>
    %326 = vector.extract_strided_slice %314 {offsets = [0, 256], sizes = [16, 128], strides = [1, 1]} : vector<16x512xf32> to vector<16x128xf32>
    %c8_i32_178 = arith.constant 8 : i32
    %327 = tpu.dynamic_rotate %325 by %c8_i32_178 dim 1 : vector<16x128xf32>, i32 -> vector<16x128xf32>
    %c8_i32_179 = arith.constant 8 : i32
    %328 = tpu.dynamic_rotate %326 by %c8_i32_179 dim 1 : vector<16x128xf32>, i32 -> vector<16x128xf32>
    %329 = arith.mulf %327, %6 : vector<16x128xf32>
    %330 = arith.mulf %328, %6 : vector<16x128xf32>
    %331 = arith.truncf %329 : vector<16x128xf32> to vector<16x128xbf16>
    %332 = arith.truncf %330 : vector<16x128xf32> to vector<16x128xbf16>
    %c0_180 = arith.constant 0 : index
    %c128_181 = arith.constant 128 : index
    %333 = vector.load %arg12[%c0_180, %c128_181] : memref<288x512xbf16, #tpu.memory_space<vmem>>, vector<16x128xbf16>
    tpu.vector_store %arg12[%c0_180, %c128_181], %331 {strides = array<i32>} : memref<288x512xbf16, #tpu.memory_space<vmem>>, vector<16x128xbf16>,
    %c144_182 = arith.constant 144 : index
    %c128_183 = arith.constant 128 : index
    %334 = vector.load %arg12[%c144_182, %c128_183] : memref<288x512xbf16, #tpu.memory_space<vmem>>, vector<16x128xbf16>
    tpu.vector_store %arg12[%c144_182, %c128_183], %332 {strides = array<i32>} : memref<288x512xbf16, #tpu.memory_space<vmem>>, vector<16x128xbf16>,
    %c16_184 = arith.constant 16 : index
    %c0_185 = arith.constant 0 : index
    %335 = vector.load %arg12[%c16_184, %c0_185] : memref<288x512xbf16, #tpu.memory_space<vmem>>, vector<16x128xbf16>
    tpu.vector_store %arg12[%c16_184, %c0_185], %331 {strides = array<i32>} : memref<288x512xbf16, #tpu.memory_space<vmem>>, vector<16x128xbf16>,
    %c160_186 = arith.constant 160 : index
    %c0_187 = arith.constant 0 : index
    %336 = vector.load %arg12[%c160_186, %c0_187] : memref<288x512xbf16, #tpu.memory_space<vmem>>, vector<16x128xbf16>
    tpu.vector_store %arg12[%c160_186, %c0_187], %332 {strides = array<i32>} : memref<288x512xbf16, #tpu.memory_space<vmem>>, vector<16x128xbf16>,
    %337 = vector.extract_strided_slice %305 {offsets = [0, 128], sizes = [16, 128], strides = [1, 1]} : vector<16x512xf32> to vector<16x128xf32>
    %338 = vector.extract_strided_slice %314 {offsets = [0, 128], sizes = [16, 128], strides = [1, 1]} : vector<16x512xf32> to vector<16x128xf32>
    %c1_i32_188 = arith.constant 1 : i32
    %339 = tpu.dynamic_rotate %337 by %c1_i32_188 dim 1 : vector<16x128xf32>, i32 -> vector<16x128xf32>
    %c1_i32_189 = arith.constant 1 : i32
    %340 = tpu.dynamic_rotate %338 by %c1_i32_189 dim 1 : vector<16x128xf32>, i32 -> vector<16x128xf32>
    %341 = arith.mulf %339, %9 : vector<16x128xf32>
    %342 = arith.mulf %340, %9 : vector<16x128xf32>
    %343 = arith.truncf %341 : vector<16x128xf32> to vector<16x128xbf16>
    %344 = arith.truncf %342 : vector<16x128xf32> to vector<16x128xbf16>
    %c0_190 = arith.constant 0 : index
    %c256_191 = arith.constant 256 : index
    %345 = vector.load %arg12[%c0_190, %c256_191] : memref<288x512xbf16, #tpu.memory_space<vmem>>, vector<16x128xbf16>
    tpu.vector_store %arg12[%c0_190, %c256_191], %343 {strides = array<i32>} : memref<288x512xbf16, #tpu.memory_space<vmem>>, vector<16x128xbf16>,
    %c144_192 = arith.constant 144 : index
    %c256_193 = arith.constant 256 : index
    %346 = vector.load %arg12[%c144_192, %c256_193] : memref<288x512xbf16, #tpu.memory_space<vmem>>, vector<16x128xbf16>
    tpu.vector_store %arg12[%c144_192, %c256_193], %344 {strides = array<i32>} : memref<288x512xbf16, #tpu.memory_space<vmem>>, vector<16x128xbf16>,
    %c48_194 = arith.constant 48 : index
    %c0_195 = arith.constant 0 : index
    %347 = vector.load %arg12[%c48_194, %c0_195] : memref<288x512xbf16, #tpu.memory_space<vmem>>, vector<16x128xbf16>
    tpu.vector_store %arg12[%c48_194, %c0_195], %343 {strides = array<i32>} : memref<288x512xbf16, #tpu.memory_space<vmem>>, vector<16x128xbf16>,
    %c192_196 = arith.constant 192 : index
    %c0_197 = arith.constant 0 : index
    %348 = vector.load %arg12[%c192_196, %c0_197] : memref<288x512xbf16, #tpu.memory_space<vmem>>, vector<16x128xbf16>
    tpu.vector_store %arg12[%c192_196, %c0_197], %344 {strides = array<i32>} : memref<288x512xbf16, #tpu.memory_space<vmem>>, vector<16x128xbf16>,
    %349 = vector.extract_strided_slice %305 {offsets = [0, 0], sizes = [16, 128], strides = [1, 1]} : vector<16x512xf32> to vector<16x128xf32>
    %350 = vector.extract_strided_slice %314 {offsets = [0, 0], sizes = [16, 128], strides = [1, 1]} : vector<16x512xf32> to vector<16x128xf32>
    %351 = arith.truncf %349 : vector<16x128xf32> to vector<16x128xbf16>
    %352 = arith.truncf %350 : vector<16x128xf32> to vector<16x128xbf16>
    %c0_198 = arith.constant 0 : index
    %c384_199 = arith.constant 384 : index
    %353 = vector.load %arg12[%c0_198, %c384_199] : memref<288x512xbf16, #tpu.memory_space<vmem>>, vector<16x128xbf16>
    tpu.vector_store %arg12[%c0_198, %c384_199], %351 {strides = array<i32>} : memref<288x512xbf16, #tpu.memory_space<vmem>>, vector<16x128xbf16>,
    %c144_200 = arith.constant 144 : index
    %c384_201 = arith.constant 384 : index
    %354 = vector.load %arg12[%c144_200, %c384_201] : memref<288x512xbf16, #tpu.memory_space<vmem>>, vector<16x128xbf16>
    tpu.vector_store %arg12[%c144_200, %c384_201], %352 {strides = array<i32>} : memref<288x512xbf16, #tpu.memory_space<vmem>>, vector<16x128xbf16>,
    %c16_202 = arith.constant 16 : index
    %c256_203 = arith.constant 256 : index
    %355 = vector.load %arg12[%c16_202, %c256_203] : memref<288x512xbf16, #tpu.memory_space<vmem>>, vector<16x128xbf16>
    tpu.vector_store %arg12[%c16_202, %c256_203], %351 {strides = array<i32>} : memref<288x512xbf16, #tpu.memory_space<vmem>>, vector<16x128xbf16>,
    %c160_204 = arith.constant 160 : index
    %c256_205 = arith.constant 256 : index
    %356 = vector.load %arg12[%c160_204, %c256_205] : memref<288x512xbf16, #tpu.memory_space<vmem>>, vector<16x128xbf16>
    tpu.vector_store %arg12[%c160_204, %c256_205], %352 {strides = array<i32>} : memref<288x512xbf16, #tpu.memory_space<vmem>>, vector<16x128xbf16>,
    %c48_206 = arith.constant 48 : index
    %c128_207 = arith.constant 128 : index
    %357 = vector.load %arg12[%c48_206, %c128_207] : memref<288x512xbf16, #tpu.memory_space<vmem>>, vector<16x128xbf16>
    tpu.vector_store %arg12[%c48_206, %c128_207], %351 {strides = array<i32>} : memref<288x512xbf16, #tpu.memory_space<vmem>>, vector<16x128xbf16>,
    %c192_208 = arith.constant 192 : index
    %c128_209 = arith.constant 128 : index
    %358 = vector.load %arg12[%c192_208, %c128_209] : memref<288x512xbf16, #tpu.memory_space<vmem>>, vector<16x128xbf16>
    tpu.vector_store %arg12[%c192_208, %c128_209], %352 {strides = array<i32>} : memref<288x512xbf16, #tpu.memory_space<vmem>>, vector<16x128xbf16>,
    %c64_210 = arith.constant 64 : index
    %c0_211 = arith.constant 0 : index
    %359 = vector.load %arg12[%c64_210, %c0_211] : memref<288x512xbf16, #tpu.memory_space<vmem>>, vector<16x128xbf16>
    tpu.vector_store %arg12[%c64_210, %c0_211], %351 {strides = array<i32>} : memref<288x512xbf16, #tpu.memory_space<vmem>>, vector<16x128xbf16>,
    %c208_212 = arith.constant 208 : index
    %c0_213 = arith.constant 0 : index
    %360 = vector.load %arg12[%c208_212, %c0_213] : memref<288x512xbf16, #tpu.memory_space<vmem>>, vector<16x128xbf16>
    tpu.vector_store %arg12[%c208_212, %c0_213], %352 {strides = array<i32>} : memref<288x512xbf16, #tpu.memory_space<vmem>>, vector<16x128xbf16>,
    %361 = vector.extract_strided_slice %305 {offsets = [0, 384], sizes = [16, 128], strides = [1, 1]} : vector<16x512xf32> to vector<16x128xf32>
    %362 = vector.extract_strided_slice %314 {offsets = [0, 384], sizes = [16, 128], strides = [1, 1]} : vector<16x512xf32> to vector<16x128xf32>
    %c8_i32_214 = arith.constant 8 : i32
    %363 = tpu.dynamic_rotate %361 by %c8_i32_214 dim 1 : vector<16x128xf32>, i32 -> vector<16x128xf32>
    %c8_i32_215 = arith.constant 8 : i32
    %364 = tpu.dynamic_rotate %362 by %c8_i32_215 dim 1 : vector<16x128xf32>, i32 -> vector<16x128xf32>
    %365 = arith.mulf %363, %6 : vector<16x128xf32>
    %366 = arith.mulf %364, %6 : vector<16x128xf32>
    %367 = arith.truncf %365 : vector<16x128xf32> to vector<16x128xbf16>
    %368 = arith.truncf %366 : vector<16x128xf32> to vector<16x128xbf16>
    %c16_216 = arith.constant 16 : index
    %c128_217 = arith.constant 128 : index
    %369 = vector.load %arg12[%c16_216, %c128_217] : memref<288x512xbf16, #tpu.memory_space<vmem>>, vector<16x128xbf16>
    tpu.vector_store %arg12[%c16_216, %c128_217], %367 {strides = array<i32>} : memref<288x512xbf16, #tpu.memory_space<vmem>>, vector<16x128xbf16>,
    %c160_218 = arith.constant 160 : index
    %c128_219 = arith.constant 128 : index
    %370 = vector.load %arg12[%c160_218, %c128_219] : memref<288x512xbf16, #tpu.memory_space<vmem>>, vector<16x128xbf16>
    tpu.vector_store %arg12[%c160_218, %c128_219], %368 {strides = array<i32>} : memref<288x512xbf16, #tpu.memory_space<vmem>>, vector<16x128xbf16>,
    %c32_220 = arith.constant 32 : index
    %c0_221 = arith.constant 0 : index
    %371 = vector.load %arg12[%c32_220, %c0_221] : memref<288x512xbf16, #tpu.memory_space<vmem>>, vector<16x128xbf16>
    tpu.vector_store %arg12[%c32_220, %c0_221], %367 {strides = array<i32>} : memref<288x512xbf16, #tpu.memory_space<vmem>>, vector<16x128xbf16>,
    %c176_222 = arith.constant 176 : index
    %c0_223 = arith.constant 0 : index
    %372 = vector.load %arg12[%c176_222, %c0_223] : memref<288x512xbf16, #tpu.memory_space<vmem>>, vector<16x128xbf16>
    tpu.vector_store %arg12[%c176_222, %c0_223], %368 {strides = array<i32>} : memref<288x512xbf16, #tpu.memory_space<vmem>>, vector<16x128xbf16>,
    %373 = vector.extract_strided_slice %305 {offsets = [0, 128], sizes = [16, 128], strides = [1, 1]} : vector<16x512xf32> to vector<16x128xf32>
    %374 = vector.extract_strided_slice %314 {offsets = [0, 128], sizes = [16, 128], strides = [1, 1]} : vector<16x512xf32> to vector<16x128xf32>
    %375 = arith.truncf %373 : vector<16x128xf32> to vector<16x128xbf16>
    %376 = arith.truncf %374 : vector<16x128xf32> to vector<16x128xbf16>
    %c16_224 = arith.constant 16 : index
    %c384_225 = arith.constant 384 : index
    %377 = vector.load %arg12[%c16_224, %c384_225] : memref<288x512xbf16, #tpu.memory_space<vmem>>, vector<16x128xbf16>
    tpu.vector_store %arg12[%c16_224, %c384_225], %375 {strides = array<i32>} : memref<288x512xbf16, #tpu.memory_space<vmem>>, vector<16x128xbf16>,
    %c160_226 = arith.constant 160 : index
    %c384_227 = arith.constant 384 : index
    %378 = vector.load %arg12[%c160_226, %c384_227] : memref<288x512xbf16, #tpu.memory_space<vmem>>, vector<16x128xbf16>
    tpu.vector_store %arg12[%c160_226, %c384_227], %376 {strides = array<i32>} : memref<288x512xbf16, #tpu.memory_space<vmem>>, vector<16x128xbf16>,
    %c32_228 = arith.constant 32 : index
    %c256_229 = arith.constant 256 : index
    %379 = vector.load %arg12[%c32_228, %c256_229] : memref<288x512xbf16, #tpu.memory_space<vmem>>, vector<16x128xbf16>
    tpu.vector_store %arg12[%c32_228, %c256_229], %375 {strides = array<i32>} : memref<288x512xbf16, #tpu.memory_space<vmem>>, vector<16x128xbf16>,
    %c176_230 = arith.constant 176 : index
    %c256_231 = arith.constant 256 : index
    %380 = vector.load %arg12[%c176_230, %c256_231] : memref<288x512xbf16, #tpu.memory_space<vmem>>, vector<16x128xbf16>
    tpu.vector_store %arg12[%c176_230, %c256_231], %376 {strides = array<i32>} : memref<288x512xbf16, #tpu.memory_space<vmem>>, vector<16x128xbf16>,
    %c64_232 = arith.constant 64 : index
    %c128_233 = arith.constant 128 : index
    %381 = vector.load %arg12[%c64_232, %c128_233] : memref<288x512xbf16, #tpu.memory_space<vmem>>, vector<16x128xbf16>
    tpu.vector_store %arg12[%c64_232, %c128_233], %375 {strides = array<i32>} : memref<288x512xbf16, #tpu.memory_space<vmem>>, vector<16x128xbf16>,
    %c208_234 = arith.constant 208 : index
    %c128_235 = arith.constant 128 : index
    %382 = vector.load %arg12[%c208_234, %c128_235] : memref<288x512xbf16, #tpu.memory_space<vmem>>, vector<16x128xbf16>
    tpu.vector_store %arg12[%c208_234, %c128_235], %376 {strides = array<i32>} : memref<288x512xbf16, #tpu.memory_space<vmem>>, vector<16x128xbf16>,
    %c80_236 = arith.constant 80 : index
    %c0_237 = arith.constant 0 : index
    %383 = vector.load %arg12[%c80_236, %c0_237] : memref<288x512xbf16, #tpu.memory_space<vmem>>, vector<16x128xbf16>
    tpu.vector_store %arg12[%c80_236, %c0_237], %375 {strides = array<i32>} : memref<288x512xbf16, #tpu.memory_space<vmem>>, vector<16x128xbf16>,
    %c224_238 = arith.constant 224 : index
    %c0_239 = arith.constant 0 : index
    %384 = vector.load %arg12[%c224_238, %c0_239] : memref<288x512xbf16, #tpu.memory_space<vmem>>, vector<16x128xbf16>
    tpu.vector_store %arg12[%c224_238, %c0_239], %376 {strides = array<i32>} : memref<288x512xbf16, #tpu.memory_space<vmem>>, vector<16x128xbf16>,
    %385 = vector.extract_strided_slice %305 {offsets = [0, 256], sizes = [16, 128], strides = [1, 1]} : vector<16x512xf32> to vector<16x128xf32>
    %386 = vector.extract_strided_slice %314 {offsets = [0, 256], sizes = [16, 128], strides = [1, 1]} : vector<16x512xf32> to vector<16x128xf32>
    %c7_i32_240 = arith.constant 7 : i32
    %387 = tpu.dynamic_rotate %385 by %c7_i32_240 dim 1 : vector<16x128xf32>, i32 -> vector<16x128xf32>
    %c7_i32_241 = arith.constant 7 : i32
    %388 = tpu.dynamic_rotate %386 by %c7_i32_241 dim 1 : vector<16x128xf32>, i32 -> vector<16x128xf32>
    %389 = arith.mulf %387, %12 : vector<16x128xf32>
    %390 = arith.mulf %388, %12 : vector<16x128xf32>
    %391 = arith.truncf %389 : vector<16x128xf32> to vector<16x128xbf16>
    %392 = arith.truncf %390 : vector<16x128xf32> to vector<16x128xbf16>
    %c32_242 = arith.constant 32 : index
    %c128_243 = arith.constant 128 : index
    %393 = vector.load %arg12[%c32_242, %c128_243] : memref<288x512xbf16, #tpu.memory_space<vmem>>, vector<16x128xbf16>
    tpu.vector_store %arg12[%c32_242, %c128_243], %391 {strides = array<i32>} : memref<288x512xbf16, #tpu.memory_space<vmem>>, vector<16x128xbf16>,
    %c176_244 = arith.constant 176 : index
    %c128_245 = arith.constant 128 : index
    %394 = vector.load %arg12[%c176_244, %c128_245] : memref<288x512xbf16, #tpu.memory_space<vmem>>, vector<16x128xbf16>
    tpu.vector_store %arg12[%c176_244, %c128_245], %392 {strides = array<i32>} : memref<288x512xbf16, #tpu.memory_space<vmem>>, vector<16x128xbf16>,
    %395 = vector.extract_strided_slice %305 {offsets = [0, 0], sizes = [16, 128], strides = [1, 1]} : vector<16x512xf32> to vector<16x128xf32>
    %396 = vector.extract_strided_slice %314 {offsets = [0, 0], sizes = [16, 128], strides = [1, 1]} : vector<16x512xf32> to vector<16x128xf32>
    %c127_i32_246 = arith.constant 127 : i32
    %397 = tpu.dynamic_rotate %395 by %c127_i32_246 dim 1 : vector<16x128xf32>, i32 -> vector<16x128xf32>
    %c127_i32_247 = arith.constant 127 : i32
    %398 = tpu.dynamic_rotate %396 by %c127_i32_247 dim 1 : vector<16x128xf32>, i32 -> vector<16x128xf32>
    %399 = arith.mulf %397, %15 : vector<16x128xf32>
    %400 = arith.mulf %398, %15 : vector<16x128xf32>
    %401 = arith.truncf %399 : vector<16x128xf32> to vector<16x128xbf16>
    %402 = arith.truncf %400 : vector<16x128xf32> to vector<16x128xbf16>
    %c32_248 = arith.constant 32 : index
    %c384_249 = arith.constant 384 : index
    %403 = vector.load %arg12[%c32_248, %c384_249] : memref<288x512xbf16, #tpu.memory_space<vmem>>, vector<16x128xbf16>
    tpu.vector_store %arg12[%c32_248, %c384_249], %401 {strides = array<i32>} : memref<288x512xbf16, #tpu.memory_space<vmem>>, vector<16x128xbf16>,
    %c176_250 = arith.constant 176 : index
    %c384_251 = arith.constant 384 : index
    %404 = vector.load %arg12[%c176_250, %c384_251] : memref<288x512xbf16, #tpu.memory_space<vmem>>, vector<16x128xbf16>
    tpu.vector_store %arg12[%c176_250, %c384_251], %402 {strides = array<i32>} : memref<288x512xbf16, #tpu.memory_space<vmem>>, vector<16x128xbf16>,
    %c80_252 = arith.constant 80 : index
    %c128_253 = arith.constant 128 : index
    %405 = vector.load %arg12[%c80_252, %c128_253] : memref<288x512xbf16, #tpu.memory_space<vmem>>, vector<16x128xbf16>
    tpu.vector_store %arg12[%c80_252, %c128_253], %401 {strides = array<i32>} : memref<288x512xbf16, #tpu.memory_space<vmem>>, vector<16x128xbf16>,
    %c224_254 = arith.constant 224 : index
    %c128_255 = arith.constant 128 : index
    %406 = vector.load %arg12[%c224_254, %c128_255] : memref<288x512xbf16, #tpu.memory_space<vmem>>, vector<16x128xbf16>
    tpu.vector_store %arg12[%c224_254, %c128_255], %402 {strides = array<i32>} : memref<288x512xbf16, #tpu.memory_space<vmem>>, vector<16x128xbf16>,
    %407 = vector.extract_strided_slice %305 {offsets = [0, 384], sizes = [16, 128], strides = [1, 1]} : vector<16x512xf32> to vector<16x128xf32>
    %408 = vector.extract_strided_slice %314 {offsets = [0, 384], sizes = [16, 128], strides = [1, 1]} : vector<16x512xf32> to vector<16x128xf32>
    %c1_i32_256 = arith.constant 1 : i32
    %409 = tpu.dynamic_rotate %407 by %c1_i32_256 dim 1 : vector<16x128xf32>, i32 -> vector<16x128xf32>
    %c1_i32_257 = arith.constant 1 : i32
    %410 = tpu.dynamic_rotate %408 by %c1_i32_257 dim 1 : vector<16x128xf32>, i32 -> vector<16x128xf32>
    %411 = arith.mulf %409, %9 : vector<16x128xf32>
    %412 = arith.mulf %410, %9 : vector<16x128xf32>
    %413 = arith.truncf %411 : vector<16x128xf32> to vector<16x128xbf16>
    %414 = arith.truncf %412 : vector<16x128xf32> to vector<16x128xbf16>
    %c48_258 = arith.constant 48 : index
    %c256_259 = arith.constant 256 : index
    %415 = vector.load %arg12[%c48_258, %c256_259] : memref<288x512xbf16, #tpu.memory_space<vmem>>, vector<16x128xbf16>
    tpu.vector_store %arg12[%c48_258, %c256_259], %413 {strides = array<i32>} : memref<288x512xbf16, #tpu.memory_space<vmem>>, vector<16x128xbf16>,
    %c192_260 = arith.constant 192 : index
    %c256_261 = arith.constant 256 : index
    %416 = vector.load %arg12[%c192_260, %c256_261] : memref<288x512xbf16, #tpu.memory_space<vmem>>, vector<16x128xbf16>
    tpu.vector_store %arg12[%c192_260, %c256_261], %414 {strides = array<i32>} : memref<288x512xbf16, #tpu.memory_space<vmem>>, vector<16x128xbf16>,
    %c96_262 = arith.constant 96 : index
    %c0_263 = arith.constant 0 : index
    %417 = vector.load %arg12[%c96_262, %c0_263] : memref<288x512xbf16, #tpu.memory_space<vmem>>, vector<16x128xbf16>
    tpu.vector_store %arg12[%c96_262, %c0_263], %413 {strides = array<i32>} : memref<288x512xbf16, #tpu.memory_space<vmem>>, vector<16x128xbf16>,
    %c240_264 = arith.constant 240 : index
    %c0_265 = arith.constant 0 : index
    %418 = vector.load %arg12[%c240_264, %c0_265] : memref<288x512xbf16, #tpu.memory_space<vmem>>, vector<16x128xbf16>
    tpu.vector_store %arg12[%c240_264, %c0_265], %414 {strides = array<i32>} : memref<288x512xbf16, #tpu.memory_space<vmem>>, vector<16x128xbf16>,
    %419 = vector.extract_strided_slice %305 {offsets = [0, 256], sizes = [16, 128], strides = [1, 1]} : vector<16x512xf32> to vector<16x128xf32>
    %420 = vector.extract_strided_slice %314 {offsets = [0, 256], sizes = [16, 128], strides = [1, 1]} : vector<16x512xf32> to vector<16x128xf32>
    %421 = arith.truncf %419 : vector<16x128xf32> to vector<16x128xbf16>
    %422 = arith.truncf %420 : vector<16x128xf32> to vector<16x128xbf16>
    %c48_266 = arith.constant 48 : index
    %c384_267 = arith.constant 384 : index
    %423 = vector.load %arg12[%c48_266, %c384_267] : memref<288x512xbf16, #tpu.memory_space<vmem>>, vector<16x128xbf16>
    tpu.vector_store %arg12[%c48_266, %c384_267], %421 {strides = array<i32>} : memref<288x512xbf16, #tpu.memory_space<vmem>>, vector<16x128xbf16>,
    %c192_268 = arith.constant 192 : index
    %c384_269 = arith.constant 384 : index
    %424 = vector.load %arg12[%c192_268, %c384_269] : memref<288x512xbf16, #tpu.memory_space<vmem>>, vector<16x128xbf16>
    tpu.vector_store %arg12[%c192_268, %c384_269], %422 {strides = array<i32>} : memref<288x512xbf16, #tpu.memory_space<vmem>>, vector<16x128xbf16>,
    %c64_270 = arith.constant 64 : index
    %c256_271 = arith.constant 256 : index
    %425 = vector.load %arg12[%c64_270, %c256_271] : memref<288x512xbf16, #tpu.memory_space<vmem>>, vector<16x128xbf16>
    tpu.vector_store %arg12[%c64_270, %c256_271], %421 {strides = array<i32>} : memref<288x512xbf16, #tpu.memory_space<vmem>>, vector<16x128xbf16>,
    %c208_272 = arith.constant 208 : index
    %c256_273 = arith.constant 256 : index
    %426 = vector.load %arg12[%c208_272, %c256_273] : memref<288x512xbf16, #tpu.memory_space<vmem>>, vector<16x128xbf16>
    tpu.vector_store %arg12[%c208_272, %c256_273], %422 {strides = array<i32>} : memref<288x512xbf16, #tpu.memory_space<vmem>>, vector<16x128xbf16>,
    %c96_274 = arith.constant 96 : index
    %c128_275 = arith.constant 128 : index
    %427 = vector.load %arg12[%c96_274, %c128_275] : memref<288x512xbf16, #tpu.memory_space<vmem>>, vector<16x128xbf16>
    tpu.vector_store %arg12[%c96_274, %c128_275], %421 {strides = array<i32>} : memref<288x512xbf16, #tpu.memory_space<vmem>>, vector<16x128xbf16>,
    %c240_276 = arith.constant 240 : index
    %c128_277 = arith.constant 128 : index
    %428 = vector.load %arg12[%c240_276, %c128_277] : memref<288x512xbf16, #tpu.memory_space<vmem>>, vector<16x128xbf16>
    tpu.vector_store %arg12[%c240_276, %c128_277], %422 {strides = array<i32>} : memref<288x512xbf16, #tpu.memory_space<vmem>>, vector<16x128xbf16>,
    %c112_278 = arith.constant 112 : index
    %c0_279 = arith.constant 0 : index
    %429 = vector.load %arg12[%c112_278, %c0_279] : memref<288x512xbf16, #tpu.memory_space<vmem>>, vector<16x128xbf16>
    tpu.vector_store %arg12[%c112_278, %c0_279], %421 {strides = array<i32>} : memref<288x512xbf16, #tpu.memory_space<vmem>>, vector<16x128xbf16>,
    %c256_280 = arith.constant 256 : index
    %c0_281 = arith.constant 0 : index
    %430 = vector.load %arg12[%c256_280, %c0_281] : memref<288x512xbf16, #tpu.memory_space<vmem>>, vector<16x128xbf16>
    tpu.vector_store %arg12[%c256_280, %c0_281], %422 {strides = array<i32>} : memref<288x512xbf16, #tpu.memory_space<vmem>>, vector<16x128xbf16>,
    %431 = vector.extract_strided_slice %305 {offsets = [0, 384], sizes = [16, 128], strides = [1, 1]} : vector<16x512xf32> to vector<16x128xf32>
    %432 = vector.extract_strided_slice %314 {offsets = [0, 384], sizes = [16, 128], strides = [1, 1]} : vector<16x512xf32> to vector<16x128xf32>
    %433 = arith.truncf %431 : vector<16x128xf32> to vector<16x128xbf16>
    %434 = arith.truncf %432 : vector<16x128xf32> to vector<16x128xbf16>
    %c64_282 = arith.constant 64 : index
    %c384_283 = arith.constant 384 : index
    %435 = vector.load %arg12[%c64_282, %c384_283] : memref<288x512xbf16, #tpu.memory_space<vmem>>, vector<16x128xbf16>
    tpu.vector_store %arg12[%c64_282, %c384_283], %433 {strides = array<i32>} : memref<288x512xbf16, #tpu.memory_space<vmem>>, vector<16x128xbf16>,
    %c208_284 = arith.constant 208 : index
    %c384_285 = arith.constant 384 : index
    %436 = vector.load %arg12[%c208_284, %c384_285] : memref<288x512xbf16, #tpu.memory_space<vmem>>, vector<16x128xbf16>
    tpu.vector_store %arg12[%c208_284, %c384_285], %434 {strides = array<i32>} : memref<288x512xbf16, #tpu.memory_space<vmem>>, vector<16x128xbf16>,
    %c80_286 = arith.constant 80 : index
    %c256_287 = arith.constant 256 : index
    %437 = vector.load %arg12[%c80_286, %c256_287] : memref<288x512xbf16, #tpu.memory_space<vmem>>, vector<16x128xbf16>
    tpu.vector_store %arg12[%c80_286, %c256_287], %433 {strides = array<i32>} : memref<288x512xbf16, #tpu.memory_space<vmem>>, vector<16x128xbf16>,
    %c224_288 = arith.constant 224 : index
    %c256_289 = arith.constant 256 : index
    %438 = vector.load %arg12[%c224_288, %c256_289] : memref<288x512xbf16, #tpu.memory_space<vmem>>, vector<16x128xbf16>
    tpu.vector_store %arg12[%c224_288, %c256_289], %434 {strides = array<i32>} : memref<288x512xbf16, #tpu.memory_space<vmem>>, vector<16x128xbf16>,
    %c112_290 = arith.constant 112 : index
    %c128_291 = arith.constant 128 : index
    %439 = vector.load %arg12[%c112_290, %c128_291] : memref<288x512xbf16, #tpu.memory_space<vmem>>, vector<16x128xbf16>
    tpu.vector_store %arg12[%c112_290, %c128_291], %433 {strides = array<i32>} : memref<288x512xbf16, #tpu.memory_space<vmem>>, vector<16x128xbf16>,
    %c256_292 = arith.constant 256 : index
    %c128_293 = arith.constant 128 : index
    %440 = vector.load %arg12[%c256_292, %c128_293] : memref<288x512xbf16, #tpu.memory_space<vmem>>, vector<16x128xbf16>
    tpu.vector_store %arg12[%c256_292, %c128_293], %434 {strides = array<i32>} : memref<288x512xbf16, #tpu.memory_space<vmem>>, vector<16x128xbf16>,
    %c128_294 = arith.constant 128 : index
    %c0_295 = arith.constant 0 : index
    %441 = vector.load %arg12[%c128_294, %c0_295] : memref<288x512xbf16, #tpu.memory_space<vmem>>, vector<16x128xbf16>
    tpu.vector_store %arg12[%c128_294, %c0_295], %433 {strides = array<i32>} : memref<288x512xbf16, #tpu.memory_space<vmem>>, vector<16x128xbf16>,
    %c272_296 = arith.constant 272 : index
    %c0_297 = arith.constant 0 : index
    %442 = vector.load %arg12[%c272_296, %c0_297] : memref<288x512xbf16, #tpu.memory_space<vmem>>, vector<16x128xbf16>
    tpu.vector_store %arg12[%c272_296, %c0_297], %434 {strides = array<i32>} : memref<288x512xbf16, #tpu.memory_space<vmem>>, vector<16x128xbf16>,
    %443 = vector.extract_strided_slice %305 {offsets = [0, 256], sizes = [16, 128], strides = [1, 1]} : vector<16x512xf32> to vector<16x128xf32>
    %444 = vector.extract_strided_slice %314 {offsets = [0, 256], sizes = [16, 128], strides = [1, 1]} : vector<16x512xf32> to vector<16x128xf32>
    %c127_i32_298 = arith.constant 127 : i32
    %445 = tpu.dynamic_rotate %443 by %c127_i32_298 dim 1 : vector<16x128xf32>, i32 -> vector<16x128xf32>
    %c127_i32_299 = arith.constant 127 : i32
    %446 = tpu.dynamic_rotate %444 by %c127_i32_299 dim 1 : vector<16x128xf32>, i32 -> vector<16x128xf32>
    %447 = arith.mulf %445, %15 : vector<16x128xf32>
    %448 = arith.mulf %446, %15 : vector<16x128xf32>
    %449 = arith.truncf %447 : vector<16x128xf32> to vector<16x128xbf16>
    %450 = arith.truncf %448 : vector<16x128xf32> to vector<16x128xbf16>
    %c80_300 = arith.constant 80 : index
    %c384_301 = arith.constant 384 : index
    %451 = vector.load %arg12[%c80_300, %c384_301] : memref<288x512xbf16, #tpu.memory_space<vmem>>, vector<16x128xbf16>
    tpu.vector_store %arg12[%c80_300, %c384_301], %449 {strides = array<i32>} : memref<288x512xbf16, #tpu.memory_space<vmem>>, vector<16x128xbf16>,
    %c224_302 = arith.constant 224 : index
    %c384_303 = arith.constant 384 : index
    %452 = vector.load %arg12[%c224_302, %c384_303] : memref<288x512xbf16, #tpu.memory_space<vmem>>, vector<16x128xbf16>
    tpu.vector_store %arg12[%c224_302, %c384_303], %450 {strides = array<i32>} : memref<288x512xbf16, #tpu.memory_space<vmem>>, vector<16x128xbf16>,
    %c128_304 = arith.constant 128 : index
    %c128_305 = arith.constant 128 : index
    %453 = vector.load %arg12[%c128_304, %c128_305] : memref<288x512xbf16, #tpu.memory_space<vmem>>, vector<16x128xbf16>
    tpu.vector_store %arg12[%c128_304, %c128_305], %449 {strides = array<i32>} : memref<288x512xbf16, #tpu.memory_space<vmem>>, vector<16x128xbf16>,
    %c272_306 = arith.constant 272 : index
    %c128_307 = arith.constant 128 : index
    %454 = vector.load %arg12[%c272_306, %c128_307] : memref<288x512xbf16, #tpu.memory_space<vmem>>, vector<16x128xbf16>
    tpu.vector_store %arg12[%c272_306, %c128_307], %450 {strides = array<i32>} : memref<288x512xbf16, #tpu.memory_space<vmem>>, vector<16x128xbf16>,
    %455 = vector.extract_strided_slice %305 {offsets = [0, 128], sizes = [16, 128], strides = [1, 1]} : vector<16x512xf32> to vector<16x128xf32>
    %456 = vector.extract_strided_slice %314 {offsets = [0, 128], sizes = [16, 128], strides = [1, 1]} : vector<16x512xf32> to vector<16x128xf32>
    %c121_i32_308 = arith.constant 121 : i32
    %457 = tpu.dynamic_rotate %455 by %c121_i32_308 dim 1 : vector<16x128xf32>, i32 -> vector<16x128xf32>
    %c121_i32_309 = arith.constant 121 : i32
    %458 = tpu.dynamic_rotate %456 by %c121_i32_309 dim 1 : vector<16x128xf32>, i32 -> vector<16x128xf32>
    %459 = arith.mulf %457, %18 : vector<16x128xf32>
    %460 = arith.mulf %458, %18 : vector<16x128xf32>
    %461 = arith.truncf %459 : vector<16x128xf32> to vector<16x128xbf16>
    %462 = arith.truncf %460 : vector<16x128xf32> to vector<16x128xbf16>
    %c96_310 = arith.constant 96 : index
    %c256_311 = arith.constant 256 : index
    %463 = vector.load %arg12[%c96_310, %c256_311] : memref<288x512xbf16, #tpu.memory_space<vmem>>, vector<16x128xbf16>
    tpu.vector_store %arg12[%c96_310, %c256_311], %461 {strides = array<i32>} : memref<288x512xbf16, #tpu.memory_space<vmem>>, vector<16x128xbf16>,
    %c240_312 = arith.constant 240 : index
    %c256_313 = arith.constant 256 : index
    %464 = vector.load %arg12[%c240_312, %c256_313] : memref<288x512xbf16, #tpu.memory_space<vmem>>, vector<16x128xbf16>
    tpu.vector_store %arg12[%c240_312, %c256_313], %462 {strides = array<i32>} : memref<288x512xbf16, #tpu.memory_space<vmem>>, vector<16x128xbf16>,
    %465 = vector.extract_strided_slice %305 {offsets = [0, 0], sizes = [16, 128], strides = [1, 1]} : vector<16x512xf32> to vector<16x128xf32>
    %466 = vector.extract_strided_slice %314 {offsets = [0, 0], sizes = [16, 128], strides = [1, 1]} : vector<16x512xf32> to vector<16x128xf32>
    %c120_i32_314 = arith.constant 120 : i32
    %467 = tpu.dynamic_rotate %465 by %c120_i32_314 dim 1 : vector<16x128xf32>, i32 -> vector<16x128xf32>
    %c120_i32_315 = arith.constant 120 : i32
    %468 = tpu.dynamic_rotate %466 by %c120_i32_315 dim 1 : vector<16x128xf32>, i32 -> vector<16x128xf32>
    %469 = arith.mulf %467, %21 : vector<16x128xf32>
    %470 = arith.mulf %468, %21 : vector<16x128xf32>
    %471 = arith.truncf %469 : vector<16x128xf32> to vector<16x128xbf16>
    %472 = arith.truncf %470 : vector<16x128xf32> to vector<16x128xbf16>
    %c96_316 = arith.constant 96 : index
    %c384_317 = arith.constant 384 : index
    %473 = vector.load %arg12[%c96_316, %c384_317] : memref<288x512xbf16, #tpu.memory_space<vmem>>, vector<16x128xbf16>
    tpu.vector_store %arg12[%c96_316, %c384_317], %471 {strides = array<i32>} : memref<288x512xbf16, #tpu.memory_space<vmem>>, vector<16x128xbf16>,
    %c240_318 = arith.constant 240 : index
    %c384_319 = arith.constant 384 : index
    %474 = vector.load %arg12[%c240_318, %c384_319] : memref<288x512xbf16, #tpu.memory_space<vmem>>, vector<16x128xbf16>
    tpu.vector_store %arg12[%c240_318, %c384_319], %472 {strides = array<i32>} : memref<288x512xbf16, #tpu.memory_space<vmem>>, vector<16x128xbf16>,
    %c112_320 = arith.constant 112 : index
    %c256_321 = arith.constant 256 : index
    %475 = vector.load %arg12[%c112_320, %c256_321] : memref<288x512xbf16, #tpu.memory_space<vmem>>, vector<16x128xbf16>
    tpu.vector_store %arg12[%c112_320, %c256_321], %471 {strides = array<i32>} : memref<288x512xbf16, #tpu.memory_space<vmem>>, vector<16x128xbf16>,
    %c256_322 = arith.constant 256 : index
    %c256_323 = arith.constant 256 : index
    %476 = vector.load %arg12[%c256_322, %c256_323] : memref<288x512xbf16, #tpu.memory_space<vmem>>, vector<16x128xbf16>
    tpu.vector_store %arg12[%c256_322, %c256_323], %472 {strides = array<i32>} : memref<288x512xbf16, #tpu.memory_space<vmem>>, vector<16x128xbf16>,
    %477 = vector.extract_strided_slice %305 {offsets = [0, 128], sizes = [16, 128], strides = [1, 1]} : vector<16x512xf32> to vector<16x128xf32>
    %478 = vector.extract_strided_slice %314 {offsets = [0, 128], sizes = [16, 128], strides = [1, 1]} : vector<16x512xf32> to vector<16x128xf32>
    %c120_i32_324 = arith.constant 120 : i32
    %479 = tpu.dynamic_rotate %477 by %c120_i32_324 dim 1 : vector<16x128xf32>, i32 -> vector<16x128xf32>
    %c120_i32_325 = arith.constant 120 : i32
    %480 = tpu.dynamic_rotate %478 by %c120_i32_325 dim 1 : vector<16x128xf32>, i32 -> vector<16x128xf32>
    %481 = arith.mulf %479, %21 : vector<16x128xf32>
    %482 = arith.mulf %480, %21 : vector<16x128xf32>
    %483 = arith.truncf %481 : vector<16x128xf32> to vector<16x128xbf16>
    %484 = arith.truncf %482 : vector<16x128xf32> to vector<16x128xbf16>
    %c112_326 = arith.constant 112 : index
    %c384_327 = arith.constant 384 : index
    %485 = vector.load %arg12[%c112_326, %c384_327] : memref<288x512xbf16, #tpu.memory_space<vmem>>, vector<16x128xbf16>
    tpu.vector_store %arg12[%c112_326, %c384_327], %483 {strides = array<i32>} : memref<288x512xbf16, #tpu.memory_space<vmem>>, vector<16x128xbf16>,
    %c256_328 = arith.constant 256 : index
    %c384_329 = arith.constant 384 : index
    %486 = vector.load %arg12[%c256_328, %c384_329] : memref<288x512xbf16, #tpu.memory_space<vmem>>, vector<16x128xbf16>
    tpu.vector_store %arg12[%c256_328, %c384_329], %484 {strides = array<i32>} : memref<288x512xbf16, #tpu.memory_space<vmem>>, vector<16x128xbf16>,
    %c128_330 = arith.constant 128 : index
    %c256_331 = arith.constant 256 : index
    %487 = vector.load %arg12[%c128_330, %c256_331] : memref<288x512xbf16, #tpu.memory_space<vmem>>, vector<16x128xbf16>
    tpu.vector_store %arg12[%c128_330, %c256_331], %483 {strides = array<i32>} : memref<288x512xbf16, #tpu.memory_space<vmem>>, vector<16x128xbf16>,
    %c272_332 = arith.constant 272 : index
    %c256_333 = arith.constant 256 : index
    %488 = vector.load %arg12[%c272_332, %c256_333] : memref<288x512xbf16, #tpu.memory_space<vmem>>, vector<16x128xbf16>
    tpu.vector_store %arg12[%c272_332, %c256_333], %484 {strides = array<i32>} : memref<288x512xbf16, #tpu.memory_space<vmem>>, vector<16x128xbf16>,
    %489 = vector.extract_strided_slice %305 {offsets = [0, 0], sizes = [16, 128], strides = [1, 1]} : vector<16x512xf32> to vector<16x128xf32>
    %490 = vector.extract_strided_slice %314 {offsets = [0, 0], sizes = [16, 128], strides = [1, 1]} : vector<16x512xf32> to vector<16x128xf32>
    %c119_i32_334 = arith.constant 119 : i32
    %491 = tpu.dynamic_rotate %489 by %c119_i32_334 dim 1 : vector<16x128xf32>, i32 -> vector<16x128xf32>
    %c119_i32_335 = arith.constant 119 : i32
    %492 = tpu.dynamic_rotate %490 by %c119_i32_335 dim 1 : vector<16x128xf32>, i32 -> vector<16x128xf32>
    %493 = arith.mulf %491, %24 : vector<16x128xf32>
    %494 = arith.mulf %492, %24 : vector<16x128xf32>
    %495 = arith.truncf %493 : vector<16x128xf32> to vector<16x128xbf16>
    %496 = arith.truncf %494 : vector<16x128xf32> to vector<16x128xbf16>
    %c128_336 = arith.constant 128 : index
    %c384_337 = arith.constant 384 : index
    %497 = vector.load %arg12[%c128_336, %c384_337] : memref<288x512xbf16, #tpu.memory_space<vmem>>, vector<16x128xbf16>
    tpu.vector_store %arg12[%c128_336, %c384_337], %495 {strides = array<i32>} : memref<288x512xbf16, #tpu.memory_space<vmem>>, vector<16x128xbf16>,
    %c272_338 = arith.constant 272 : index
    %c384_339 = arith.constant 384 : index
    %498 = vector.load %arg12[%c272_338, %c384_339] : memref<288x512xbf16, #tpu.memory_space<vmem>>, vector<16x128xbf16>
    tpu.vector_store %arg12[%c272_338, %c384_339], %496 {strides = array<i32>} : memref<288x512xbf16, #tpu.memory_space<vmem>>, vector<16x128xbf16>,
    %c0_340 = arith.constant 0 : index
    %c0_341 = arith.constant 0 : index
    %499 = vector.load %arg7[%c0_340, %c0_341] : memref<32x288xbf16, #tpu.memory_space<vmem>>, vector<32x288xbf16>
    %c0_342 = arith.constant 0 : index
    %c0_343 = arith.constant 0 : index
    %500 = vector.load %arg12[%c0_342, %c0_343] : memref<288x512xbf16, #tpu.memory_space<vmem>>, vector<288x512xbf16>
    %cst_344 = arith.constant dense<0.000000e+00> : vector<32x512xf32>
    %501 = tpu.matmul %499, %500, %cst_344 {dimension_numbers = #tpu.dot_dimension_numbers<[1], [0], [0], [1], [0, 0, 1, 1], [], []>} : vector<32x288xbf16>, vector<288x512xbf16>, vector<32x512xf32> -> vector<32x512xf32>
    %c0_345 = arith.constant 0 : index
    %c0_346 = arith.constant 0 : index
    %502 = vector.load %arg8[%c0_345, %c0_346] : memref<32x1xf32, #tpu.memory_space<vmem>>, vector<32x1xf32>
    %503 = vector.broadcast %502 : vector<32x1xf32> to vector<32x512xf32>
    %504 = arith.addf %501, %503 : vector<32x512xf32>
    %505 = vector.extract_strided_slice %504 {offsets = [0, 0], sizes = [16, 512], strides = [1, 1]} : vector<32x512xf32> to vector<16x512xf32>
    %506 = vector.extract_strided_slice %504 {offsets = [16, 0], sizes = [16, 512], strides = [1, 1]} : vector<32x512xf32> to vector<16x512xf32>
    %cst_347 = arith.constant dense<0.000000e+00> : vector<16xf32>
    %507 = vector.multi_reduction <add>, %505, %cst_347 [1] : vector<16x512xf32> to vector<16xf32>
    %508 = vector.shape_cast %507 : vector<16xf32> to vector<16x1xf32>
    %cst_348 = arith.constant 0.001953125 : f32
    %509 = vector.broadcast %cst_348 : f32 to vector<16x1xf32>
    %510 = arith.mulf %508, %509 : vector<16x1xf32>
    %cst_349 = arith.constant dense<0.000000e+00> : vector<16xf32>
    %511 = vector.multi_reduction <add>, %506, %cst_349 [1] : vector<16x512xf32> to vector<16xf32>
    %512 = vector.shape_cast %511 : vector<16xf32> to vector<16x1xf32>
    %cst_350 = arith.constant 0.001953125 : f32
    %513 = vector.broadcast %cst_350 : f32 to vector<16x1xf32>
    %514 = arith.mulf %512, %513 : vector<16x1xf32>
    %515 = arith.mulf %505, %505 : vector<16x512xf32>
    %cst_351 = arith.constant dense<0.000000e+00> : vector<16xf32>
    %516 = vector.multi_reduction <add>, %515, %cst_351 [1] : vector<16x512xf32> to vector<16xf32>
    %517 = vector.shape_cast %516 : vector<16xf32> to vector<16x1xf32>
    %cst_352 = arith.constant 0.001953125 : f32
    %518 = vector.broadcast %cst_352 : f32 to vector<16x1xf32>
    %519 = arith.mulf %517, %518 : vector<16x1xf32>
    %520 = arith.mulf %510, %510 : vector<16x1xf32>
    %521 = arith.subf %519, %520 : vector<16x1xf32>
    %cst_353 = arith.constant 9.99999974E-6 : f32
    %522 = vector.broadcast %cst_353 : f32 to vector<16x1xf32>
    %523 = arith.addf %521, %522 : vector<16x1xf32>
    %524 = arith.mulf %506, %506 : vector<16x512xf32>
    %cst_354 = arith.constant dense<0.000000e+00> : vector<16xf32>
    %525 = vector.multi_reduction <add>, %524, %cst_354 [1] : vector<16x512xf32> to vector<16xf32>
    %526 = vector.shape_cast %525 : vector<16xf32> to vector<16x1xf32>
    %cst_355 = arith.constant 0.001953125 : f32
    %527 = vector.broadcast %cst_355 : f32 to vector<16x1xf32>
    %528 = arith.mulf %526, %527 : vector<16x1xf32>
    %529 = arith.mulf %514, %514 : vector<16x1xf32>
    %530 = arith.subf %528, %529 : vector<16x1xf32>
    %cst_356 = arith.constant 9.99999974E-6 : f32
    %531 = vector.broadcast %cst_356 : f32 to vector<16x1xf32>
    %532 = arith.addf %530, %531 : vector<16x1xf32>
    %533 = arith.mulf %505, %506 : vector<16x512xf32>
    %cst_357 = arith.constant dense<0.000000e+00> : vector<16xf32>
    %534 = vector.multi_reduction <add>, %533, %cst_357 [1] : vector<16x512xf32> to vector<16xf32>
    %535 = vector.shape_cast %534 : vector<16xf32> to vector<16x1xf32>
    %cst_358 = arith.constant 0.001953125 : f32
    %536 = vector.broadcast %cst_358 : f32 to vector<16x1xf32>
    %537 = arith.mulf %535, %536 : vector<16x1xf32>
    %538 = arith.mulf %510, %514 : vector<16x1xf32>
    %539 = arith.subf %537, %538 : vector<16x1xf32>
    %540 = arith.mulf %523, %532 : vector<16x1xf32>
    %541 = arith.mulf %539, %539 : vector<16x1xf32>
    %542 = arith.subf %540, %541 : vector<16x1xf32>
    %543 = math.sqrt %542 : vector<16x1xf32>
    %544 = arith.addf %523, %532 : vector<16x1xf32>
    %cst_359 = arith.constant 2.000000e+00 : f32
    %545 = vector.broadcast %cst_359 : f32 to vector<16x1xf32>
    %546 = arith.mulf %545, %543 : vector<16x1xf32>
    %547 = arith.addf %544, %546 : vector<16x1xf32>
    %548 = math.sqrt %547 : vector<16x1xf32>
    %549 = arith.mulf %543, %548 : vector<16x1xf32>
    %cst_360 = arith.constant 1.000000e+00 : f32
    %550 = vector.broadcast %cst_360 : f32 to vector<16x1xf32>
    %551 = arith.divf %550, %549 : vector<16x1xf32>
    %552 = arith.addf %532, %543 : vector<16x1xf32>
    %553 = arith.mulf %552, %551 : vector<16x1xf32>
    %554 = arith.addf %523, %543 : vector<16x1xf32>
    %555 = arith.mulf %554, %551 : vector<16x1xf32>
    %cst_361 = arith.constant 0.000000e+00 : f32
    %556 = vector.broadcast %cst_361 : f32 to vector<16x1xf32>
    %557 = arith.subf %556, %539 : vector<16x1xf32>
    %558 = arith.mulf %557, %551 : vector<16x1xf32>
    %c0_362 = arith.constant 0 : index
    %c0_363 = arith.constant 0 : index
    %559 = vector.load %arg9[%c0_362, %c0_363] : memref<16x5xf32, #tpu.memory_space<vmem>>, vector<16x5xf32>
    %560 = vector.extract_strided_slice %559 {offsets = [0, 0], sizes = [16, 1], strides = [1, 1]} : vector<16x5xf32> to vector<16x1xf32>
    %561 = vector.extract_strided_slice %559 {offsets = [0, 1], sizes = [16, 1], strides = [1, 1]} : vector<16x5xf32> to vector<16x1xf32>
    %562 = vector.extract_strided_slice %559 {offsets = [0, 2], sizes = [16, 1], strides = [1, 1]} : vector<16x5xf32> to vector<16x1xf32>
    %563 = vector.extract_strided_slice %559 {offsets = [0, 3], sizes = [16, 1], strides = [1, 1]} : vector<16x5xf32> to vector<16x1xf32>
    %564 = vector.extract_strided_slice %559 {offsets = [0, 4], sizes = [16, 1], strides = [1, 1]} : vector<16x5xf32> to vector<16x1xf32>
    %565 = arith.mulf %560, %553 : vector<16x1xf32>
    %566 = arith.mulf %562, %558 : vector<16x1xf32>
    %567 = arith.addf %565, %566 : vector<16x1xf32>
    %568 = arith.mulf %560, %558 : vector<16x1xf32>
    %569 = arith.mulf %562, %555 : vector<16x1xf32>
    %570 = arith.addf %568, %569 : vector<16x1xf32>
    %571 = arith.mulf %562, %553 : vector<16x1xf32>
    %572 = arith.mulf %561, %558 : vector<16x1xf32>
    %573 = arith.addf %571, %572 : vector<16x1xf32>
    %574 = arith.mulf %562, %558 : vector<16x1xf32>
    %575 = arith.mulf %561, %555 : vector<16x1xf32>
    %576 = arith.addf %574, %575 : vector<16x1xf32>
    %577 = arith.mulf %567, %510 : vector<16x1xf32>
    %578 = arith.subf %563, %577 : vector<16x1xf32>
    %579 = arith.mulf %570, %514 : vector<16x1xf32>
    %580 = arith.subf %578, %579 : vector<16x1xf32>
    %581 = arith.mulf %573, %510 : vector<16x1xf32>
    %582 = arith.subf %564, %581 : vector<16x1xf32>
    %583 = arith.mulf %576, %514 : vector<16x1xf32>
    %584 = arith.subf %582, %583 : vector<16x1xf32>
    %585 = vector.broadcast %567 : vector<16x1xf32> to vector<16x512xf32>
    %586 = arith.mulf %585, %505 : vector<16x512xf32>
    %587 = vector.broadcast %570 : vector<16x1xf32> to vector<16x512xf32>
    %588 = arith.mulf %587, %506 : vector<16x512xf32>
    %589 = arith.addf %586, %588 : vector<16x512xf32>
    %590 = vector.broadcast %580 : vector<16x1xf32> to vector<16x512xf32>
    %591 = arith.addf %589, %590 : vector<16x512xf32>
    %cst_364 = arith.constant 0.000000e+00 : f32
    %592 = vector.broadcast %cst_364 : f32 to vector<16x512xf32>
    %593 = arith.maximumf %591, %592 : vector<16x512xf32>
    %594 = vector.broadcast %573 : vector<16x1xf32> to vector<16x512xf32>
    %595 = arith.mulf %594, %505 : vector<16x512xf32>
    %596 = vector.broadcast %576 : vector<16x1xf32> to vector<16x512xf32>
    %597 = arith.mulf %596, %506 : vector<16x512xf32>
    %598 = arith.addf %595, %597 : vector<16x512xf32>
    %599 = vector.broadcast %584 : vector<16x1xf32> to vector<16x512xf32>
    %600 = arith.addf %598, %599 : vector<16x512xf32>
    %cst_365 = arith.constant 0.000000e+00 : f32
    %601 = vector.broadcast %cst_365 : f32 to vector<16x512xf32>
    %602 = arith.maximumf %600, %601 : vector<16x512xf32>
    %603 = vector.extract_strided_slice %593 {offsets = [0, 0], sizes = [16, 128], strides = [1, 1]} : vector<16x512xf32> to vector<16x128xf32>
    %604 = vector.extract_strided_slice %593 {offsets = [0, 128], sizes = [16, 128], strides = [1, 1]} : vector<16x512xf32> to vector<16x128xf32>
    %605 = arith.addf %603, %604 : vector<16x128xf32>
    %606 = vector.extract_strided_slice %593 {offsets = [0, 256], sizes = [16, 128], strides = [1, 1]} : vector<16x512xf32> to vector<16x128xf32>
    %607 = arith.addf %605, %606 : vector<16x128xf32>
    %608 = vector.extract_strided_slice %593 {offsets = [0, 384], sizes = [16, 128], strides = [1, 1]} : vector<16x512xf32> to vector<16x128xf32>
    %609 = arith.addf %607, %608 : vector<16x128xf32>
    %cst_366 = arith.constant 2.500000e-01 : f32
    %610 = vector.broadcast %cst_366 : f32 to vector<16x128xf32>
    %611 = arith.mulf %610, %609 : vector<16x128xf32>
    %c0_367 = arith.constant 0 : index
    %c0_368 = arith.constant 0 : index
    %612 = vector.load %arg10[%c0_367, %c0_368] : memref<16x128xf32, #tpu.memory_space<vmem>>, vector<16x128xf32>
    tpu.vector_store %arg10[%c0_367, %c0_368], %611 {strides = array<i32>} : memref<16x128xf32, #tpu.memory_space<vmem>>, vector<16x128xf32>,
    %613 = vector.extract_strided_slice %602 {offsets = [0, 0], sizes = [16, 128], strides = [1, 1]} : vector<16x512xf32> to vector<16x128xf32>
    %614 = vector.extract_strided_slice %602 {offsets = [0, 128], sizes = [16, 128], strides = [1, 1]} : vector<16x512xf32> to vector<16x128xf32>
    %615 = arith.addf %613, %614 : vector<16x128xf32>
    %616 = vector.extract_strided_slice %602 {offsets = [0, 256], sizes = [16, 128], strides = [1, 1]} : vector<16x512xf32> to vector<16x128xf32>
    %617 = arith.addf %615, %616 : vector<16x128xf32>
    %618 = vector.extract_strided_slice %602 {offsets = [0, 384], sizes = [16, 128], strides = [1, 1]} : vector<16x512xf32> to vector<16x128xf32>
    %619 = arith.addf %617, %618 : vector<16x128xf32>
    %cst_369 = arith.constant 2.500000e-01 : f32
    %620 = vector.broadcast %cst_369 : f32 to vector<16x128xf32>
    %621 = arith.mulf %620, %619 : vector<16x128xf32>
    %c0_370 = arith.constant 0 : index
    %c0_371 = arith.constant 0 : index
    %622 = vector.load %arg11[%c0_370, %c0_371] : memref<16x128xf32, #tpu.memory_space<vmem>>, vector<16x128xf32>
    tpu.vector_store %arg11[%c0_370, %c0_371], %621 {strides = array<i32>} : memref<16x128xf32, #tpu.memory_space<vmem>>, vector<16x128xf32>,
    return
  }
}

</mosaic_0001>

<llo_original>
// kernel: custom-call
$region0: #{custom-call}
  %s0 = inlined_call_operand.hbm [shape: c64[2,4,16,16], index: 0, kind: input, shape index: {}]
  %s1 = inlined_call_operand.vmem [shape: f32[2,4,16,16], index: 1, kind: output, shape index: {}]
  $region1: #{custom-call} parent=0
    #allocation0 [shape = 's32[1]{0}', space=sflag, size = 0x4, scoped, tag = 'scoped memory for custom-call']
    %2 = vsyncpa [#allocation0], 0
    %s4 = sshll.u32 %s0, 4
    %s5 = int_to_ptr.hbm [resolvable:$true] %s4
    %s6 = sshll.u32 %s1, 4
    %s7 = int_to_ptr.vmem [resolvable:$true] %s6
    %9 = dma.hbm_to_vmem [thread:$0]  %s5, 2048, %s7, [#allocation0]
    %11 = dma.done [#allocation0], 2048
    %12 = vsyncpa [#allocation0], 1

// kernel: custom-call.1
$region0: #{custom-call.1}
  %s0 = inlined_call_operand.hbm [shape: c64[2,4,16,16], index: 0, kind: input, shape index: {}]
  %s1 = inlined_call_operand.vmem [shape: f32[2,4,16,16], index: 1, kind: output, shape index: {}]
  %s2 = scalar_lea.hbm %s0, 128
  $region1: #{custom-call.1} parent=0
    #allocation0 [shape = 's32[1]{0}', space=sflag, size = 0x4, scoped, tag = 'scoped memory for custom-call.1']
    %3 = vsyncpa [#allocation0], 0
    %s5 = sshll.u32 %s2, 4
    %s6 = int_to_ptr.hbm [resolvable:$true] %s5
    %s7 = sshll.u32 %s1, 4
    %s8 = int_to_ptr.vmem [resolvable:$true] %s7
    %10 = dma.hbm_to_vmem [thread:$0]  %s6, 2048, %s8, [#allocation0]
    %12 = dma.done [#allocation0], 2048
    %13 = vsyncpa [#allocation0], 1

// kernel: custom-call.2
$region0: #{custom-call.2}
  %s0 = inlined_call_operand.vmem [shape: f32[2,8,8,8], index: 0, kind: input, shape index: {}]
  %s1 = inlined_call_operand.vmem [shape: f32[2,8,8,8], index: 1, kind: input, shape index: {}]
  %s2 = inlined_call_operand.hbm [shape: c64[2,8,8,8], index: 2, kind: output, shape index: {}]
  %s3 = scalar_lea.hbm %s2, 128
  $region1: #{custom-call.2} parent=0
    #allocation0 [shape = 's32[1]{0}', space=sflag, size = 0x4, scoped, tag = 'scoped memory for custom-call.2']
    %4 = vsyncpa [#allocation0], 0
    %s6 = sshll.u32 %s0, 4
    %s7 = int_to_ptr.vmem [resolvable:$true] %s6
    %s8 = sshll.u32 %s2, 4
    %s9 = int_to_ptr.hbm [resolvable:$true] %s8
    %11 = dma.vmem_to_hbm [thread:$0]  %s7, 2048, %s9, [#allocation0]
    %13 = dma.done [#allocation0], 2048
    %14 = vsyncpa [#allocation0], 1
  $region2: #{custom-call.2} parent=0
    #allocation1 [shape = 's32[1]{0}', space=sflag, size = 0x4, scoped, tag = 'scoped memory for custom-call.2']
    %15 = vsyncpa [#allocation1], 0
    %s17 = sshll.u32 %s1, 4
    %s18 = int_to_ptr.vmem [resolvable:$true] %s17
    %s19 = sshll.u32 %s3, 4
    %s20 = int_to_ptr.hbm [resolvable:$true] %s19
    %22 = dma.vmem_to_hbm [thread:$0]  %s18, 2048, %s20, [#allocation1]
    %24 = dma.done [#allocation1], 2048
    %25 = vsyncpa [#allocation1], 1

// kernel: complex_down.1
$region0: #{complex_down.1}
  #allocation0 [shape = 'u32[]', space=smem, size = 0x4, offset = 0x4, fixed_abs, tag = 'smem constant byte address 0x4 - core index']
  #allocation1 [shape = 'u32[72,128]{1,0:T(1,128)}', space=vmem, size = 0x9000, scoped, tag = 'internal scratch']
  #allocation2 [shape = 'bf16[288,512]{1,0:T(8,128)(2,1)}', space=vmem, size = 0x48000, scoped, tag = 'scratch operand']
  %s0 = inlined_call_operand.vmem [shape: f32[16,512], index: 0, kind: input, shape index: {}]
  %s1 = inlined_call_operand.vmem [shape: f32[16,512], index: 1, kind: input, shape index: {}]
  %s2 = inlined_call_operand.vmem [shape: f32[9,128], index: 2, kind: input, shape index: {}]
  %s3 = inlined_call_operand.vmem [shape: f32[1,512], index: 3, kind: input, shape index: {}]
  %s4 = inlined_call_operand.vmem [shape: bf16[32,288], index: 4, kind: input, shape index: {}]
  %s5 = inlined_call_operand.vmem [shape: f32[32,1], index: 5, kind: input, shape index: {}]
  %s6 = inlined_call_operand.vmem [shape: f32[16,5], index: 6, kind: input, shape index: {}]
  %s7 = inlined_call_operand.vmem [shape: bf16[32,288], index: 7, kind: input, shape index: {}]
  %s8 = inlined_call_operand.vmem [shape: f32[32,1], index: 8, kind: input, shape index: {}]
  %s9 = inlined_call_operand.vmem [shape: f32[16,5], index: 9, kind: input, shape index: {}]
  %s10 = inlined_call_operand.vmem [shape: f32[16,128], index: 10, kind: output, shape index: {0}]
  %s11 = inlined_call_operand.vmem [shape: f32[16,128], index: 11, kind: output, shape index: {1}]
  %12 = xla_tuple %s10, %s11
  %s13 = sld [smem:[#allocation0]]
  $region58: #{complex_down.1} parent=0
    _
  %s15 = ssub.s32 1, %s13
  %s16 = scalar_select 0, %s15, %s13
  // Predicated region
  $region2: #{complex_down.1} parent=0 // pred_check
    _
  $region3: #{complex_down.1} parent=0 // pred_check_branch
    %18 = sbr.rel (0) target = $region5
  $region4: #{complex_down.1} parent=0 // pred_region
    _
  $region5: #{complex_down.1} parent=0 // pred_fallthru
    _
  // Predicated region
  $region6: #{complex_down.1} parent=0 // pred_check
    _
  $region7: #{complex_down.1} parent=0 // pred_check_branch
    %20 = sbr.rel (0) target = $region9
  $region8: #{complex_down.1} parent=0 // pred_region
    _
  $region9: #{complex_down.1} parent=0 // pred_fallthru
    _
  // Predicated region
  $region10: #{complex_down.1} parent=0 // pred_check
    _
  $region11: #{complex_down.1} parent=0 // pred_check_branch
    %22 = sbr.rel (0) target = $region13
  $region12: #{complex_down.1} parent=0 // pred_region
    _
  $region13: #{complex_down.1} parent=0 // pred_fallthru
    _
  // Predicated region
  $region14: #{complex_down.1} parent=0 // pred_check
    _
  $region15: #{complex_down.1} parent=0 // pred_check_branch
    %24 = sbr.rel (0) target = $region17
  $region16: #{complex_down.1} parent=0 // pred_region
    _
  $region17: #{complex_down.1} parent=0 // pred_fallthru
    _
  // Predicated region
  $region18: #{complex_down.1} parent=0 // pred_check
    _
  $region19: #{complex_down.1} parent=0 // pred_check_branch
    %26 = sbr.rel (0) target = $region21
  $region20: #{complex_down.1} parent=0 // pred_region
    _
  $region21: #{complex_down.1} parent=0 // pred_fallthru
    _
  // Predicated region
  $region22: #{complex_down.1} parent=0 // pred_check
    _
  $region23: #{complex_down.1} parent=0 // pred_check_branch
    %28 = sbr.rel (0) target = $region25
  $region24: #{complex_down.1} parent=0 // pred_region
    _
  $region25: #{complex_down.1} parent=0 // pred_fallthru
    _
  // Predicated region
  $region26: #{complex_down.1} parent=0 // pred_check
    _
  $region27: #{complex_down.1} parent=0 // pred_check_branch
    %30 = sbr.rel (0) target = $region29
  $region28: #{complex_down.1} parent=0 // pred_region
    _
  $region29: #{complex_down.1} parent=0 // pred_fallthru
    _
  // Predicated region
  $region30: #{complex_down.1} parent=0 // pred_check
    _
  $region31: #{complex_down.1} parent=0 // pred_check_branch
    %32 = sbr.rel (0) target = $region33
  $region32: #{complex_down.1} parent=0 // pred_region
    _
  $region33: #{complex_down.1} parent=0 // pred_fallthru
    _
  // Predicated region
  $region34: #{complex_down.1} parent=0 // pred_check
    _
  $region35: #{complex_down.1} parent=0 // pred_check_branch
    %34 = sbr.rel (0) target = $region37
  $region36: #{complex_down.1} parent=0 // pred_region
    _
  $region37: #{complex_down.1} parent=0 // pred_fallthru
    _
  // Predicated region
  $region38: #{complex_down.1} parent=0 // pred_check
    _
  $region39: #{complex_down.1} parent=0 // pred_check_branch
    %36 = sbr.rel (0) target = $region41
  $region40: #{complex_down.1} parent=0 // pred_region
    _
  $region41: #{complex_down.1} parent=0 // pred_fallthru
    _
  %v38 = vld [vmem:[%s2] sm:$0xff]
  %v39 = vld [vmem:[%s2 + $0x8] sm:$0x1]
  %v40 = vperm.slane %v38, 0
  %v41 = vperm.slane %v38, 1
  %v42 = vperm.slane %v38, 3
  %v43 = vperm.slane %v38, 2
  %v44 = vperm.slane %v38, 5
  %v45 = vperm.slane %v38, 6
  %v46 = vperm.slane %v38, 7
  %v47 = vperm.slane %v39, 0
  %v48 = vld [vmem:[%s0] sm:$0xff]
  %v49 = vld [vmem:[%s0 + $0x8] sm:$0xff]
  %v50 = vld [vmem:[%s0 + $0x10] sm:$0xff]
  %v51 = vld [vmem:[%s0 + $0x18] sm:$0xff]
  %v52 = vld [vmem:[%s0 + $0x20] sm:$0xff]
  %v53 = vld [vmem:[%s0 + $0x28] sm:$0xff]
  %v54 = vld [vmem:[%s0 + $0x30] sm:$0xff]
  %v55 = vld [vmem:[%s0 + $0x38] sm:$0xff]
  %v56 = vld [vmem:[%s1] sm:$0xff]
  %v57 = vld [vmem:[%s1 + $0x8] sm:$0xff]
  %v58 = vld [vmem:[%s1 + $0x10] sm:$0xff]
  %v59 = vld [vmem:[%s1 + $0x18] sm:$0xff]
  %v60 = vld [vmem:[%s1 + $0x20] sm:$0xff]
  %v61 = vld [vmem:[%s1 + $0x28] sm:$0xff]
  %v62 = vld [vmem:[%s1 + $0x30] sm:$0xff]
  %v63 = vld [vmem:[%s1 + $0x38] sm:$0xff]
  %64 = vrot.lane.b32.xlu0 %v51, 9
  %v65 = vpop.permute.xlu0 %64
  %66 = vrot.lane.b32.xlu0 %v55, 9
  %v67 = vpop.permute.xlu0 %66
  %68 = vrot.lane.b32.xlu0 %v59, 9
  %v69 = vpop.permute.xlu0 %68
  %70 = vrot.lane.b32.xlu0 %v63, 9
  %v71 = vpop.permute.xlu0 %70
  %v72 = vmul.f32 %v65, %v40
  %v73 = vmul.f32 %v67, %v40
  %v74 = vmul.f32 %v69, %v40
  %v75 = vmul.f32 %v71, %v40
  %v76 = vpack.c.bf16 %v72, %v72
  %v77 = vpack.c.bf16 %v73, %v73
  %v78 = vpack.c.bf16 %v74, %v74
  %v79 = vpack.c.bf16 %v75, %v75
  %80 = vst [vmem:[#allocation2] sm:$0xf] %v76
  %81 = vst [vmem:[#allocation2 + $0x10] sm:$0xf] %v77
  %82 = vst [vmem:[#allocation2 + $0x120] sm:$0xf] %v78
  %83 = vst [vmem:[#allocation2 + $0x130] sm:$0xf] %v79
  %84 = vrot.lane.b32.xlu0 %v50, 8
  %v85 = vpop.permute.xlu0 %84
  %86 = vrot.lane.b32.xlu0 %v54, 8
  %v87 = vpop.permute.xlu0 %86
  %88 = vrot.lane.b32.xlu0 %v58, 8
  %v89 = vpop.permute.xlu0 %88
  %90 = vrot.lane.b32.xlu0 %v62, 8
  %v91 = vpop.permute.xlu0 %90
  %v92 = vmul.f32 %v85, %v41
  %v93 = vmul.f32 %v87, %v41
  %v94 = vmul.f32 %v89, %v41
  %v95 = vmul.f32 %v91, %v41
  %v96 = vpack.c.bf16 %v92, %v92
  %v97 = vpack.c.bf16 %v93, %v93
  %v98 = vpack.c.bf16 %v94, %v94
  %v99 = vpack.c.bf16 %v95, %v95
  %100 = vst [vmem:[#allocation2 + $0x4] sm:$0xf] %v96
  %101 = vst [vmem:[#allocation2 + $0x14] sm:$0xf] %v97
  %102 = vst [vmem:[#allocation2 + $0x124] sm:$0xf] %v98
  %103 = vst [vmem:[#allocation2 + $0x134] sm:$0xf] %v99
  %104 = vst [vmem:[#allocation2 + $0x20] sm:$0xf] %v96
  %105 = vst [vmem:[#allocation2 + $0x30] sm:$0xf] %v97
  %106 = vst [vmem:[#allocation2 + $0x140] sm:$0xf] %v98
  %107 = vst [vmem:[#allocation2 + $0x150] sm:$0xf] %v99
  %108 = vrot.lane.b32.xlu0 %v49, 1
  %v109 = vpop.permute.xlu0 %108
  %110 = vrot.lane.b32.xlu0 %v53, 1
  %v111 = vpop.permute.xlu0 %110
  %112 = vrot.lane.b32.xlu0 %v57, 1
  %v113 = vpop.permute.xlu0 %112
  %114 = vrot.lane.b32.xlu0 %v61, 1
  %v115 = vpop.permute.xlu0 %114
  %v116 = vmul.f32 %v109, %v42
  %v117 = vmul.f32 %v111, %v42
  %v118 = vmul.f32 %v113, %v42
  %v119 = vmul.f32 %v115, %v42
  %v120 = vpack.c.bf16 %v116, %v116
  %v121 = vpack.c.bf16 %v117, %v117
  %v122 = vpack.c.bf16 %v118, %v118
  %v123 = vpack.c.bf16 %v119, %v119
  %124 = vst [vmem:[#allocation2 + $0x8] sm:$0xf] %v120
  %125 = vst [vmem:[#allocation2 + $0x18] sm:$0xf] %v121
  %126 = vst [vmem:[#allocation2 + $0x128] sm:$0xf] %v122
  %127 = vst [vmem:[#allocation2 + $0x138] sm:$0xf] %v123
  %128 = vst [vmem:[#allocation2 + $0x60] sm:$0xf] %v120
  %129 = vst [vmem:[#allocation2 + $0x70] sm:$0xf] %v121
  %130 = vst [vmem:[#allocation2 + $0x180] sm:$0xf] %v122
  %131 = vst [vmem:[#allocation2 + $0x190] sm:$0xf] %v123
  %v132 = vpack.c.bf16 %v48, %v48
  %v133 = vpack.c.bf16 %v52, %v52
  %v134 = vpack.c.bf16 %v56, %v56
  %v135 = vpack.c.bf16 %v60, %v60
  %136 = vst [vmem:[#allocation2 + $0xc] sm:$0xf] %v132
  %137 = vst [vmem:[#allocation2 + $0x1c] sm:$0xf] %v133
  %138 = vst [vmem:[#allocation2 + $0x12c] sm:$0xf] %v134
  %139 = vst [vmem:[#allocation2 + $0x13c] sm:$0xf] %v135
  %140 = vst [vmem:[#allocation2 + $0x28] sm:$0xf] %v132
  %141 = vst [vmem:[#allocation2 + $0x38] sm:$0xf] %v133
  %142 = vst [vmem:[#allocation2 + $0x148] sm:$0xf] %v134
  %143 = vst [vmem:[#allocation2 + $0x158] sm:$0xf] %v135
  %144 = vst [vmem:[#allocation2 + $0x64] sm:$0xf] %v132
  %145 = vst [vmem:[#allocation2 + $0x74] sm:$0xf] %v133
  %146 = vst [vmem:[#allocation2 + $0x184] sm:$0xf] %v134
  %147 = vst [vmem:[#allocation2 + $0x194] sm:$0xf] %v135
  %148 = vst [vmem:[#allocation2 + $0x80] sm:$0xf] %v132
  %149 = vst [vmem:[#allocation2 + $0x90] sm:$0xf] %v133
  %150 = vst [vmem:[#allocation2 + $0x1a0] sm:$0xf] %v134
  %151 = vst [vmem:[#allocation2 + $0x1b0] sm:$0xf] %v135
  %152 = vrot.lane.b32.xlu0 %v51, 8
  %v153 = vpop.permute.xlu0 %152
  %154 = vrot.lane.b32.xlu0 %v55, 8
  %v155 = vpop.permute.xlu0 %154
  %156 = vrot.lane.b32.xlu0 %v59, 8
  %v157 = vpop.permute.xlu0 %156
  %158 = vrot.lane.b32.xlu0 %v63, 8
  %v159 = vpop.permute.xlu0 %158
  %v160 = vmul.f32 %v153, %v41
  %v161 = vmul.f32 %v155, %v41
  %v162 = vmul.f32 %v157, %v41
  %v163 = vmul.f32 %v159, %v41
  %v164 = vpack.c.bf16 %v160, %v160
  %v165 = vpack.c.bf16 %v161, %v161
  %v166 = vpack.c.bf16 %v162, %v162
  %v167 = vpack.c.bf16 %v163, %v163
  %168 = vst [vmem:[#allocation2 + $0x24] sm:$0xf] %v164
  %169 = vst [vmem:[#allocation2 + $0x34] sm:$0xf] %v165
  %170 = vst [vmem:[#allocation2 + $0x144] sm:$0xf] %v166
  %171 = vst [vmem:[#allocation2 + $0x154] sm:$0xf] %v167
  %172 = vst [vmem:[#allocation2 + $0x40] sm:$0xf] %v164
  %173 = vst [vmem:[#allocation2 + $0x50] sm:$0xf] %v165
  %174 = vst [vmem:[#allocation2 + $0x160] sm:$0xf] %v166
  %175 = vst [vmem:[#allocation2 + $0x170] sm:$0xf] %v167
  %v176 = vpack.c.bf16 %v49, %v49
  %v177 = vpack.c.bf16 %v53, %v53
  %v178 = vpack.c.bf16 %v57, %v57
  %v179 = vpack.c.bf16 %v61, %v61
  %180 = vst [vmem:[#allocation2 + $0x2c] sm:$0xf] %v176
  %181 = vst [vmem:[#allocation2 + $0x3c] sm:$0xf] %v177
  %182 = vst [vmem:[#allocation2 + $0x14c] sm:$0xf] %v178
  %183 = vst [vmem:[#allocation2 + $0x15c] sm:$0xf] %v179
  %184 = vst [vmem:[#allocation2 + $0x48] sm:$0xf] %v176
  %185 = vst [vmem:[#allocation2 + $0x58] sm:$0xf] %v177
  %186 = vst [vmem:[#allocation2 + $0x168] sm:$0xf] %v178
  %187 = vst [vmem:[#allocation2 + $0x178] sm:$0xf] %v179
  %188 = vst [vmem:[#allocation2 + $0x84] sm:$0xf] %v176
  %189 = vst [vmem:[#allocation2 + $0x94] sm:$0xf] %v177
  %190 = vst [vmem:[#allocation2 + $0x1a4] sm:$0xf] %v178
  %191 = vst [vmem:[#allocation2 + $0x1b4] sm:$0xf] %v179
  %192 = vst [vmem:[#allocation2 + $0xa0] sm:$0xf] %v176
  %193 = vst [vmem:[#allocation2 + $0xb0] sm:$0xf] %v177
  %194 = vst [vmem:[#allocation2 + $0x1c0] sm:$0xf] %v178
  %195 = vst [vmem:[#allocation2 + $0x1d0] sm:$0xf] %v179
  %196 = vrot.lane.b32.xlu0 %v50, 7
  %v197 = vpop.permute.xlu0 %196
  %198 = vrot.lane.b32.xlu0 %v54, 7
  %v199 = vpop.permute.xlu0 %198
  %200 = vrot.lane.b32.xlu0 %v58, 7
  %v201 = vpop.permute.xlu0 %200
  %202 = vrot.lane.b32.xlu0 %v62, 7
  %v203 = vpop.permute.xlu0 %202
  %v204 = vmul.f32 %v197, %v43
  %v205 = vmul.f32 %v199, %v43
  %v206 = vmul.f32 %v201, %v43
  %v207 = vmul.f32 %v203, %v43
  %v208 = vpack.c.bf16 %v204, %v204
  %v209 = vpack.c.bf16 %v205, %v205
  %v210 = vpack.c.bf16 %v206, %v206
  %v211 = vpack.c.bf16 %v207, %v207
  %212 = vst [vmem:[#allocation2 + $0x44] sm:$0xf] %v208
  %213 = vst [vmem:[#allocation2 + $0x54] sm:$0xf] %v209
  %214 = vst [vmem:[#allocation2 + $0x164] sm:$0xf] %v210
  %215 = vst [vmem:[#allocation2 + $0x174] sm:$0xf] %v211
  %216 = vrot.lane.b32.xlu0 %v48, 127
  %v217 = vpop.permute.xlu0 %216
  %218 = vrot.lane.b32.xlu0 %v52, 127
  %v219 = vpop.permute.xlu0 %218
  %220 = vrot.lane.b32.xlu0 %v56, 127
  %v221 = vpop.permute.xlu0 %220
  %222 = vrot.lane.b32.xlu0 %v60, 127
  %v223 = vpop.permute.xlu0 %222
  %v224 = vmul.f32 %v217, %v44
  %v225 = vmul.f32 %v219, %v44
  %v226 = vmul.f32 %v221, %v44
  %v227 = vmul.f32 %v223, %v44
  %v228 = vpack.c.bf16 %v224, %v224
  %v229 = vpack.c.bf16 %v225, %v225
  %v230 = vpack.c.bf16 %v226, %v226
  %v231 = vpack.c.bf16 %v227, %v227
  %232 = vst [vmem:[#allocation2 + $0x4c] sm:$0xf] %v228
  %233 = vst [vmem:[#allocation2 + $0x5c] sm:$0xf] %v229
  %234 = vst [vmem:[#allocation2 + $0x16c] sm:$0xf] %v230
  %235 = vst [vmem:[#allocation2 + $0x17c] sm:$0xf] %v231
  %236 = vst [vmem:[#allocation2 + $0xa4] sm:$0xf] %v228
  %237 = vst [vmem:[#allocation2 + $0xb4] sm:$0xf] %v229
  %238 = vst [vmem:[#allocation2 + $0x1c4] sm:$0xf] %v230
  %239 = vst [vmem:[#allocation2 + $0x1d4] sm:$0xf] %v231
  %240 = vrot.lane.b32.xlu0 %v51, 1
  %v241 = vpop.permute.xlu0 %240
  %242 = vrot.lane.b32.xlu0 %v55, 1
  %v243 = vpop.permute.xlu0 %242
  %244 = vrot.lane.b32.xlu0 %v59, 1
  %v245 = vpop.permute.xlu0 %244
  %246 = vrot.lane.b32.xlu0 %v63, 1
  %v247 = vpop.permute.xlu0 %246
  %v248 = vmul.f32 %v241, %v42
  %v249 = vmul.f32 %v243, %v42
  %v250 = vmul.f32 %v245, %v42
  %v251 = vmul.f32 %v247, %v42
  %v252 = vpack.c.bf16 %v248, %v248
  %v253 = vpack.c.bf16 %v249, %v249
  %v254 = vpack.c.bf16 %v250, %v250
  %v255 = vpack.c.bf16 %v251, %v251
  %256 = vst [vmem:[#allocation2 + $0x68] sm:$0xf] %v252
  %257 = vst [vmem:[#allocation2 + $0x78] sm:$0xf] %v253
  %258 = vst [vmem:[#allocation2 + $0x188] sm:$0xf] %v254
  %259 = vst [vmem:[#allocation2 + $0x198] sm:$0xf] %v255
  %260 = vst [vmem:[#allocation2 + $0xc0] sm:$0xf] %v252
  %261 = vst [vmem:[#allocation2 + $0xd0] sm:$0xf] %v253
  %262 = vst [vmem:[#allocation2 + $0x1e0] sm:$0xf] %v254
  %263 = vst [vmem:[#allocation2 + $0x1f0] sm:$0xf] %v255
  %v264 = vpack.c.bf16 %v50, %v50
  %v265 = vpack.c.bf16 %v54, %v54
  %v266 = vpack.c.bf16 %v58, %v58
  %v267 = vpack.c.bf16 %v62, %v62
  %268 = vst [vmem:[#allocation2 + $0x6c] sm:$0xf] %v264
  %269 = vst [vmem:[#allocation2 + $0x7c] sm:$0xf] %v265
  %270 = vst [vmem:[#allocation2 + $0x18c] sm:$0xf] %v266
  %271 = vst [vmem:[#allocation2 + $0x19c] sm:$0xf] %v267
  %272 = vst [vmem:[#allocation2 + $0x88] sm:$0xf] %v264
  %273 = vst [vmem:[#allocation2 + $0x98] sm:$0xf] %v265
  %274 = vst [vmem:[#allocation2 + $0x1a8] sm:$0xf] %v266
  %275 = vst [vmem:[#allocation2 + $0x1b8] sm:$0xf] %v267
  %276 = vst [vmem:[#allocation2 + $0xc4] sm:$0xf] %v264
  %277 = vst [vmem:[#allocation2 + $0xd4] sm:$0xf] %v265
  %278 = vst [vmem:[#allocation2 + $0x1e4] sm:$0xf] %v266
  %279 = vst [vmem:[#allocation2 + $0x1f4] sm:$0xf] %v267
  %280 = vst [vmem:[#allocation2 + $0xe0] sm:$0xf] %v264
  %281 = vst [vmem:[#allocation2 + $0xf0] sm:$0xf] %v265
  %282 = vst [vmem:[#allocation2 + $0x200] sm:$0xf] %v266
  %283 = vst [vmem:[#allocation2 + $0x210] sm:$0xf] %v267
  %v284 = vpack.c.bf16 %v51, %v51
  %v285 = vpack.c.bf16 %v55, %v55
  %v286 = vpack.c.bf16 %v59, %v59
  %v287 = vpack.c.bf16 %v63, %v63
  %288 = vst [vmem:[#allocation2 + $0x8c] sm:$0xf] %v284
  %289 = vst [vmem:[#allocation2 + $0x9c] sm:$0xf] %v285
  %290 = vst [vmem:[#allocation2 + $0x1ac] sm:$0xf] %v286
  %291 = vst [vmem:[#allocation2 + $0x1bc] sm:$0xf] %v287
  %292 = vst [vmem:[#allocation2 + $0xa8] sm:$0xf] %v284
  %293 = vst [vmem:[#allocation2 + $0xb8] sm:$0xf] %v285
  %294 = vst [vmem:[#allocation2 + $0x1c8] sm:$0xf] %v286
  %295 = vst [vmem:[#allocation2 + $0x1d8] sm:$0xf] %v287
  %296 = vst [vmem:[#allocation2 + $0xe4] sm:$0xf] %v284
  %297 = vst [vmem:[#allocation2 + $0xf4] sm:$0xf] %v285
  %298 = vst [vmem:[#allocation2 + $0x204] sm:$0xf] %v286
  %299 = vst [vmem:[#allocation2 + $0x214] sm:$0xf] %v287
  %300 = vst [vmem:[#allocation2 + $0x100] sm:$0xf] %v284
  %301 = vst [vmem:[#allocation2 + $0x110] sm:$0xf] %v285
  %302 = vst [vmem:[#allocation2 + $0x220] sm:$0xf] %v286
  %303 = vst [vmem:[#allocation2 + $0x230] sm:$0xf] %v287
  %304 = vrot.lane.b32.xlu0 %v50, 127
  %v305 = vpop.permute.xlu0 %304
  %306 = vrot.lane.b32.xlu0 %v54, 127
  %v307 = vpop.permute.xlu0 %306
  %308 = vrot.lane.b32.xlu0 %v58, 127
  %v309 = vpop.permute.xlu0 %308
  %310 = vrot.lane.b32.xlu0 %v62, 127
  %v311 = vpop.permute.xlu0 %310
  %v312 = vmul.f32 %v305, %v44
  %v313 = vmul.f32 %v307, %v44
  %v314 = vmul.f32 %v309, %v44
  %v315 = vmul.f32 %v311, %v44
  %v316 = vpack.c.bf16 %v312, %v312
  %v317 = vpack.c.bf16 %v313, %v313
  %v318 = vpack.c.bf16 %v314, %v314
  %v319 = vpack.c.bf16 %v315, %v315
  %320 = vst [vmem:[#allocation2 + $0xac] sm:$0xf] %v316
  %321 = vst [vmem:[#allocation2 + $0xbc] sm:$0xf] %v317
  %322 = vst [vmem:[#allocation2 + $0x1cc] sm:$0xf] %v318
  %323 = vst [vmem:[#allocation2 + $0x1dc] sm:$0xf] %v319
  %324 = vst [vmem:[#allocation2 + $0x104] sm:$0xf] %v316
  %325 = vst [vmem:[#allocation2 + $0x114] sm:$0xf] %v317
  %326 = vst [vmem:[#allocation2 + $0x224] sm:$0xf] %v318
  %327 = vst [vmem:[#allocation2 + $0x234] sm:$0xf] %v319
  %328 = vrot.lane.b32.xlu0 %v49, 121
  %v329 = vpop.permute.xlu0 %328
  %330 = vrot.lane.b32.xlu0 %v53, 121
  %v331 = vpop.permute.xlu0 %330
  %332 = vrot.lane.b32.xlu0 %v57, 121
  %v333 = vpop.permute.xlu0 %332
  %334 = vrot.lane.b32.xlu0 %v61, 121
  %v335 = vpop.permute.xlu0 %334
  %v336 = vmul.f32 %v329, %v45
  %v337 = vmul.f32 %v331, %v45
  %v338 = vmul.f32 %v333, %v45
  %v339 = vmul.f32 %v335, %v45
  %v340 = vpack.c.bf16 %v336, %v336
  %v341 = vpack.c.bf16 %v337, %v337
  %v342 = vpack.c.bf16 %v338, %v338
  %v343 = vpack.c.bf16 %v339, %v339
  %344 = vst [vmem:[#allocation2 + $0xc8] sm:$0xf] %v340
  %345 = vst [vmem:[#allocation2 + $0xd8] sm:$0xf] %v341
  %346 = vst [vmem:[#allocation2 + $0x1e8] sm:$0xf] %v342
  %347 = vst [vmem:[#allocation2 + $0x1f8] sm:$0xf] %v343
  %348 = vrot.lane.b32.xlu0 %v48, 120
  %v349 = vpop.permute.xlu0 %348
  %350 = vrot.lane.b32.xlu0 %v52, 120
  %v351 = vpop.permute.xlu0 %350
  %352 = vrot.lane.b32.xlu0 %v56, 120
  %v353 = vpop.permute.xlu0 %352
  %354 = vrot.lane.b32.xlu0 %v60, 120
  %v355 = vpop.permute.xlu0 %354
  %v356 = vmul.f32 %v349, %v46
  %v357 = vmul.f32 %v351, %v46
  %v358 = vmul.f32 %v353, %v46
  %v359 = vmul.f32 %v355, %v46
  %v360 = vpack.c.bf16 %v356, %v356
  %v361 = vpack.c.bf16 %v357, %v357
  %v362 = vpack.c.bf16 %v358, %v358
  %v363 = vpack.c.bf16 %v359, %v359
  %364 = vst [vmem:[#allocation2 + $0xcc] sm:$0xf] %v360
  %365 = vst [vmem:[#allocation2 + $0xdc] sm:$0xf] %v361
  %366 = vst [vmem:[#allocation2 + $0x1ec] sm:$0xf] %v362
  %367 = vst [vmem:[#allocation2 + $0x1fc] sm:$0xf] %v363
  %368 = vst [vmem:[#allocation2 + $0xe8] sm:$0xf] %v360
  %369 = vst [vmem:[#allocation2 + $0xf8] sm:$0xf] %v361
  %370 = vst [vmem:[#allocation2 + $0x208] sm:$0xf] %v362
  %371 = vst [vmem:[#allocation2 + $0x218] sm:$0xf] %v363
  %372 = vrot.lane.b32.xlu0 %v49, 120
  %v373 = vpop.permute.xlu0 %372
  %374 = vrot.lane.b32.xlu0 %v53, 120
  %v375 = vpop.permute.xlu0 %374
  %376 = vrot.lane.b32.xlu0 %v57, 120
  %v377 = vpop.permute.xlu0 %376
  %378 = vrot.lane.b32.xlu0 %v61, 120
  %v379 = vpop.permute.xlu0 %378
  %v380 = vmul.f32 %v373, %v46
  %v381 = vmul.f32 %v375, %v46
  %v382 = vmul.f32 %v377, %v46
  %v383 = vmul.f32 %v379, %v46
  %v384 = vpack.c.bf16 %v380, %v380
  %v385 = vpack.c.bf16 %v381, %v381
  %v386 = vpack.c.bf16 %v382, %v382
  %v387 = vpack.c.bf16 %v383, %v383
  %388 = vst [vmem:[#allocation2 + $0xec] sm:$0xf] %v384
  %389 = vst [vmem:[#allocation2 + $0xfc] sm:$0xf] %v385
  %390 = vst [vmem:[#allocation2 + $0x20c] sm:$0xf] %v386
  %391 = vst [vmem:[#allocation2 + $0x21c] sm:$0xf] %v387
  %392 = vst [vmem:[#allocation2 + $0x108] sm:$0xf] %v384
  %393 = vst [vmem:[#allocation2 + $0x118] sm:$0xf] %v385
  %394 = vst [vmem:[#allocation2 + $0x228] sm:$0xf] %v386
  %395 = vst [vmem:[#allocation2 + $0x238] sm:$0xf] %v387
  %396 = vrot.lane.b32.xlu0 %v48, 119
  %v397 = vpop.permute.xlu0 %396
  %398 = vrot.lane.b32.xlu0 %v52, 119
  %v399 = vpop.permute.xlu0 %398
  %400 = vrot.lane.b32.xlu0 %v56, 119
  %v401 = vpop.permute.xlu0 %400
  %402 = vrot.lane.b32.xlu0 %v60, 119
  %v403 = vpop.permute.xlu0 %402
  %v404 = vmul.f32 %v397, %v47
  %v405 = vmul.f32 %v399, %v47
  %v406 = vmul.f32 %v401, %v47
  %v407 = vmul.f32 %v403, %v47
  %v408 = vpack.c.bf16 %v404, %v404
  %v409 = vpack.c.bf16 %v405, %v405
  %v410 = vpack.c.bf16 %v406, %v406
  %v411 = vpack.c.bf16 %v407, %v407
  %412 = vst [vmem:[#allocation2 + $0x10c] sm:$0xf] %v408
  %413 = vst [vmem:[#allocation2 + $0x11c] sm:$0xf] %v409
  %414 = vst [vmem:[#allocation2 + $0x22c] sm:$0xf] %v410
  %415 = vst [vmem:[#allocation2 + $0x23c] sm:$0xf] %v411
  %v416 = vld [vmem:[%s4] sm:$0xff]
  %v417 = vld [vmem:[%s4 + $0x8] sm:$0xf]
  %v418 = vld [vmem:[%s4 + $0xc] sm:$0xff]
  %v419 = vld [vmem:[%s4 + $0x14] sm:$0xf]
  %v420 = vld [vmem:[%s4 + $0x18] sm:$0xff]
  %v421 = vld [vmem:[%s4 + $0x20] sm:$0xf]
  %v422 = vld [vmem:[%s4 + $0x24] sm:$0xff]
  %v423 = vld [vmem:[%s4 + $0x2c] sm:$0xf]
  %v424 = vld [vmem:[#allocation2] sm:$0xff]
  %v425 = vld [vmem:[#allocation2 + $0x8] sm:$0xff]
  %v426 = vld [vmem:[#allocation2 + $0x10] sm:$0xff]
  %v427 = vld [vmem:[#allocation2 + $0x18] sm:$0xff]
  %v428 = vld [vmem:[#allocation2 + $0x20] sm:$0xff]
  %v429 = vld [vmem:[#allocation2 + $0x28] sm:$0xff]
  %v430 = vld [vmem:[#allocation2 + $0x30] sm:$0xff]
  %v431 = vld [vmem:[#allocation2 + $0x38] sm:$0xff]
  %v432 = vld [vmem:[#allocation2 + $0x40] sm:$0xff]
  %v433 = vld [vmem:[#allocation2 + $0x48] sm:$0xff]
  %v434 = vld [vmem:[#allocation2 + $0x50] sm:$0xff]
  %v435 = vld [vmem:[#allocation2 + $0x58] sm:$0xff]
  %v436 = vld [vmem:[#allocation2 + $0x60] sm:$0xff]
  %v437 = vld [vmem:[#allocation2 + $0x68] sm:$0xff]
  %v438 = vld [vmem:[#allocation2 + $0x70] sm:$0xff]
  %v439 = vld [vmem:[#allocation2 + $0x78] sm:$0xff]
  %v440 = vld [vmem:[#allocation2 + $0x80] sm:$0xff]
  %v441 = vld [vmem:[#allocation2 + $0x88] sm:$0xff]
  %v442 = vld [vmem:[#allocation2 + $0x90] sm:$0xff]
  %v443 = vld [vmem:[#allocation2 + $0x98] sm:$0xff]
  %v444 = vld [vmem:[#allocation2 + $0xa0] sm:$0xff]
  %v445 = vld [vmem:[#allocation2 + $0xa8] sm:$0xff]
  %v446 = vld [vmem:[#allocation2 + $0xb0] sm:$0xff]
  %v447 = vld [vmem:[#allocation2 + $0xb8] sm:$0xff]
  %v448 = vld [vmem:[#allocation2 + $0xc0] sm:$0xff]
  %v449 = vld [vmem:[#allocation2 + $0xc8] sm:$0xff]
  %v450 = vld [vmem:[#allocation2 + $0xd0] sm:$0xff]
  %v451 = vld [vmem:[#allocation2 + $0xd8] sm:$0xff]
  %v452 = vld [vmem:[#allocation2 + $0xe0] sm:$0xff]
  %v453 = vld [vmem:[#allocation2 + $0xe8] sm:$0xff]
  %v454 = vld [vmem:[#allocation2 + $0xf0] sm:$0xff]
  %v455 = vld [vmem:[#allocation2 + $0xf8] sm:$0xff]
  %v456 = vld [vmem:[#allocation2 + $0x100] sm:$0xff]
  %v457 = vld [vmem:[#allocation2 + $0x108] sm:$0xff]
  %v458 = vld [vmem:[#allocation2 + $0x110] sm:$0xff]
  %v459 = vld [vmem:[#allocation2 + $0x118] sm:$0xff]
  %v460 = vld [vmem:[#allocation2 + $0x120] sm:$0xff]
  %v461 = vld [vmem:[#allocation2 + $0x128] sm:$0xff]
  %v462 = vld [vmem:[#allocation2 + $0x130] sm:$0xff]
  %v463 = vld [vmem:[#allocation2 + $0x138] sm:$0xff]
  %v464 = vld [vmem:[#allocation2 + $0x140] sm:$0xff]
  %v465 = vld [vmem:[#allocation2 + $0x148] sm:$0xff]
  %v466 = vld [vmem:[#allocation2 + $0x150] sm:$0xff]
  %v467 = vld [vmem:[#allocation2 + $0x158] sm:$0xff]
  %v468 = vld [vmem:[#allocation2 + $0x160] sm:$0xff]
  %v469 = vld [vmem:[#allocation2 + $0x168] sm:$0xff]
  %v470 = vld [vmem:[#allocation2 + $0x170] sm:$0xff]
  %v471 = vld [vmem:[#allocation2 + $0x178] sm:$0xff]
  %v472 = vld [vmem:[#allocation2 + $0x180] sm:$0xff]
  %v473 = vld [vmem:[#allocation2 + $0x188] sm:$0xff]
  %v474 = vld [vmem:[#allocation2 + $0x190] sm:$0xff]
  %v475 = vld [vmem:[#allocation2 + $0x198] sm:$0xff]
  %v476 = vld [vmem:[#allocation2 + $0x1a0] sm:$0xff]
  %v477 = vld [vmem:[#allocation2 + $0x1a8] sm:$0xff]
  %v478 = vld [vmem:[#allocation2 + $0x1b0] sm:$0xff]
  %v479 = vld [vmem:[#allocation2 + $0x1b8] sm:$0xff]
  %v480 = vld [vmem:[#allocation2 + $0x1c0] sm:$0xff]
  %v481 = vld [vmem:[#allocation2 + $0x1c8] sm:$0xff]
  %v482 = vld [vmem:[#allocation2 + $0x1d0] sm:$0xff]
  %v483 = vld [vmem:[#allocation2 + $0x1d8] sm:$0xff]
  %v484 = vld [vmem:[#allocation2 + $0x1e0] sm:$0xff]
  %v485 = vld [vmem:[#allocation2 + $0x1e8] sm:$0xff]
  %v486 = vld [vmem:[#allocation2 + $0x1f0] sm:$0xff]
  %v487 = vld [vmem:[#allocation2 + $0x1f8] sm:$0xff]
  %v488 = vld [vmem:[#allocation2 + $0x200] sm:$0xff]
  %v489 = vld [vmem:[#allocation2 + $0x208] sm:$0xff]
  %v490 = vld [vmem:[#allocation2 + $0x210] sm:$0xff]
  %v491 = vld [vmem:[#allocation2 + $0x218] sm:$0xff]
  %v492 = vld [vmem:[#allocation2 + $0x220] sm:$0xff]
  %v493 = vld [vmem:[#allocation2 + $0x228] sm:$0xff]
  %v494 = vld [vmem:[#allocation2 + $0x230] sm:$0xff]
  %v495 = vld [vmem:[#allocation2 + $0x238] sm:$0xff]
  %v496 = vld [vmem:[%s5] sm:$0xff]
  %v497 = vld [vmem:[%s5 + $0x8] sm:$0xff]
  %v498 = vld [vmem:[%s5 + $0x10] sm:$0xff]
  %v499 = vld [vmem:[%s5 + $0x18] sm:$0xff]
  %501 = vset.pattern.permute.xlu0 0
  %502 = vperm.xlu0 %501, %v496
  %v503 = vpop.permute.xlu0 %502
  %506 = vset.pattern.permute.xlu0 0
  %507 = vperm.xlu0 %506, %v497
  %v508 = vpop.permute.xlu0 %507
  %511 = vset.pattern.permute.xlu0 0
  %512 = vperm.xlu0 %511, %v498
  %v513 = vpop.permute.xlu0 %512
  %516 = vset.pattern.permute.xlu0 0
  %517 = vperm.xlu0 %516, %v499
  %v518 = vpop.permute.xlu0 %517
  %v528 = vunpack.c.l.b16 %v416
  %v529 = vunpack.c.h.b16 %v416
  %v530 = vunpack.c.l.b16 %v417
  %v531 = vunpack.c.l.b16 %v418
  %v532 = vunpack.c.h.b16 %v418
  %v533 = vunpack.c.l.b16 %v419
  %v534 = vunpack.c.l.b16 %v420
  %v535 = vunpack.c.h.b16 %v420
  %v536 = vunpack.c.l.b16 %v421
  %v537 = vunpack.c.l.b16 %v422
  %v538 = vunpack.c.h.b16 %v422
  %v539 = vunpack.c.l.b16 %v423
  %v540 = vpack.c.b16 %v531, %v528
  %v541 = vpack.c.b16 %v532, %v529
  %v542 = vpack.c.b16 %v533, %v530
  %v543 = vpack.c.b16 %v537, %v534
  %v544 = vpack.c.b16 %v538, %v535
  %v545 = vpack.c.b16 %v539, %v536
  %v622 = vunpack.c.l.b16 %v424
  %v623 = vunpack.c.h.b16 %v424
  %v624 = vunpack.c.l.b16 %v425
  %v625 = vunpack.c.h.b16 %v425
  %v626 = vunpack.c.l.b16 %v426
  %v627 = vunpack.c.h.b16 %v426
  %v628 = vunpack.c.l.b16 %v427
  %v629 = vunpack.c.h.b16 %v427
  %v630 = vunpack.c.l.b16 %v428
  %v631 = vunpack.c.h.b16 %v428
  %v632 = vunpack.c.l.b16 %v429
  %v633 = vunpack.c.h.b16 %v429
  %v634 = vunpack.c.l.b16 %v430
  %v635 = vunpack.c.h.b16 %v430
  %v636 = vunpack.c.l.b16 %v431
  %v637 = vunpack.c.h.b16 %v431
  %v638 = vunpack.c.l.b16 %v432
  %v639 = vunpack.c.h.b16 %v432
  %v640 = vunpack.c.l.b16 %v433
  %v641 = vunpack.c.h.b16 %v433
  %v642 = vunpack.c.l.b16 %v434
  %v643 = vunpack.c.h.b16 %v434
  %v644 = vunpack.c.l.b16 %v435
  %v645 = vunpack.c.h.b16 %v435
  %v646 = vunpack.c.l.b16 %v436
  %v647 = vunpack.c.h.b16 %v436
  %v648 = vunpack.c.l.b16 %v437
  %v649 = vunpack.c.h.b16 %v437
  %v650 = vunpack.c.l.b16 %v438
  %v651 = vunpack.c.h.b16 %v438
  %v652 = vunpack.c.l.b16 %v439
  %v653 = vunpack.c.h.b16 %v439
  %v654 = vunpack.c.l.b16 %v440
  %v655 = vunpack.c.h.b16 %v440
  %v656 = vunpack.c.l.b16 %v441
  %v657 = vunpack.c.h.b16 %v441
  %v658 = vunpack.c.l.b16 %v442
  %v659 = vunpack.c.h.b16 %v442
  %v660 = vunpack.c.l.b16 %v443
  %v661 = vunpack.c.h.b16 %v443
  %v662 = vunpack.c.l.b16 %v444
  %v663 = vunpack.c.h.b16 %v444
  %v664 = vunpack.c.l.b16 %v445
  %v665 = vunpack.c.h.b16 %v445
  %v666 = vunpack.c.l.b16 %v446
  %v667 = vunpack.c.h.b16 %v446
  %v668 = vunpack.c.l.b16 %v447
  %v669 = vunpack.c.h.b16 %v447
  %v670 = vunpack.c.l.b16 %v448
  %v671 = vunpack.c.h.b16 %v448
  %v672 = vunpack.c.l.b16 %v449
  %v673 = vunpack.c.h.b16 %v449
  %v674 = vunpack.c.l.b16 %v450
  %v675 = vunpack.c.h.b16 %v450
  %v676 = vunpack.c.l.b16 %v451
  %v677 = vunpack.c.h.b16 %v451
  %v678 = vunpack.c.l.b16 %v452
  %v679 = vunpack.c.h.b16 %v452
  %v680 = vunpack.c.l.b16 %v453
  %v681 = vunpack.c.h.b16 %v453
  %v682 = vunpack.c.l.b16 %v454
  %v683 = vunpack.c.h.b16 %v454
  %v684 = vunpack.c.l.b16 %v455
  %v685 = vunpack.c.h.b16 %v455
  %v686 = vunpack.c.l.b16 %v456
  %v687 = vunpack.c.h.b16 %v456
  %v688 = vunpack.c.l.b16 %v457
  %v689 = vunpack.c.h.b16 %v457
  %v690 = vunpack.c.l.b16 %v458
  %v691 = vunpack.c.h.b16 %v458
  %v692 = vunpack.c.l.b16 %v459
  %v693 = vunpack.c.h.b16 %v459
  %v694 = vunpack.c.l.b16 %v460
  %v695 = vunpack.c.h.b16 %v460
  %v696 = vunpack.c.l.b16 %v461
  %v697 = vunpack.c.h.b16 %v461
  %v698 = vunpack.c.l.b16 %v462
  %v699 = vunpack.c.h.b16 %v462
  %v700 = vunpack.c.l.b16 %v463
  %v701 = vunpack.c.h.b16 %v463
  %v702 = vunpack.c.l.b16 %v464
  %v703 = vunpack.c.h.b16 %v464
  %v704 = vunpack.c.l.b16 %v465
  %v705 = vunpack.c.h.b16 %v465
  %v706 = vunpack.c.l.b16 %v466
  %v707 = vunpack.c.h.b16 %v466
  %v708 = vunpack.c.l.b16 %v467
  %v709 = vunpack.c.h.b16 %v467
  %v710 = vunpack.c.l.b16 %v468
  %v711 = vunpack.c.h.b16 %v468
  %v712 = vunpack.c.l.b16 %v469
  %v713 = vunpack.c.h.b16 %v469
  %v714 = vunpack.c.l.b16 %v470
  %v715 = vunpack.c.h.b16 %v470
  %v716 = vunpack.c.l.b16 %v471
  %v717 = vunpack.c.h.b16 %v471
  %v718 = vunpack.c.l.b16 %v472
  %v719 = vunpack.c.h.b16 %v472
  %v720 = vunpack.c.l.b16 %v473
  %v721 = vunpack.c.h.b16 %v473
  %v722 = vunpack.c.l.b16 %v474
  %v723 = vunpack.c.h.b16 %v474
  %v724 = vunpack.c.l.b16 %v475
  %v725 = vunpack.c.h.b16 %v475
  %v726 = vunpack.c.l.b16 %v476
  %v727 = vunpack.c.h.b16 %v476
  %v728 = vunpack.c.l.b16 %v477
  %v729 = vunpack.c.h.b16 %v477
  %v730 = vunpack.c.l.b16 %v478
  %v731 = vunpack.c.h.b16 %v478
  %v732 = vunpack.c.l.b16 %v479
  %v733 = vunpack.c.h.b16 %v479
  %v734 = vunpack.c.l.b16 %v480
  %v735 = vunpack.c.h.b16 %v480
  %v736 = vunpack.c.l.b16 %v481
  %v737 = vunpack.c.h.b16 %v481
  %v738 = vunpack.c.l.b16 %v482
  %v739 = vunpack.c.h.b16 %v482
  %v740 = vunpack.c.l.b16 %v483
  %v741 = vunpack.c.h.b16 %v483
  %v742 = vunpack.c.l.b16 %v484
  %v743 = vunpack.c.h.b16 %v484
  %v744 = vunpack.c.l.b16 %v485
  %v745 = vunpack.c.h.b16 %v485
  %v746 = vunpack.c.l.b16 %v486
  %v747 = vunpack.c.h.b16 %v486
  %v748 = vunpack.c.l.b16 %v487
  %v749 = vunpack.c.h.b16 %v487
  %v750 = vunpack.c.l.b16 %v488
  %v751 = vunpack.c.h.b16 %v488
  %v752 = vunpack.c.l.b16 %v489
  %v753 = vunpack.c.h.b16 %v489
  %v754 = vunpack.c.l.b16 %v490
  %v755 = vunpack.c.h.b16 %v490
  %v756 = vunpack.c.l.b16 %v491
  %v757 = vunpack.c.h.b16 %v491
  %v758 = vunpack.c.l.b16 %v492
  %v759 = vunpack.c.h.b16 %v492
  %v760 = vunpack.c.l.b16 %v493
  %v761 = vunpack.c.h.b16 %v493
  %v762 = vunpack.c.l.b16 %v494
  %v763 = vunpack.c.h.b16 %v494
  %v764 = vunpack.c.l.b16 %v495
  %v765 = vunpack.c.h.b16 %v495
  %v766 = vpack.c.b16 %v626, %v622
  %v767 = vpack.c.b16 %v627, %v623
  %v768 = vpack.c.b16 %v628, %v624
  %v769 = vpack.c.b16 %v629, %v625
  %v770 = vpack.c.b16 %v634, %v630
  %v771 = vpack.c.b16 %v635, %v631
  %v772 = vpack.c.b16 %v636, %v632
  %v773 = vpack.c.b16 %v637, %v633
  %v774 = vpack.c.b16 %v642, %v638
  %v775 = vpack.c.b16 %v643, %v639
  %v776 = vpack.c.b16 %v644, %v640
  %v777 = vpack.c.b16 %v645, %v641
  %v778 = vpack.c.b16 %v650, %v646
  %v779 = vpack.c.b16 %v651, %v647
  %v780 = vpack.c.b16 %v652, %v648
  %v781 = vpack.c.b16 %v653, %v649
  %v782 = vpack.c.b16 %v658, %v654
  %v783 = vpack.c.b16 %v659, %v655
  %v784 = vpack.c.b16 %v660, %v656
  %v785 = vpack.c.b16 %v661, %v657
  %v786 = vpack.c.b16 %v666, %v662
  %v787 = vpack.c.b16 %v667, %v663
  %v788 = vpack.c.b16 %v668, %v664
  %v789 = vpack.c.b16 %v669, %v665
  %v790 = vpack.c.b16 %v674, %v670
  %v791 = vpack.c.b16 %v675, %v671
  %v792 = vpack.c.b16 %v676, %v672
  %v793 = vpack.c.b16 %v677, %v673
  %v794 = vpack.c.b16 %v682, %v678
  %v795 = vpack.c.b16 %v683, %v679
  %v796 = vpack.c.b16 %v684, %v680
  %v797 = vpack.c.b16 %v685, %v681
  %v798 = vpack.c.b16 %v690, %v686
  %v799 = vpack.c.b16 %v691, %v687
  %v800 = vpack.c.b16 %v692, %v688
  %v801 = vpack.c.b16 %v693, %v689
  %v802 = vpack.c.b16 %v698, %v694
  %v803 = vpack.c.b16 %v699, %v695
  %v804 = vpack.c.b16 %v700, %v696
  %v805 = vpack.c.b16 %v701, %v697
  %v806 = vpack.c.b16 %v706, %v702
  %v807 = vpack.c.b16 %v707, %v703
  %v808 = vpack.c.b16 %v708, %v704
  %v809 = vpack.c.b16 %v709, %v705
  %v810 = vpack.c.b16 %v714, %v710
  %v811 = vpack.c.b16 %v715, %v711
  %v812 = vpack.c.b16 %v716, %v712
  %v813 = vpack.c.b16 %v717, %v713
  %v814 = vpack.c.b16 %v722, %v718
  %v815 = vpack.c.b16 %v723, %v719
  %v816 = vpack.c.b16 %v724, %v720
  %v817 = vpack.c.b16 %v725, %v721
  %v818 = vpack.c.b16 %v730, %v726
  %v819 = vpack.c.b16 %v731, %v727
  %v820 = vpack.c.b16 %v732, %v728
  %v821 = vpack.c.b16 %v733, %v729
  %v822 = vpack.c.b16 %v738, %v734
  %v823 = vpack.c.b16 %v739, %v735
  %v824 = vpack.c.b16 %v740, %v736
  %v825 = vpack.c.b16 %v741, %v737
  %v826 = vpack.c.b16 %v746, %v742
  %v827 = vpack.c.b16 %v747, %v743
  %v828 = vpack.c.b16 %v748, %v744
  %v829 = vpack.c.b16 %v749, %v745
  %v830 = vpack.c.b16 %v754, %v750
  %v831 = vpack.c.b16 %v755, %v751
  %v832 = vpack.c.b16 %v756, %v752
  %v833 = vpack.c.b16 %v757, %v753
  %v834 = vpack.c.b16 %v762, %v758
  %v835 = vpack.c.b16 %v763, %v759
  %v836 = vpack.c.b16 %v764, %v760
  %v837 = vpack.c.b16 %v765, %v761
  %vm910 = vcmask 261120
  %v912 = vsel %vm910, %v542, 0
  %v915 = vsel %vm910, %v545, 0
  %917 = vmatpush.bf16.msra.mxu0 %v794
  %918 = vmatpush.bf16.msra.mxu0 %v790
  %919 = vmatpush.bf16.msra.mxu0 %v786
  %920 = vmatpush.bf16.msra.mxu0 %v782
  %921 = vmatpush.bf16.msra.mxu0 %v778
  %922 = vmatpush.bf16.msra.mxu0 %v774
  %923 = vmatpush.bf16.msra.mxu0 %v770
  %924 = vmatpush.bf16.msra.mxu0 %v766
  %925 = vmatmul.bf16.gmra.mxu0 %v540
  %v926 = vpop.f32.mrf.mxu0
  %v927 = vadd.f32 %v503, %v926
  %v928 = vpop.f32.mrf.mxu0
  %v929 = vadd.f32 %v508, %v928
  %930 = vmatmul.bf16.gmra.mxu0 %v543
  %v931 = vpop.f32.mrf.mxu0
  %v932 = vadd.f32 %v513, %v931
  %v933 = vpop.f32.mrf.mxu0
  %v934 = vadd.f32 %v518, %v933
  %935 = vdwg.mxu0
  %936 = vmatpush.bf16.msra.mxu0 %v826
  %937 = vmatpush.bf16.msra.mxu0 %v822
  %938 = vmatpush.bf16.msra.mxu0 %v818
  %939 = vmatpush.bf16.msra.mxu0 %v814
  %940 = vmatpush.bf16.msra.mxu0 %v810
  %941 = vmatpush.bf16.msra.mxu0 %v806
  %942 = vmatpush.bf16.msra.mxu0 %v802
  %943 = vmatpush.bf16.msra.mxu0 %v798
  %944 = vmatmul.bf16.gmra.mxu0 %v541
  %v945 = vpop.f32.mrf.mxu0
  %v946 = vadd.f32 %v927, %v945
  %v947 = vpop.f32.mrf.mxu0
  %v948 = vadd.f32 %v929, %v947
  %949 = vmatmul.bf16.gmra.mxu0 %v544
  %v950 = vpop.f32.mrf.mxu0
  %v951 = vadd.f32 %v932, %v950
  %v952 = vpop.f32.mrf.mxu0
  %v953 = vadd.f32 %v934, %v952
  %954 = vdwg.mxu0
  %955 = vmatpush.bf16.msra.mxu0 0
  %956 = vmatpush.bf16.msra.mxu0 0
  %957 = vmatpush.bf16.msra.mxu0 0
  %958 = vmatpush.bf16.msra.mxu0 0
  %959 = vmatpush.bf16.msra.mxu0 0
  %960 = vmatpush.bf16.msra.mxu0 0
  %961 = vmatpush.bf16.msra.mxu0 %v834
  %962 = vmatpush.bf16.msra.mxu0 %v830
  %963 = vmatmul.bf16.gmra.mxu0 %v912
  %v964 = vpop.f32.mrf.mxu0
  %v965 = vadd.f32 %v946, %v964
  %v966 = vpop.f32.mrf.mxu0
  %v967 = vadd.f32 %v948, %v966
  %968 = vmatmul.bf16.gmra.mxu0 %v915
  %v969 = vpop.f32.mrf.mxu0
  %v970 = vadd.f32 %v951, %v969
  %v971 = vpop.f32.mrf.mxu0
  %v972 = vadd.f32 %v953, %v971
  %973 = vdwg.mxu0
  %974 = vmatpush.bf16.msra.mxu0 %v795
  %975 = vmatpush.bf16.msra.mxu0 %v791
  %976 = vmatpush.bf16.msra.mxu0 %v787
  %977 = vmatpush.bf16.msra.mxu0 %v783
  %978 = vmatpush.bf16.msra.mxu0 %v779
  %979 = vmatpush.bf16.msra.mxu0 %v775
  %980 = vmatpush.bf16.msra.mxu0 %v771
  %981 = vmatpush.bf16.msra.mxu0 %v767
  %982 = vmatmul.bf16.gmra.mxu0 %v540
  %v983 = vpop.f32.mrf.mxu0
  %v984 = vadd.f32 %v503, %v983
  %v985 = vpop.f32.mrf.mxu0
  %v986 = vadd.f32 %v508, %v985
  %987 = vmatmul.bf16.gmra.mxu0 %v543
  %v988 = vpop.f32.mrf.mxu0
  %v989 = vadd.f32 %v513, %v988
  %v990 = vpop.f32.mrf.mxu0
  %v991 = vadd.f32 %v518, %v990
  %992 = vdwg.mxu0
  %993 = vmatpush.bf16.msra.mxu0 %v827
  %994 = vmatpush.bf16.msra.mxu0 %v823
  %995 = vmatpush.bf16.msra.mxu0 %v819
  %996 = vmatpush.bf16.msra.mxu0 %v815
  %997 = vmatpush.bf16.msra.mxu0 %v811
  %998 = vmatpush.bf16.msra.mxu0 %v807
  %999 = vmatpush.bf16.msra.mxu0 %v803
  %1000 = vmatpush.bf16.msra.mxu0 %v799
  %1001 = vmatmul.bf16.gmra.mxu0 %v541
  %v1002 = vpop.f32.mrf.mxu0
  %v1003 = vadd.f32 %v984, %v1002
  %v1004 = vpop.f32.mrf.mxu0
  %v1005 = vadd.f32 %v986, %v1004
  %1006 = vmatmul.bf16.gmra.mxu0 %v544
  %v1007 = vpop.f32.mrf.mxu0
  %v1008 = vadd.f32 %v989, %v1007
  %v1009 = vpop.f32.mrf.mxu0
  %v1010 = vadd.f32 %v991, %v1009
  %1011 = vdwg.mxu0
  %1012 = vmatpush.bf16.msra.mxu0 0
  %1013 = vmatpush.bf16.msra.mxu0 0
  %1014 = vmatpush.bf16.msra.mxu0 0
  %1015 = vmatpush.bf16.msra.mxu0 0
  %1016 = vmatpush.bf16.msra.mxu0 0
  %1017 = vmatpush.bf16.msra.mxu0 0
  %1018 = vmatpush.bf16.msra.mxu0 %v835
  %1019 = vmatpush.bf16.msra.mxu0 %v831
  %1020 = vmatmul.bf16.gmra.mxu0 %v912
  %v1021 = vpop.f32.mrf.mxu0
  %v1022 = vadd.f32 %v1003, %v1021
  %v1023 = vpop.f32.mrf.mxu0
  %v1024 = vadd.f32 %v1005, %v1023
  %1025 = vmatmul.bf16.gmra.mxu0 %v915
  %v1026 = vpop.f32.mrf.mxu0
  %v1027 = vadd.f32 %v1008, %v1026
  %v1028 = vpop.f32.mrf.mxu0
  %v1029 = vadd.f32 %v1010, %v1028
  %1030 = vdwg.mxu0
  %1031 = vmatpush.bf16.msra.mxu0 %v796
  %1032 = vmatpush.bf16.msra.mxu0 %v792
  %1033 = vmatpush.bf16.msra.mxu0 %v788
  %1034 = vmatpush.bf16.msra.mxu0 %v784
  %1035 = vmatpush.bf16.msra.mxu0 %v780
  %1036 = vmatpush.bf16.msra.mxu0 %v776
  %1037 = vmatpush.bf16.msra.mxu0 %v772
  %1038 = vmatpush.bf16.msra.mxu0 %v768
  %1039 = vmatmul.bf16.gmra.mxu0 %v540
  %v1040 = vpop.f32.mrf.mxu0
  %v1041 = vadd.f32 %v503, %v1040
  %v1042 = vpop.f32.mrf.mxu0
  %v1043 = vadd.f32 %v508, %v1042
  %1044 = vmatmul.bf16.gmra.mxu0 %v543
  %v1045 = vpop.f32.mrf.mxu0
  %v1046 = vadd.f32 %v513, %v1045
  %v1047 = vpop.f32.mrf.mxu0
  %v1048 = vadd.f32 %v518, %v1047
  %1049 = vdwg.mxu0
  %1050 = vmatpush.bf16.msra.mxu0 %v828
  %1051 = vmatpush.bf16.msra.mxu0 %v824
  %1052 = vmatpush.bf16.msra.mxu0 %v820
  %1053 = vmatpush.bf16.msra.mxu0 %v816
  %1054 = vmatpush.bf16.msra.mxu0 %v812
  %1055 = vmatpush.bf16.msra.mxu0 %v808
  %1056 = vmatpush.bf16.msra.mxu0 %v804
  %1057 = vmatpush.bf16.msra.mxu0 %v800
  %1058 = vmatmul.bf16.gmra.mxu0 %v541
  %v1059 = vpop.f32.mrf.mxu0
  %v1060 = vadd.f32 %v1041, %v1059
  %v1061 = vpop.f32.mrf.mxu0
  %v1062 = vadd.f32 %v1043, %v1061
  %1063 = vmatmul.bf16.gmra.mxu0 %v544
  %v1064 = vpop.f32.mrf.mxu0
  %v1065 = vadd.f32 %v1046, %v1064
  %v1066 = vpop.f32.mrf.mxu0
  %v1067 = vadd.f32 %v1048, %v1066
  %1068 = vdwg.mxu0
  %1069 = vmatpush.bf16.msra.mxu0 0
  %1070 = vmatpush.bf16.msra.mxu0 0
  %1071 = vmatpush.bf16.msra.mxu0 0
  %1072 = vmatpush.bf16.msra.mxu0 0
  %1073 = vmatpush.bf16.msra.mxu0 0
  %1074 = vmatpush.bf16.msra.mxu0 0
  %1075 = vmatpush.bf16.msra.mxu0 %v836
  %1076 = vmatpush.bf16.msra.mxu0 %v832
  %1077 = vmatmul.bf16.gmra.mxu0 %v912
  %v1078 = vpop.f32.mrf.mxu0
  %v1079 = vadd.f32 %v1060, %v1078
  %v1080 = vpop.f32.mrf.mxu0
  %v1081 = vadd.f32 %v1062, %v1080
  %1082 = vmatmul.bf16.gmra.mxu0 %v915
  %v1083 = vpop.f32.mrf.mxu0
  %v1084 = vadd.f32 %v1065, %v1083
  %v1085 = vpop.f32.mrf.mxu0
  %v1086 = vadd.f32 %v1067, %v1085
  %1087 = vdwg.mxu0
  %1088 = vmatpush.bf16.msra.mxu0 %v797
  %1089 = vmatpush.bf16.msra.mxu0 %v793
  %1090 = vmatpush.bf16.msra.mxu0 %v789
  %1091 = vmatpush.bf16.msra.mxu0 %v785
  %1092 = vmatpush.bf16.msra.mxu0 %v781
  %1093 = vmatpush.bf16.msra.mxu0 %v777
  %1094 = vmatpush.bf16.msra.mxu0 %v773
  %1095 = vmatpush.bf16.msra.mxu0 %v769
  %1096 = vmatmul.bf16.gmra.mxu0 %v540
  %v1097 = vpop.f32.mrf.mxu0
  %v1098 = vadd.f32 %v503, %v1097
  %v1099 = vpop.f32.mrf.mxu0
  %v1100 = vadd.f32 %v508, %v1099
  %1101 = vmatmul.bf16.gmra.mxu0 %v543
  %v1102 = vpop.f32.mrf.mxu0
  %v1103 = vadd.f32 %v513, %v1102
  %v1104 = vpop.f32.mrf.mxu0
  %v1105 = vadd.f32 %v518, %v1104
  %1106 = vdwg.mxu0
  %1107 = vmatpush.bf16.msra.mxu0 %v829
  %1108 = vmatpush.bf16.msra.mxu0 %v825
  %1109 = vmatpush.bf16.msra.mxu0 %v821
  %1110 = vmatpush.bf16.msra.mxu0 %v817
  %1111 = vmatpush.bf16.msra.mxu0 %v813
  %1112 = vmatpush.bf16.msra.mxu0 %v809
  %1113 = vmatpush.bf16.msra.mxu0 %v805
  %1114 = vmatpush.bf16.msra.mxu0 %v801
  %1115 = vmatmul.bf16.gmra.mxu0 %v541
  %v1116 = vpop.f32.mrf.mxu0
  %v1117 = vadd.f32 %v1098, %v1116
  %v1118 = vpop.f32.mrf.mxu0
  %v1119 = vadd.f32 %v1100, %v1118
  %1120 = vmatmul.bf16.gmra.mxu0 %v544
  %v1121 = vpop.f32.mrf.mxu0
  %v1122 = vadd.f32 %v1103, %v1121
  %v1123 = vpop.f32.mrf.mxu0
  %v1124 = vadd.f32 %v1105, %v1123
  %1125 = vdwg.mxu0
  %1126 = vmatpush.bf16.msra.mxu0 0
  %1127 = vmatpush.bf16.msra.mxu0 0
  %1128 = vmatpush.bf16.msra.mxu0 0
  %1129 = vmatpush.bf16.msra.mxu0 0
  %1130 = vmatpush.bf16.msra.mxu0 0
  %1131 = vmatpush.bf16.msra.mxu0 0
  %1132 = vmatpush.bf16.msra.mxu0 %v837
  %1133 = vmatpush.bf16.msra.mxu0 %v833
  %1134 = vmatmul.bf16.gmra.mxu0 %v912
  %v1135 = vpop.f32.mrf.mxu0
  %v1136 = vadd.f32 %v1117, %v1135
  %v1137 = vpop.f32.mrf.mxu0
  %v1138 = vadd.f32 %v1119, %v1137
  %1139 = vmatmul.bf16.gmra.mxu0 %v915
  %v1140 = vpop.f32.mrf.mxu0
  %v1141 = vadd.f32 %v1122, %v1140
  %v1142 = vpop.f32.mrf.mxu0
  %v1143 = vadd.f32 %v1124, %v1142
  %1144 = vdwg.mxu0
  %v1145 = vadd.f32 %v965, %v1022
  %v1146 = vadd.f32 %v1145, %v1079
  %v1147 = vadd.f32 %v1146, %v1136
  %1148 = vadd.xlane.f32.xlu0 %v1147
  %v1149 = vpop.xlane.xlu0 %1148
  %v1150 = vadd.f32 %v967, %v1024
  %v1151 = vadd.f32 %v1150, %v1081
  %v1152 = vadd.f32 %v1151, %v1138
  %1153 = vadd.xlane.f32.xlu0 %v1152
  %v1154 = vpop.xlane.xlu0 %1153
  %v1155 = vmul.f32 %v1149, 0.001953125
  %v1156 = vmul.f32 %v1154, 0.001953125
  %v1157 = vadd.f32 %v970, %v1027
  %v1158 = vadd.f32 %v1157, %v1084
  %v1159 = vadd.f32 %v1158, %v1141
  %1160 = vadd.xlane.f32.xlu0 %v1159
  %v1161 = vpop.xlane.xlu0 %1160
  %v1162 = vadd.f32 %v972, %v1029
  %v1163 = vadd.f32 %v1162, %v1086
  %v1164 = vadd.f32 %v1163, %v1143
  %1165 = vadd.xlane.f32.xlu0 %v1164
  %v1166 = vpop.xlane.xlu0 %1165
  %v1167 = vmul.f32 %v1161, 0.001953125
  %v1168 = vmul.f32 %v1166, 0.001953125
  %v1169 = vmul.f32 %v965, %v965
  %v1170 = vmul.f32 %v1022, %v1022
  %v1171 = vmul.f32 %v1079, %v1079
  %v1172 = vmul.f32 %v1136, %v1136
  %v1173 = vmul.f32 %v967, %v967
  %v1174 = vmul.f32 %v1024, %v1024
  %v1175 = vmul.f32 %v1081, %v1081
  %v1176 = vmul.f32 %v1138, %v1138
  %v1177 = vadd.f32 %v1169, %v1170
  %v1178 = vadd.f32 %v1177, %v1171
  %v1179 = vadd.f32 %v1178, %v1172
  %1180 = vadd.xlane.f32.xlu0 %v1179
  %v1181 = vpop.xlane.xlu0 %1180
  %v1182 = vadd.f32 %v1173, %v1174
  %v1183 = vadd.f32 %v1182, %v1175
  %v1184 = vadd.f32 %v1183, %v1176
  %1185 = vadd.xlane.f32.xlu0 %v1184
  %v1186 = vpop.xlane.xlu0 %1185
  %v1187 = vmul.f32 %v1181, 0.001953125
  %v1188 = vmul.f32 %v1186, 0.001953125
  %v1189 = vmul.f32 %v1155, %v1155
  %v1190 = vmul.f32 %v1156, %v1156
  %v1191 = vsub.f32 %v1187, %v1189
  %v1192 = vsub.f32 %v1188, %v1190
  %v1193 = vadd.f32 %v1191, 1e-05
  %v1194 = vadd.f32 %v1192, 1e-05
  %v1195 = vmul.f32 %v970, %v970
  %v1196 = vmul.f32 %v1027, %v1027
  %v1197 = vmul.f32 %v1084, %v1084
  %v1198 = vmul.f32 %v1141, %v1141
  %v1199 = vmul.f32 %v972, %v972
  %v1200 = vmul.f32 %v1029, %v1029
  %v1201 = vmul.f32 %v1086, %v1086
  %v1202 = vmul.f32 %v1143, %v1143
  %v1203 = vadd.f32 %v1195, %v1196
  %v1204 = vadd.f32 %v1203, %v1197
  %v1205 = vadd.f32 %v1204, %v1198
  %1206 = vadd.xlane.f32.xlu0 %v1205
  %v1207 = vpop.xlane.xlu0 %1206
  %v1208 = vadd.f32 %v1199, %v1200
  %v1209 = vadd.f32 %v1208, %v1201
  %v1210 = vadd.f32 %v1209, %v1202
  %1211 = vadd.xlane.f32.xlu0 %v1210
  %v1212 = vpop.xlane.xlu0 %1211
  %v1213 = vmul.f32 %v1207, 0.001953125
  %v1214 = vmul.f32 %v1212, 0.001953125
  %v1215 = vmul.f32 %v1167, %v1167
  %v1216 = vmul.f32 %v1168, %v1168
  %v1217 = vsub.f32 %v1213, %v1215
  %v1218 = vsub.f32 %v1214, %v1216
  %v1219 = vadd.f32 %v1217, 1e-05
  %v1220 = vadd.f32 %v1218, 1e-05
  %v1221 = vmul.f32 %v965, %v970
  %v1222 = vmul.f32 %v1022, %v1027
  %v1223 = vmul.f32 %v1079, %v1084
  %v1224 = vmul.f32 %v1136, %v1141
  %v1225 = vmul.f32 %v967, %v972
  %v1226 = vmul.f32 %v1024, %v1029
  %v1227 = vmul.f32 %v1081, %v1086
  %v1228 = vmul.f32 %v1138, %v1143
  %v1229 = vadd.f32 %v1221, %v1222
  %v1230 = vadd.f32 %v1229, %v1223
  %v1231 = vadd.f32 %v1230, %v1224
  %1232 = vadd.xlane.f32.xlu0 %v1231
  %v1233 = vpop.xlane.xlu0 %1232
  %v1234 = vadd.f32 %v1225, %v1226
  %v1235 = vadd.f32 %v1234, %v1227
  %v1236 = vadd.f32 %v1235, %v1228
  %1237 = vadd.xlane.f32.xlu0 %v1236
  %v1238 = vpop.xlane.xlu0 %1237
  %v1239 = vmul.f32 %v1233, 0.001953125
  %v1240 = vmul.f32 %v1238, 0.001953125
  %v1241 = vmul.f32 %v1155, %v1167
  %v1242 = vmul.f32 %v1156, %v1168
  %v1243 = vsub.f32 %v1239, %v1241
  %v1244 = vsub.f32 %v1240, %v1242
  %v1245 = vmul.f32 %v1193, %v1219
  %v1246 = vmul.f32 %v1194, %v1220
  %v1247 = vmul.f32 %v1243, %v1243
  %v1248 = vmul.f32 %v1244, %v1244
  %v1249 = vsub.f32 %v1245, %v1247
  %v1250 = vsub.f32 %v1246, %v1248
  %v1251 = vrsqrt.pop %v1249
  %v1252 = vmul.f32 %v1251, %v1249
  %v1253 = vmul.f32 %v1252, %v1251
  %v1254 = vmul.f32 0.5, %v1253
  %v1255 = vsub.f32 1.5, %v1254
  %v1256 = vmul.f32 %v1251, %v1255
  %v1257 = vmul.f32 %v1249, %v1256
  %vm1258 = vcmp.eq.f32.partialorder %v1249, inf
  %v1259 = vsel %vm1258, %v1249, %v1257
  %vm1260 = vcmp.eq.f32.partialorder %v1249, 0.0
  %v1261 = vand.u32 %v1249, 2147483648
  %v1262 = vsel %vm1260, %v1261, %v1259
  %v1263 = vrsqrt.pop %v1250
  %v1264 = vmul.f32 %v1263, %v1250
  %v1265 = vmul.f32 %v1264, %v1263
  %v1266 = vmul.f32 0.5, %v1265
  %v1267 = vsub.f32 1.5, %v1266
  %v1268 = vmul.f32 %v1263, %v1267
  %v1269 = vmul.f32 %v1250, %v1268
  %vm1270 = vcmp.eq.f32.partialorder %v1250, inf
  %v1271 = vsel %vm1270, %v1250, %v1269
  %vm1272 = vcmp.eq.f32.partialorder %v1250, 0.0
  %v1273 = vand.u32 %v1250, 2147483648
  %v1274 = vsel %vm1272, %v1273, %v1271
  %v1275 = vadd.f32 %v1193, %v1219
  %v1276 = vadd.f32 %v1194, %v1220
  %v1277 = vmul.f32 %v1262, 2.0
  %v1278 = vmul.f32 %v1274, 2.0
  %v1279 = vadd.f32 %v1275, %v1277
  %v1280 = vadd.f32 %v1276, %v1278
  %v1281 = vrsqrt.pop %v1279
  %v1282 = vmul.f32 %v1281, %v1279
  %v1283 = vmul.f32 %v1282, %v1281
  %v1284 = vmul.f32 0.5, %v1283
  %v1285 = vsub.f32 1.5, %v1284
  %v1286 = vmul.f32 %v1281, %v1285
  %v1287 = vmul.f32 %v1279, %v1286
  %vm1288 = vcmp.eq.f32.partialorder %v1279, inf
  %v1289 = vsel %vm1288, %v1279, %v1287
  %vm1290 = vcmp.eq.f32.partialorder %v1279, 0.0
  %v1291 = vand.u32 %v1279, 2147483648
  %v1292 = vsel %vm1290, %v1291, %v1289
  %v1293 = vrsqrt.pop %v1280
  %v1294 = vmul.f32 %v1293, %v1280
  %v1295 = vmul.f32 %v1294, %v1293
  %v1296 = vmul.f32 0.5, %v1295
  %v1297 = vsub.f32 1.5, %v1296
  %v1298 = vmul.f32 %v1293, %v1297
  %v1299 = vmul.f32 %v1280, %v1298
  %vm1300 = vcmp.eq.f32.partialorder %v1280, inf
  %v1301 = vsel %vm1300, %v1280, %v1299
  %vm1302 = vcmp.eq.f32.partialorder %v1280, 0.0
  %v1303 = vand.u32 %v1280, 2147483648
  %v1304 = vsel %vm1302, %v1303, %v1301
  %v1305 = vmul.f32 %v1262, %v1292
  %v1306 = vmul.f32 %v1274, %v1304
  %v1307 = vrcp.pop %v1305
  %v1308 = vmul.f32 %v1305, %v1307
  %v1309 = vsub.f32 1.0, %v1308
  %v1310 = vmul.f32 %v1307, %v1309
  %v1311 = vadd.f32 %v1307, %v1310
  %vm1312 = vweird.f32 %v1305
  %vm1313 = vweird.f32 %v1307
  %vm1314 = vmor %vm1312, %vm1313
  %v1315 = vsel %vm1314, %v1307, %v1311
  %v1316 = vand.u32 2147483647, %v1305
  %vm1317 = vcmp.eq.f32.partialorder %v1316, 8.507059e+37
  %v1318 = vand.u32 %v1305, 2147483648
  %v1319 = vor.u32 1.1754944e-38, %v1318
  %v1320 = vsel %vm1317, %v1319, %v1315
  %v1321 = vmul.f32 1.0, %v1320
  %v1322 = vrcp.pop %v1306
  %v1323 = vmul.f32 %v1306, %v1322
  %v1324 = vsub.f32 1.0, %v1323
  %v1325 = vmul.f32 %v1322, %v1324
  %v1326 = vadd.f32 %v1322, %v1325
  %vm1327 = vweird.f32 %v1306
  %vm1328 = vweird.f32 %v1322
  %vm1329 = vmor %vm1327, %vm1328
  %v1330 = vsel %vm1329, %v1322, %v1326
  %v1331 = vand.u32 2147483647, %v1306
  %vm1332 = vcmp.eq.f32.partialorder %v1331, 8.507059e+37
  %v1333 = vand.u32 %v1306, 2147483648
  %v1334 = vor.u32 1.1754944e-38, %v1333
  %v1335 = vsel %vm1332, %v1334, %v1330
  %v1336 = vmul.f32 1.0, %v1335
  %v1337 = vadd.f32 %v1219, %v1262
  %v1338 = vadd.f32 %v1220, %v1274
  %v1339 = vmul.f32 %v1337, %v1321
  %v1340 = vmul.f32 %v1338, %v1336
  %v1341 = vadd.f32 %v1193, %v1262
  %v1342 = vadd.f32 %v1194, %v1274
  %v1343 = vmul.f32 %v1341, %v1321
  %v1344 = vmul.f32 %v1342, %v1336
  %v1345 = vsub.f32 0.0, %v1243
  %v1346 = vsub.f32 0.0, %v1244
  %v1347 = vmul.f32 %v1345, %v1321
  %v1348 = vmul.f32 %v1346, %v1336
  %v1349 = vld [vmem:[%s6] sm:$0xff]
  %v1350 = vld [vmem:[%s6 + $0x8] sm:$0xff]
  %v1351 = vmul.f32 %v1349, %v1339
  %v1352 = vmul.f32 %v1350, %v1340
  %v1353 = vmul.f32 %v1349, %v1347
  %v1354 = vmul.f32 %v1350, %v1348
  %1357 = vrot.lane.b32.xlu0 %v1353, 126
  %v1358 = vpop.permute.xlu0 %1357
  %1359 = vrot.lane.b32.xlu0 %v1354, 126
  %v1360 = vpop.permute.xlu0 %1359
  %v1363 = vadd.f32 %v1351, %v1358
  %v1364 = vadd.f32 %v1352, %v1360
  %v1365 = vmul.f32 %v1349, %v1343
  %v1366 = vmul.f32 %v1350, %v1344
  %1369 = vrot.lane.b32.xlu0 %v1365, 126
  %v1370 = vpop.permute.xlu0 %1369
  %1371 = vrot.lane.b32.xlu0 %v1366, 126
  %v1372 = vpop.permute.xlu0 %1371
  %v1375 = vadd.f32 %v1353, %v1370
  %v1376 = vadd.f32 %v1354, %v1372
  %1377 = vrot.lane.b32.xlu0 %v1353, 1
  %v1378 = vpop.permute.xlu0 %1377
  %1379 = vrot.lane.b32.xlu0 %v1354, 1
  %v1380 = vpop.permute.xlu0 %1379
  %v1383 = vadd.f32 %v1351, %v1378
  %v1384 = vadd.f32 %v1352, %v1380
  %1385 = vrot.lane.b32.xlu0 %v1365, 1
  %v1386 = vpop.permute.xlu0 %1385
  %1387 = vrot.lane.b32.xlu0 %v1366, 1
  %v1388 = vpop.permute.xlu0 %1387
  %v1391 = vadd.f32 %v1353, %v1386
  %v1392 = vadd.f32 %v1354, %v1388
  %v1393 = vmul.f32 %v1363, %v1155
  %v1394 = vmul.f32 %v1364, %v1156
  %1397 = vrot.lane.b32.xlu0 %v1393, 3
  %v1398 = vpop.permute.xlu0 %1397
  %1399 = vrot.lane.b32.xlu0 %v1394, 3
  %v1400 = vpop.permute.xlu0 %1399
  %v1403 = vsub.f32 %v1349, %v1398
  %v1404 = vsub.f32 %v1350, %v1400
  %v1405 = vmul.f32 %v1375, %v1167
  %v1406 = vmul.f32 %v1376, %v1168
  %1409 = vrot.lane.b32.xlu0 %v1405, 3
  %v1410 = vpop.permute.xlu0 %1409
  %1411 = vrot.lane.b32.xlu0 %v1406, 3
  %v1412 = vpop.permute.xlu0 %1411
  %v1415 = vsub.f32 %v1403, %v1410
  %v1416 = vsub.f32 %v1404, %v1412
  %v1417 = vmul.f32 %v1383, %v1155
  %v1418 = vmul.f32 %v1384, %v1156
  %1421 = vrot.lane.b32.xlu0 %v1417, 2
  %v1422 = vpop.permute.xlu0 %1421
  %1423 = vrot.lane.b32.xlu0 %v1418, 2
  %v1424 = vpop.permute.xlu0 %1423
  %v1427 = vsub.f32 %v1349, %v1422
  %v1428 = vsub.f32 %v1350, %v1424
  %v1429 = vmul.f32 %v1391, %v1167
  %v1430 = vmul.f32 %v1392, %v1168
  %1433 = vrot.lane.b32.xlu0 %v1429, 2
  %v1434 = vpop.permute.xlu0 %1433
  %1435 = vrot.lane.b32.xlu0 %v1430, 2
  %v1436 = vpop.permute.xlu0 %1435
  %v1439 = vsub.f32 %v1427, %v1434
  %v1440 = vsub.f32 %v1428, %v1436
  %1442 = vset.pattern.permute.xlu0 0
  %1443 = vperm.xlu0 %1442, %v1363
  %v1444 = vpop.permute.xlu0 %1443
  %1447 = vset.pattern.permute.xlu0 0
  %1448 = vperm.xlu0 %1447, %v1364
  %v1449 = vpop.permute.xlu0 %1448
  %v1451 = vmul.f32 %v1444, %v965
  %v1452 = vmul.f32 %v1444, %v1022
  %v1453 = vmul.f32 %v1444, %v1079
  %v1454 = vmul.f32 %v1444, %v1136
  %v1455 = vmul.f32 %v1449, %v967
  %v1456 = vmul.f32 %v1449, %v1024
  %v1457 = vmul.f32 %v1449, %v1081
  %v1458 = vmul.f32 %v1449, %v1138
  %1460 = vset.pattern.permute.xlu0 0
  %1461 = vperm.xlu0 %1460, %v1375
  %v1462 = vpop.permute.xlu0 %1461
  %1465 = vset.pattern.permute.xlu0 0
  %1466 = vperm.xlu0 %1465, %v1376
  %v1467 = vpop.permute.xlu0 %1466
  %v1469 = vmul.f32 %v1462, %v970
  %v1470 = vmul.f32 %v1462, %v1027
  %v1471 = vmul.f32 %v1462, %v1084
  %v1472 = vmul.f32 %v1462, %v1141
  %v1473 = vmul.f32 %v1467, %v972
  %v1474 = vmul.f32 %v1467, %v1029
  %v1475 = vmul.f32 %v1467, %v1086
  %v1476 = vmul.f32 %v1467, %v1143
  %v1477 = vadd.f32 %v1451, %v1469
  %v1478 = vadd.f32 %v1452, %v1470
  %v1479 = vadd.f32 %v1453, %v1471
  %v1480 = vadd.f32 %v1454, %v1472
  %v1481 = vadd.f32 %v1455, %v1473
  %v1482 = vadd.f32 %v1456, %v1474
  %v1483 = vadd.f32 %v1457, %v1475
  %v1484 = vadd.f32 %v1458, %v1476
  %1486 = vset.pattern.permute.xlu0 3
  %1487 = vperm.xlu0 %1486, %v1415
  %v1488 = vpop.permute.xlu0 %1487
  %1491 = vset.pattern.permute.xlu0 3
  %1492 = vperm.xlu0 %1491, %v1416
  %v1493 = vpop.permute.xlu0 %1492
  %v1495 = vadd.f32 %v1477, %v1488
  %v1496 = vadd.f32 %v1478, %v1488
  %v1497 = vadd.f32 %v1479, %v1488
  %v1498 = vadd.f32 %v1480, %v1488
  %v1499 = vadd.f32 %v1481, %v1493
  %v1500 = vadd.f32 %v1482, %v1493
  %v1501 = vadd.f32 %v1483, %v1493
  %v1502 = vadd.f32 %v1484, %v1493
  %v1503 = vmax.f32 %v1495, 0.0
  %v1504 = vmax.f32 %v1496, 0.0
  %v1505 = vmax.f32 %v1497, 0.0
  %v1506 = vmax.f32 %v1498, 0.0
  %v1507 = vmax.f32 %v1499, 0.0
  %v1508 = vmax.f32 %v1500, 0.0
  %v1509 = vmax.f32 %v1501, 0.0
  %v1510 = vmax.f32 %v1502, 0.0
  %1512 = vset.pattern.permute.xlu0 2
  %1513 = vperm.xlu0 %1512, %v1383
  %v1514 = vpop.permute.xlu0 %1513
  %1517 = vset.pattern.permute.xlu0 2
  %1518 = vperm.xlu0 %1517, %v1384
  %v1519 = vpop.permute.xlu0 %1518
  %v1521 = vmul.f32 %v1514, %v965
  %v1522 = vmul.f32 %v1514, %v1022
  %v1523 = vmul.f32 %v1514, %v1079
  %v1524 = vmul.f32 %v1514, %v1136
  %v1525 = vmul.f32 %v1519, %v967
  %v1526 = vmul.f32 %v1519, %v1024
  %v1527 = vmul.f32 %v1519, %v1081
  %v1528 = vmul.f32 %v1519, %v1138
  %1530 = vset.pattern.permute.xlu0 2
  %1531 = vperm.xlu0 %1530, %v1391
  %v1532 = vpop.permute.xlu0 %1531
  %1535 = vset.pattern.permute.xlu0 2
  %1536 = vperm.xlu0 %1535, %v1392
  %v1537 = vpop.permute.xlu0 %1536
  %v1539 = vmul.f32 %v1532, %v970
  %v1540 = vmul.f32 %v1532, %v1027
  %v1541 = vmul.f32 %v1532, %v1084
  %v1542 = vmul.f32 %v1532, %v1141
  %v1543 = vmul.f32 %v1537, %v972
  %v1544 = vmul.f32 %v1537, %v1029
  %v1545 = vmul.f32 %v1537, %v1086
  %v1546 = vmul.f32 %v1537, %v1143
  %v1547 = vadd.f32 %v1521, %v1539
  %v1548 = vadd.f32 %v1522, %v1540
  %v1549 = vadd.f32 %v1523, %v1541
  %v1550 = vadd.f32 %v1524, %v1542
  %v1551 = vadd.f32 %v1525, %v1543
  %v1552 = vadd.f32 %v1526, %v1544
  %v1553 = vadd.f32 %v1527, %v1545
  %v1554 = vadd.f32 %v1528, %v1546
  %1556 = vset.pattern.permute.xlu0 4
  %1557 = vperm.xlu0 %1556, %v1439
  %v1558 = vpop.permute.xlu0 %1557
  %1561 = vset.pattern.permute.xlu0 4
  %1562 = vperm.xlu0 %1561, %v1440
  %v1563 = vpop.permute.xlu0 %1562
  %v1565 = vadd.f32 %v1547, %v1558
  %v1566 = vadd.f32 %v1548, %v1558
  %v1567 = vadd.f32 %v1549, %v1558
  %v1568 = vadd.f32 %v1550, %v1558
  %v1569 = vadd.f32 %v1551, %v1563
  %v1570 = vadd.f32 %v1552, %v1563
  %v1571 = vadd.f32 %v1553, %v1563
  %v1572 = vadd.f32 %v1554, %v1563
  %v1573 = vmax.f32 %v1565, 0.0
  %v1574 = vmax.f32 %v1566, 0.0
  %v1575 = vmax.f32 %v1567, 0.0
  %v1576 = vmax.f32 %v1568, 0.0
  %v1577 = vmax.f32 %v1569, 0.0
  %v1578 = vmax.f32 %v1570, 0.0
  %v1579 = vmax.f32 %v1571, 0.0
  %v1580 = vmax.f32 %v1572, 0.0
  %1581 = vrot.lane.b32.xlu0 %v1506, 9
  %v1582 = vpop.permute.xlu0 %1581
  %1583 = vrot.lane.b32.xlu0 %v1510, 9
  %v1584 = vpop.permute.xlu0 %1583
  %1585 = vrot.lane.b32.xlu0 %v1576, 9
  %v1586 = vpop.permute.xlu0 %1585
  %1587 = vrot.lane.b32.xlu0 %v1580, 9
  %v1588 = vpop.permute.xlu0 %1587
  %v1589 = vmul.f32 %v1582, %v40
  %v1590 = vmul.f32 %v1584, %v40
  %v1591 = vmul.f32 %v1586, %v40
  %v1592 = vmul.f32 %v1588, %v40
  %v1593 = vpack.c.bf16 %v1589, %v1589
  %v1594 = vpack.c.bf16 %v1590, %v1590
  %v1595 = vpack.c.bf16 %v1591, %v1591
  %v1596 = vpack.c.bf16 %v1592, %v1592
  %1597 = vst [vmem:[#allocation2] sm:$0xf] %v1593
  %1598 = vst [vmem:[#allocation2 + $0x10] sm:$0xf] %v1594
  %1599 = vst [vmem:[#allocation2 + $0x120] sm:$0xf] %v1595
  %1600 = vst [vmem:[#allocation2 + $0x130] sm:$0xf] %v1596
  %1601 = vrot.lane.b32.xlu0 %v1505, 8
  %v1602 = vpop.permute.xlu0 %1601
  %1603 = vrot.lane.b32.xlu0 %v1509, 8
  %v1604 = vpop.permute.xlu0 %1603
  %1605 = vrot.lane.b32.xlu0 %v1575, 8
  %v1606 = vpop.permute.xlu0 %1605
  %1607 = vrot.lane.b32.xlu0 %v1579, 8
  %v1608 = vpop.permute.xlu0 %1607
  %v1609 = vmul.f32 %v1602, %v41
  %v1610 = vmul.f32 %v1604, %v41
  %v1611 = vmul.f32 %v1606, %v41
  %v1612 = vmul.f32 %v1608, %v41
  %v1613 = vpack.c.bf16 %v1609, %v1609
  %v1614 = vpack.c.bf16 %v1610, %v1610
  %v1615 = vpack.c.bf16 %v1611, %v1611
  %v1616 = vpack.c.bf16 %v1612, %v1612
  %1617 = vst [vmem:[#allocation2 + $0x4] sm:$0xf] %v1613
  %1618 = vst [vmem:[#allocation2 + $0x14] sm:$0xf] %v1614
  %1619 = vst [vmem:[#allocation2 + $0x124] sm:$0xf] %v1615
  %1620 = vst [vmem:[#allocation2 + $0x134] sm:$0xf] %v1616
  %1621 = vst [vmem:[#allocation2 + $0x20] sm:$0xf] %v1613
  %1622 = vst [vmem:[#allocation2 + $0x30] sm:$0xf] %v1614
  %1623 = vst [vmem:[#allocation2 + $0x140] sm:$0xf] %v1615
  %1624 = vst [vmem:[#allocation2 + $0x150] sm:$0xf] %v1616
  %1625 = vrot.lane.b32.xlu0 %v1504, 1
  %v1626 = vpop.permute.xlu0 %1625
  %1627 = vrot.lane.b32.xlu0 %v1508, 1
  %v1628 = vpop.permute.xlu0 %1627
  %1629 = vrot.lane.b32.xlu0 %v1574, 1
  %v1630 = vpop.permute.xlu0 %1629
  %1631 = vrot.lane.b32.xlu0 %v1578, 1
  %v1632 = vpop.permute.xlu0 %1631
  %v1633 = vmul.f32 %v1626, %v42
  %v1634 = vmul.f32 %v1628, %v42
  %v1635 = vmul.f32 %v1630, %v42
  %v1636 = vmul.f32 %v1632, %v42
  %v1637 = vpack.c.bf16 %v1633, %v1633
  %v1638 = vpack.c.bf16 %v1634, %v1634
  %v1639 = vpack.c.bf16 %v1635, %v1635
  %v1640 = vpack.c.bf16 %v1636, %v1636
  %1641 = vst [vmem:[#allocation2 + $0x8] sm:$0xf] %v1637
  %1642 = vst [vmem:[#allocation2 + $0x18] sm:$0xf] %v1638
  %1643 = vst [vmem:[#allocation2 + $0x128] sm:$0xf] %v1639
  %1644 = vst [vmem:[#allocation2 + $0x138] sm:$0xf] %v1640
  %1645 = vst [vmem:[#allocation2 + $0x60] sm:$0xf] %v1637
  %1646 = vst [vmem:[#allocation2 + $0x70] sm:$0xf] %v1638
  %1647 = vst [vmem:[#allocation2 + $0x180] sm:$0xf] %v1639
  %1648 = vst [vmem:[#allocation2 + $0x190] sm:$0xf] %v1640
  %v1649 = vpack.c.bf16 %v1503, %v1503
  %v1650 = vpack.c.bf16 %v1507, %v1507
  %v1651 = vpack.c.bf16 %v1573, %v1573
  %v1652 = vpack.c.bf16 %v1577, %v1577
  %1653 = vst [vmem:[#allocation2 + $0xc] sm:$0xf] %v1649
  %1654 = vst [vmem:[#allocation2 + $0x1c] sm:$0xf] %v1650
  %1655 = vst [vmem:[#allocation2 + $0x12c] sm:$0xf] %v1651
  %1656 = vst [vmem:[#allocation2 + $0x13c] sm:$0xf] %v1652
  %1657 = vst [vmem:[#allocation2 + $0x28] sm:$0xf] %v1649
  %1658 = vst [vmem:[#allocation2 + $0x38] sm:$0xf] %v1650
  %1659 = vst [vmem:[#allocation2 + $0x148] sm:$0xf] %v1651
  %1660 = vst [vmem:[#allocation2 + $0x158] sm:$0xf] %v1652
  %1661 = vst [vmem:[#allocation2 + $0x64] sm:$0xf] %v1649
  %1662 = vst [vmem:[#allocation2 + $0x74] sm:$0xf] %v1650
  %1663 = vst [vmem:[#allocation2 + $0x184] sm:$0xf] %v1651
  %1664 = vst [vmem:[#allocation2 + $0x194] sm:$0xf] %v1652
  %1665 = vst [vmem:[#allocation2 + $0x80] sm:$0xf] %v1649
  %1666 = vst [vmem:[#allocation2 + $0x90] sm:$0xf] %v1650
  %1667 = vst [vmem:[#allocation2 + $0x1a0] sm:$0xf] %v1651
  %1668 = vst [vmem:[#allocation2 + $0x1b0] sm:$0xf] %v1652
  %1669 = vrot.lane.b32.xlu0 %v1506, 8
  %v1670 = vpop.permute.xlu0 %1669
  %1671 = vrot.lane.b32.xlu0 %v1510, 8
  %v1672 = vpop.permute.xlu0 %1671
  %1673 = vrot.lane.b32.xlu0 %v1576, 8
  %v1674 = vpop.permute.xlu0 %1673
  %1675 = vrot.lane.b32.xlu0 %v1580, 8
  %v1676 = vpop.permute.xlu0 %1675
  %v1677 = vmul.f32 %v1670, %v41
  %v1678 = vmul.f32 %v1672, %v41
  %v1679 = vmul.f32 %v1674, %v41
  %v1680 = vmul.f32 %v1676, %v41
  %v1681 = vpack.c.bf16 %v1677, %v1677
  %v1682 = vpack.c.bf16 %v1678, %v1678
  %v1683 = vpack.c.bf16 %v1679, %v1679
  %v1684 = vpack.c.bf16 %v1680, %v1680
  %1685 = vst [vmem:[#allocation2 + $0x24] sm:$0xf] %v1681
  %1686 = vst [vmem:[#allocation2 + $0x34] sm:$0xf] %v1682
  %1687 = vst [vmem:[#allocation2 + $0x144] sm:$0xf] %v1683
  %1688 = vst [vmem:[#allocation2 + $0x154] sm:$0xf] %v1684
  %1689 = vst [vmem:[#allocation2 + $0x40] sm:$0xf] %v1681
  %1690 = vst [vmem:[#allocation2 + $0x50] sm:$0xf] %v1682
  %1691 = vst [vmem:[#allocation2 + $0x160] sm:$0xf] %v1683
  %1692 = vst [vmem:[#allocation2 + $0x170] sm:$0xf] %v1684
  %v1693 = vpack.c.bf16 %v1504, %v1504
  %v1694 = vpack.c.bf16 %v1508, %v1508
  %v1695 = vpack.c.bf16 %v1574, %v1574
  %v1696 = vpack.c.bf16 %v1578, %v1578
  %1697 = vst [vmem:[#allocation2 + $0x2c] sm:$0xf] %v1693
  %1698 = vst [vmem:[#allocation2 + $0x3c] sm:$0xf] %v1694
  %1699 = vst [vmem:[#allocation2 + $0x14c] sm:$0xf] %v1695
  %1700 = vst [vmem:[#allocation2 + $0x15c] sm:$0xf] %v1696
  %1701 = vst [vmem:[#allocation2 + $0x48] sm:$0xf] %v1693
  %1702 = vst [vmem:[#allocation2 + $0x58] sm:$0xf] %v1694
  %1703 = vst [vmem:[#allocation2 + $0x168] sm:$0xf] %v1695
  %1704 = vst [vmem:[#allocation2 + $0x178] sm:$0xf] %v1696
  %1705 = vst [vmem:[#allocation2 + $0x84] sm:$0xf] %v1693
  %1706 = vst [vmem:[#allocation2 + $0x94] sm:$0xf] %v1694
  %1707 = vst [vmem:[#allocation2 + $0x1a4] sm:$0xf] %v1695
  %1708 = vst [vmem:[#allocation2 + $0x1b4] sm:$0xf] %v1696
  %1709 = vst [vmem:[#allocation2 + $0xa0] sm:$0xf] %v1693
  %1710 = vst [vmem:[#allocation2 + $0xb0] sm:$0xf] %v1694
  %1711 = vst [vmem:[#allocation2 + $0x1c0] sm:$0xf] %v1695
  %1712 = vst [vmem:[#allocation2 + $0x1d0] sm:$0xf] %v1696
  %1713 = vrot.lane.b32.xlu0 %v1505, 7
  %v1714 = vpop.permute.xlu0 %1713
  %1715 = vrot.lane.b32.xlu0 %v1509, 7
  %v1716 = vpop.permute.xlu0 %1715
  %1717 = vrot.lane.b32.xlu0 %v1575, 7
  %v1718 = vpop.permute.xlu0 %1717
  %1719 = vrot.lane.b32.xlu0 %v1579, 7
  %v1720 = vpop.permute.xlu0 %1719
  %v1721 = vmul.f32 %v1714, %v43
  %v1722 = vmul.f32 %v1716, %v43
  %v1723 = vmul.f32 %v1718, %v43
  %v1724 = vmul.f32 %v1720, %v43
  %v1725 = vpack.c.bf16 %v1721, %v1721
  %v1726 = vpack.c.bf16 %v1722, %v1722
  %v1727 = vpack.c.bf16 %v1723, %v1723
  %v1728 = vpack.c.bf16 %v1724, %v1724
  %1729 = vst [vmem:[#allocation2 + $0x44] sm:$0xf] %v1725
  %1730 = vst [vmem:[#allocation2 + $0x54] sm:$0xf] %v1726
  %1731 = vst [vmem:[#allocation2 + $0x164] sm:$0xf] %v1727
  %1732 = vst [vmem:[#allocation2 + $0x174] sm:$0xf] %v1728
  %1733 = vrot.lane.b32.xlu0 %v1503, 127
  %v1734 = vpop.permute.xlu0 %1733
  %1735 = vrot.lane.b32.xlu0 %v1507, 127
  %v1736 = vpop.permute.xlu0 %1735
  %1737 = vrot.lane.b32.xlu0 %v1573, 127
  %v1738 = vpop.permute.xlu0 %1737
  %1739 = vrot.lane.b32.xlu0 %v1577, 127
  %v1740 = vpop.permute.xlu0 %1739
  %v1741 = vmul.f32 %v1734, %v44
  %v1742 = vmul.f32 %v1736, %v44
  %v1743 = vmul.f32 %v1738, %v44
  %v1744 = vmul.f32 %v1740, %v44
  %v1745 = vpack.c.bf16 %v1741, %v1741
  %v1746 = vpack.c.bf16 %v1742, %v1742
  %v1747 = vpack.c.bf16 %v1743, %v1743
  %v1748 = vpack.c.bf16 %v1744, %v1744
  %1749 = vst [vmem:[#allocation2 + $0x4c] sm:$0xf] %v1745
  %1750 = vst [vmem:[#allocation2 + $0x5c] sm:$0xf] %v1746
  %1751 = vst [vmem:[#allocation2 + $0x16c] sm:$0xf] %v1747
  %1752 = vst [vmem:[#allocation2 + $0x17c] sm:$0xf] %v1748
  %1753 = vst [vmem:[#allocation2 + $0xa4] sm:$0xf] %v1745
  %1754 = vst [vmem:[#allocation2 + $0xb4] sm:$0xf] %v1746
  %1755 = vst [vmem:[#allocation2 + $0x1c4] sm:$0xf] %v1747
  %1756 = vst [vmem:[#allocation2 + $0x1d4] sm:$0xf] %v1748
  %1757 = vrot.lane.b32.xlu0 %v1506, 1
  %v1758 = vpop.permute.xlu0 %1757
  %1759 = vrot.lane.b32.xlu0 %v1510, 1
  %v1760 = vpop.permute.xlu0 %1759
  %1761 = vrot.lane.b32.xlu0 %v1576, 1
  %v1762 = vpop.permute.xlu0 %1761
  %1763 = vrot.lane.b32.xlu0 %v1580, 1
  %v1764 = vpop.permute.xlu0 %1763
  %v1765 = vmul.f32 %v1758, %v42
  %v1766 = vmul.f32 %v1760, %v42
  %v1767 = vmul.f32 %v1762, %v42
  %v1768 = vmul.f32 %v1764, %v42
  %v1769 = vpack.c.bf16 %v1765, %v1765
  %v1770 = vpack.c.bf16 %v1766, %v1766
  %v1771 = vpack.c.bf16 %v1767, %v1767
  %v1772 = vpack.c.bf16 %v1768, %v1768
  %1773 = vst [vmem:[#allocation2 + $0x68] sm:$0xf] %v1769
  %1774 = vst [vmem:[#allocation2 + $0x78] sm:$0xf] %v1770
  %1775 = vst [vmem:[#allocation2 + $0x188] sm:$0xf] %v1771
  %1776 = vst [vmem:[#allocation2 + $0x198] sm:$0xf] %v1772
  %1777 = vst [vmem:[#allocation2 + $0xc0] sm:$0xf] %v1769
  %1778 = vst [vmem:[#allocation2 + $0xd0] sm:$0xf] %v1770
  %1779 = vst [vmem:[#allocation2 + $0x1e0] sm:$0xf] %v1771
  %1780 = vst [vmem:[#allocation2 + $0x1f0] sm:$0xf] %v1772
  %v1781 = vpack.c.bf16 %v1505, %v1505
  %v1782 = vpack.c.bf16 %v1509, %v1509
  %v1783 = vpack.c.bf16 %v1575, %v1575
  %v1784 = vpack.c.bf16 %v1579, %v1579
  %1785 = vst [vmem:[#allocation2 + $0x6c] sm:$0xf] %v1781
  %1786 = vst [vmem:[#allocation2 + $0x7c] sm:$0xf] %v1782
  %1787 = vst [vmem:[#allocation2 + $0x18c] sm:$0xf] %v1783
  %1788 = vst [vmem:[#allocation2 + $0x19c] sm:$0xf] %v1784
  %1789 = vst [vmem:[#allocation2 + $0x88] sm:$0xf] %v1781
  %1790 = vst [vmem:[#allocation2 + $0x98] sm:$0xf] %v1782
  %1791 = vst [vmem:[#allocation2 + $0x1a8] sm:$0xf] %v1783
  %1792 = vst [vmem:[#allocation2 + $0x1b8] sm:$0xf] %v1784
  %1793 = vst [vmem:[#allocation2 + $0xc4] sm:$0xf] %v1781
  %1794 = vst [vmem:[#allocation2 + $0xd4] sm:$0xf] %v1782
  %1795 = vst [vmem:[#allocation2 + $0x1e4] sm:$0xf] %v1783
  %1796 = vst [vmem:[#allocation2 + $0x1f4] sm:$0xf] %v1784
  %1797 = vst [vmem:[#allocation2 + $0xe0] sm:$0xf] %v1781
  %1798 = vst [vmem:[#allocation2 + $0xf0] sm:$0xf] %v1782
  %1799 = vst [vmem:[#allocation2 + $0x200] sm:$0xf] %v1783
  %1800 = vst [vmem:[#allocation2 + $0x210] sm:$0xf] %v1784
  %v1801 = vpack.c.bf16 %v1506, %v1506
  %v1802 = vpack.c.bf16 %v1510, %v1510
  %v1803 = vpack.c.bf16 %v1576, %v1576
  %v1804 = vpack.c.bf16 %v1580, %v1580
  %1805 = vst [vmem:[#allocation2 + $0x8c] sm:$0xf] %v1801
  %1806 = vst [vmem:[#allocation2 + $0x9c] sm:$0xf] %v1802
  %1807 = vst [vmem:[#allocation2 + $0x1ac] sm:$0xf] %v1803
  %1808 = vst [vmem:[#allocation2 + $0x1bc] sm:$0xf] %v1804
  %1809 = vst [vmem:[#allocation2 + $0xa8] sm:$0xf] %v1801
  %1810 = vst [vmem:[#allocation2 + $0xb8] sm:$0xf] %v1802
  %1811 = vst [vmem:[#allocation2 + $0x1c8] sm:$0xf] %v1803
  %1812 = vst [vmem:[#allocation2 + $0x1d8] sm:$0xf] %v1804
  %1813 = vst [vmem:[#allocation2 + $0xe4] sm:$0xf] %v1801
  %1814 = vst [vmem:[#allocation2 + $0xf4] sm:$0xf] %v1802
  %1815 = vst [vmem:[#allocation2 + $0x204] sm:$0xf] %v1803
  %1816 = vst [vmem:[#allocation2 + $0x214] sm:$0xf] %v1804
  %1817 = vst [vmem:[#allocation2 + $0x100] sm:$0xf] %v1801
  %1818 = vst [vmem:[#allocation2 + $0x110] sm:$0xf] %v1802
  %1819 = vst [vmem:[#allocation2 + $0x220] sm:$0xf] %v1803
  %1820 = vst [vmem:[#allocation2 + $0x230] sm:$0xf] %v1804
  %1821 = vrot.lane.b32.xlu0 %v1505, 127
  %v1822 = vpop.permute.xlu0 %1821
  %1823 = vrot.lane.b32.xlu0 %v1509, 127
  %v1824 = vpop.permute.xlu0 %1823
  %1825 = vrot.lane.b32.xlu0 %v1575, 127
  %v1826 = vpop.permute.xlu0 %1825
  %1827 = vrot.lane.b32.xlu0 %v1579, 127
  %v1828 = vpop.permute.xlu0 %1827
  %v1829 = vmul.f32 %v1822, %v44
  %v1830 = vmul.f32 %v1824, %v44
  %v1831 = vmul.f32 %v1826, %v44
  %v1832 = vmul.f32 %v1828, %v44
  %v1833 = vpack.c.bf16 %v1829, %v1829
  %v1834 = vpack.c.bf16 %v1830, %v1830
  %v1835 = vpack.c.bf16 %v1831, %v1831
  %v1836 = vpack.c.bf16 %v1832, %v1832
  %1837 = vst [vmem:[#allocation2 + $0xac] sm:$0xf] %v1833
  %1838 = vst [vmem:[#allocation2 + $0xbc] sm:$0xf] %v1834
  %1839 = vst [vmem:[#allocation2 + $0x1cc] sm:$0xf] %v1835
  %1840 = vst [vmem:[#allocation2 + $0x1dc] sm:$0xf] %v1836
  %1841 = vst [vmem:[#allocation2 + $0x104] sm:$0xf] %v1833
  %1842 = vst [vmem:[#allocation2 + $0x114] sm:$0xf] %v1834
  %1843 = vst [vmem:[#allocation2 + $0x224] sm:$0xf] %v1835
  %1844 = vst [vmem:[#allocation2 + $0x234] sm:$0xf] %v1836
  %1845 = vrot.lane.b32.xlu0 %v1504, 121
  %v1846 = vpop.permute.xlu0 %1845
  %1847 = vrot.lane.b32.xlu0 %v1508, 121
  %v1848 = vpop.permute.xlu0 %1847
  %1849 = vrot.lane.b32.xlu0 %v1574, 121
  %v1850 = vpop.permute.xlu0 %1849
  %1851 = vrot.lane.b32.xlu0 %v1578, 121
  %v1852 = vpop.permute.xlu0 %1851
  %v1853 = vmul.f32 %v1846, %v45
  %v1854 = vmul.f32 %v1848, %v45
  %v1855 = vmul.f32 %v1850, %v45
  %v1856 = vmul.f32 %v1852, %v45
  %v1857 = vpack.c.bf16 %v1853, %v1853
  %v1858 = vpack.c.bf16 %v1854, %v1854
  %v1859 = vpack.c.bf16 %v1855, %v1855
  %v1860 = vpack.c.bf16 %v1856, %v1856
  %1861 = vst [vmem:[#allocation2 + $0xc8] sm:$0xf] %v1857
  %1862 = vst [vmem:[#allocation2 + $0xd8] sm:$0xf] %v1858
  %1863 = vst [vmem:[#allocation2 + $0x1e8] sm:$0xf] %v1859
  %1864 = vst [vmem:[#allocation2 + $0x1f8] sm:$0xf] %v1860
  %1865 = vrot.lane.b32.xlu0 %v1503, 120
  %v1866 = vpop.permute.xlu0 %1865
  %1867 = vrot.lane.b32.xlu0 %v1507, 120
  %v1868 = vpop.permute.xlu0 %1867
  %1869 = vrot.lane.b32.xlu0 %v1573, 120
  %v1870 = vpop.permute.xlu0 %1869
  %1871 = vrot.lane.b32.xlu0 %v1577, 120
  %v1872 = vpop.permute.xlu0 %1871
  %v1873 = vmul.f32 %v1866, %v46
  %v1874 = vmul.f32 %v1868, %v46
  %v1875 = vmul.f32 %v1870, %v46
  %v1876 = vmul.f32 %v1872, %v46
  %v1877 = vpack.c.bf16 %v1873, %v1873
  %v1878 = vpack.c.bf16 %v1874, %v1874
  %v1879 = vpack.c.bf16 %v1875, %v1875
  %v1880 = vpack.c.bf16 %v1876, %v1876
  %1881 = vst [vmem:[#allocation2 + $0xcc] sm:$0xf] %v1877
  %1882 = vst [vmem:[#allocation2 + $0xdc] sm:$0xf] %v1878
  %1883 = vst [vmem:[#allocation2 + $0x1ec] sm:$0xf] %v1879
  %1884 = vst [vmem:[#allocation2 + $0x1fc] sm:$0xf] %v1880
  %1885 = vst [vmem:[#allocation2 + $0xe8] sm:$0xf] %v1877
  %1886 = vst [vmem:[#allocation2 + $0xf8] sm:$0xf] %v1878
  %1887 = vst [vmem:[#allocation2 + $0x208] sm:$0xf] %v1879
  %1888 = vst [vmem:[#allocation2 + $0x218] sm:$0xf] %v1880
  %1889 = vrot.lane.b32.xlu0 %v1504, 120
  %v1890 = vpop.permute.xlu0 %1889
  %1891 = vrot.lane.b32.xlu0 %v1508, 120
  %v1892 = vpop.permute.xlu0 %1891
  %1893 = vrot.lane.b32.xlu0 %v1574, 120
  %v1894 = vpop.permute.xlu0 %1893
  %1895 = vrot.lane.b32.xlu0 %v1578, 120
  %v1896 = vpop.permute.xlu0 %1895
  %v1897 = vmul.f32 %v1890, %v46
  %v1898 = vmul.f32 %v1892, %v46
  %v1899 = vmul.f32 %v1894, %v46
  %v1900 = vmul.f32 %v1896, %v46
  %v1901 = vpack.c.bf16 %v1897, %v1897
  %v1902 = vpack.c.bf16 %v1898, %v1898
  %v1903 = vpack.c.bf16 %v1899, %v1899
  %v1904 = vpack.c.bf16 %v1900, %v1900
  %1905 = vst [vmem:[#allocation2 + $0xec] sm:$0xf] %v1901
  %1906 = vst [vmem:[#allocation2 + $0xfc] sm:$0xf] %v1902
  %1907 = vst [vmem:[#allocation2 + $0x20c] sm:$0xf] %v1903
  %1908 = vst [vmem:[#allocation2 + $0x21c] sm:$0xf] %v1904
  %1909 = vst [vmem:[#allocation2 + $0x108] sm:$0xf] %v1901
  %1910 = vst [vmem:[#allocation2 + $0x118] sm:$0xf] %v1902
  %1911 = vst [vmem:[#allocation2 + $0x228] sm:$0xf] %v1903
  %1912 = vst [vmem:[#allocation2 + $0x238] sm:$0xf] %v1904
  %1913 = vrot.lane.b32.xlu0 %v1503, 119
  %v1914 = vpop.permute.xlu0 %1913
  %1915 = vrot.lane.b32.xlu0 %v1507, 119
  %v1916 = vpop.permute.xlu0 %1915
  %1917 = vrot.lane.b32.xlu0 %v1573, 119
  %v1918 = vpop.permute.xlu0 %1917
  %1919 = vrot.lane.b32.xlu0 %v1577, 119
  %v1920 = vpop.permute.xlu0 %1919
  %v1921 = vmul.f32 %v1914, %v47
  %v1922 = vmul.f32 %v1916, %v47
  %v1923 = vmul.f32 %v1918, %v47
  %v1924 = vmul.f32 %v1920, %v47
  %v1925 = vpack.c.bf16 %v1921, %v1921
  %v1926 = vpack.c.bf16 %v1922, %v1922
  %v1927 = vpack.c.bf16 %v1923, %v1923
  %v1928 = vpack.c.bf16 %v1924, %v1924
  %1929 = vst [vmem:[#allocation2 + $0x10c] sm:$0xf] %v1925
  %1930 = vst [vmem:[#allocation2 + $0x11c] sm:$0xf] %v1926
  %1931 = vst [vmem:[#allocation2 + $0x22c] sm:$0xf] %v1927
  %1932 = vst [vmem:[#allocation2 + $0x23c] sm:$0xf] %v1928
  %v1933 = vld [vmem:[%s7] sm:$0xff]
  %v1934 = vld [vmem:[%s7 + $0x8] sm:$0xf]
  %v1935 = vld [vmem:[%s7 + $0xc] sm:$0xff]
  %v1936 = vld [vmem:[%s7 + $0x14] sm:$0xf]
  %v1937 = vld [vmem:[%s7 + $0x18] sm:$0xff]
  %v1938 = vld [vmem:[%s7 + $0x20] sm:$0xf]
  %v1939 = vld [vmem:[%s7 + $0x24] sm:$0xff]
  %v1940 = vld [vmem:[%s7 + $0x2c] sm:$0xf]
  %v1941 = vld [vmem:[#allocation2] sm:$0xff]
  %v1942 = vld [vmem:[#allocation2 + $0x8] sm:$0xff]
  %v1943 = vld [vmem:[#allocation2 + $0x10] sm:$0xff]
  %v1944 = vld [vmem:[#allocation2 + $0x18] sm:$0xff]
  %v1945 = vld [vmem:[#allocation2 + $0x20] sm:$0xff]
  %v1946 = vld [vmem:[#allocation2 + $0x28] sm:$0xff]
  %v1947 = vld [vmem:[#allocation2 + $0x30] sm:$0xff]
  %v1948 = vld [vmem:[#allocation2 + $0x38] sm:$0xff]
  %v1949 = vld [vmem:[#allocation2 + $0x40] sm:$0xff]
  %v1950 = vld [vmem:[#allocation2 + $0x48] sm:$0xff]
  %v1951 = vld [vmem:[#allocation2 + $0x50] sm:$0xff]
  %v1952 = vld [vmem:[#allocation2 + $0x58] sm:$0xff]
  %v1953 = vld [vmem:[#allocation2 + $0x60] sm:$0xff]
  %v1954 = vld [vmem:[#allocation2 + $0x68] sm:$0xff]
  %v1955 = vld [vmem:[#allocation2 + $0x70] sm:$0xff]
  %v1956 = vld [vmem:[#allocation2 + $0x78] sm:$0xff]
  %v1957 = vld [vmem:[#allocation2 + $0x80] sm:$0xff]
  %v1958 = vld [vmem:[#allocation2 + $0x88] sm:$0xff]
  %v1959 = vld [vmem:[#allocation2 + $0x90] sm:$0xff]
  %v1960 = vld [vmem:[#allocation2 + $0x98] sm:$0xff]
  %v1961 = vld [vmem:[#allocation2 + $0xa0] sm:$0xff]
  %v1962 = vld [vmem:[#allocation2 + $0xa8] sm:$0xff]
  %v1963 = vld [vmem:[#allocation2 + $0xb0] sm:$0xff]
  %v1964 = vld [vmem:[#allocation2 + $0xb8] sm:$0xff]
  %v1965 = vld [vmem:[#allocation2 + $0xc0] sm:$0xff]
  %v1966 = vld [vmem:[#allocation2 + $0xc8] sm:$0xff]
  %v1967 = vld [vmem:[#allocation2 + $0xd0] sm:$0xff]
  %v1968 = vld [vmem:[#allocation2 + $0xd8] sm:$0xff]
  %v1969 = vld [vmem:[#allocation2 + $0xe0] sm:$0xff]
  %v1970 = vld [vmem:[#allocation2 + $0xe8] sm:$0xff]
  %v1971 = vld [vmem:[#allocation2 + $0xf0] sm:$0xff]
  %v1972 = vld [vmem:[#allocation2 + $0xf8] sm:$0xff]
  %v1973 = vld [vmem:[#allocation2 + $0x100] sm:$0xff]
  %v1974 = vld [vmem:[#allocation2 + $0x108] sm:$0xff]
  %v1975 = vld [vmem:[#allocation2 + $0x110] sm:$0xff]
  %v1976 = vld [vmem:[#allocation2 + $0x118] sm:$0xff]
  %v1977 = vld [vmem:[#allocation2 + $0x120] sm:$0xff]
  %v1978 = vld [vmem:[#allocation2 + $0x128] sm:$0xff]
  %v1979 = vld [vmem:[#allocation2 + $0x130] sm:$0xff]
  %v1980 = vld [vmem:[#allocation2 + $0x138] sm:$0xff]
  %v1981 = vld [vmem:[#allocation2 + $0x140] sm:$0xff]
  %v1982 = vld [vmem:[#allocation2 + $0x148] sm:$0xff]
  %v1983 = vld [vmem:[#allocation2 + $0x150] sm:$0xff]
  %v1984 = vld [vmem:[#allocation2 + $0x158] sm:$0xff]
  %v1985 = vld [vmem:[#allocation2 + $0x160] sm:$0xff]
  %v1986 = vld [vmem:[#allocation2 + $0x168] sm:$0xff]
  %v1987 = vld [vmem:[#allocation2 + $0x170] sm:$0xff]
  %v1988 = vld [vmem:[#allocation2 + $0x178] sm:$0xff]
  %v1989 = vld [vmem:[#allocation2 + $0x180] sm:$0xff]
  %v1990 = vld [vmem:[#allocation2 + $0x188] sm:$0xff]
  %v1991 = vld [vmem:[#allocation2 + $0x190] sm:$0xff]
  %v1992 = vld [vmem:[#allocation2 + $0x198] sm:$0xff]
  %v1993 = vld [vmem:[#allocation2 + $0x1a0] sm:$0xff]
  %v1994 = vld [vmem:[#allocation2 + $0x1a8] sm:$0xff]
  %v1995 = vld [vmem:[#allocation2 + $0x1b0] sm:$0xff]
  %v1996 = vld [vmem:[#allocation2 + $0x1b8] sm:$0xff]
  %v1997 = vld [vmem:[#allocation2 + $0x1c0] sm:$0xff]
  %v1998 = vld [vmem:[#allocation2 + $0x1c8] sm:$0xff]
  %v1999 = vld [vmem:[#allocation2 + $0x1d0] sm:$0xff]
  %v2000 = vld [vmem:[#allocation2 + $0x1d8] sm:$0xff]
  %v2001 = vld [vmem:[#allocation2 + $0x1e0] sm:$0xff]
  %v2002 = vld [vmem:[#allocation2 + $0x1e8] sm:$0xff]
  %v2003 = vld [vmem:[#allocation2 + $0x1f0] sm:$0xff]
  %v2004 = vld [vmem:[#allocation2 + $0x1f8] sm:$0xff]
  %v2005 = vld [vmem:[#allocation2 + $0x200] sm:$0xff]
  %v2006 = vld [vmem:[#allocation2 + $0x208] sm:$0xff]
  %v2007 = vld [vmem:[#allocation2 + $0x210] sm:$0xff]
  %v2008 = vld [vmem:[#allocation2 + $0x218] sm:$0xff]
  %v2009 = vld [vmem:[#allocation2 + $0x220] sm:$0xff]
  %v2010 = vld [vmem:[#allocation2 + $0x228] sm:$0xff]
  %v2011 = vld [vmem:[#allocation2 + $0x230] sm:$0xff]
  %v2012 = vld [vmem:[#allocation2 + $0x238] sm:$0xff]
  %v2013 = vld [vmem:[%s8] sm:$0xff]
  %v2014 = vld [vmem:[%s8 + $0x8] sm:$0xff]
  %v2015 = vld [vmem:[%s8 + $0x10] sm:$0xff]
  %v2016 = vld [vmem:[%s8 + $0x18] sm:$0xff]
  %2018 = vset.pattern.permute.xlu0 0
  %2019 = vperm.xlu0 %2018, %v2013
  %v2020 = vpop.permute.xlu0 %2019
  %2023 = vset.pattern.permute.xlu0 0
  %2024 = vperm.xlu0 %2023, %v2014
  %v2025 = vpop.permute.xlu0 %2024
  %2028 = vset.pattern.permute.xlu0 0
  %2029 = vperm.xlu0 %2028, %v2015
  %v2030 = vpop.permute.xlu0 %2029
  %2033 = vset.pattern.permute.xlu0 0
  %2034 = vperm.xlu0 %2033, %v2016
  %v2035 = vpop.permute.xlu0 %2034
  %v2045 = vunpack.c.l.b16 %v1933
  %v2046 = vunpack.c.h.b16 %v1933
  %v2047 = vunpack.c.l.b16 %v1934
  %v2048 = vunpack.c.l.b16 %v1935
  %v2049 = vunpack.c.h.b16 %v1935
  %v2050 = vunpack.c.l.b16 %v1936
  %v2051 = vunpack.c.l.b16 %v1937
  %v2052 = vunpack.c.h.b16 %v1937
  %v2053 = vunpack.c.l.b16 %v1938
  %v2054 = vunpack.c.l.b16 %v1939
  %v2055 = vunpack.c.h.b16 %v1939
  %v2056 = vunpack.c.l.b16 %v1940
  %v2057 = vpack.c.b16 %v2048, %v2045
  %v2058 = vpack.c.b16 %v2049, %v2046
  %v2059 = vpack.c.b16 %v2050, %v2047
  %v2060 = vpack.c.b16 %v2054, %v2051
  %v2061 = vpack.c.b16 %v2055, %v2052
  %v2062 = vpack.c.b16 %v2056, %v2053
  %v2139 = vunpack.c.l.b16 %v1941
  %v2140 = vunpack.c.h.b16 %v1941
  %v2141 = vunpack.c.l.b16 %v1942
  %v2142 = vunpack.c.h.b16 %v1942
  %v2143 = vunpack.c.l.b16 %v1943
  %v2144 = vunpack.c.h.b16 %v1943
  %v2145 = vunpack.c.l.b16 %v1944
  %v2146 = vunpack.c.h.b16 %v1944
  %v2147 = vunpack.c.l.b16 %v1945
  %v2148 = vunpack.c.h.b16 %v1945
  %v2149 = vunpack.c.l.b16 %v1946
  %v2150 = vunpack.c.h.b16 %v1946
  %v2151 = vunpack.c.l.b16 %v1947
  %v2152 = vunpack.c.h.b16 %v1947
  %v2153 = vunpack.c.l.b16 %v1948
  %v2154 = vunpack.c.h.b16 %v1948
  %v2155 = vunpack.c.l.b16 %v1949
  %v2156 = vunpack.c.h.b16 %v1949
  %v2157 = vunpack.c.l.b16 %v1950
  %v2158 = vunpack.c.h.b16 %v1950
  %v2159 = vunpack.c.l.b16 %v1951
  %v2160 = vunpack.c.h.b16 %v1951
  %v2161 = vunpack.c.l.b16 %v1952
  %v2162 = vunpack.c.h.b16 %v1952
  %v2163 = vunpack.c.l.b16 %v1953
  %v2164 = vunpack.c.h.b16 %v1953
  %v2165 = vunpack.c.l.b16 %v1954
  %v2166 = vunpack.c.h.b16 %v1954
  %v2167 = vunpack.c.l.b16 %v1955
  %v2168 = vunpack.c.h.b16 %v1955
  %v2169 = vunpack.c.l.b16 %v1956
  %v2170 = vunpack.c.h.b16 %v1956
  %v2171 = vunpack.c.l.b16 %v1957
  %v2172 = vunpack.c.h.b16 %v1957
  %v2173 = vunpack.c.l.b16 %v1958
  %v2174 = vunpack.c.h.b16 %v1958
  %v2175 = vunpack.c.l.b16 %v1959
  %v2176 = vunpack.c.h.b16 %v1959
  %v2177 = vunpack.c.l.b16 %v1960
  %v2178 = vunpack.c.h.b16 %v1960
  %v2179 = vunpack.c.l.b16 %v1961
  %v2180 = vunpack.c.h.b16 %v1961
  %v2181 = vunpack.c.l.b16 %v1962
  %v2182 = vunpack.c.h.b16 %v1962
  %v2183 = vunpack.c.l.b16 %v1963
  %v2184 = vunpack.c.h.b16 %v1963
  %v2185 = vunpack.c.l.b16 %v1964
  %v2186 = vunpack.c.h.b16 %v1964
  %v2187 = vunpack.c.l.b16 %v1965
  %v2188 = vunpack.c.h.b16 %v1965
  %v2189 = vunpack.c.l.b16 %v1966
  %v2190 = vunpack.c.h.b16 %v1966
  %v2191 = vunpack.c.l.b16 %v1967
  %v2192 = vunpack.c.h.b16 %v1967
  %v2193 = vunpack.c.l.b16 %v1968
  %v2194 = vunpack.c.h.b16 %v1968
  %v2195 = vunpack.c.l.b16 %v1969
  %v2196 = vunpack.c.h.b16 %v1969
  %v2197 = vunpack.c.l.b16 %v1970
  %v2198 = vunpack.c.h.b16 %v1970
  %v2199 = vunpack.c.l.b16 %v1971
  %v2200 = vunpack.c.h.b16 %v1971
  %v2201 = vunpack.c.l.b16 %v1972
  %v2202 = vunpack.c.h.b16 %v1972
  %v2203 = vunpack.c.l.b16 %v1973
  %v2204 = vunpack.c.h.b16 %v1973
  %v2205 = vunpack.c.l.b16 %v1974
  %v2206 = vunpack.c.h.b16 %v1974
  %v2207 = vunpack.c.l.b16 %v1975
  %v2208 = vunpack.c.h.b16 %v1975
  %v2209 = vunpack.c.l.b16 %v1976
  %v2210 = vunpack.c.h.b16 %v1976
  %v2211 = vunpack.c.l.b16 %v1977
  %v2212 = vunpack.c.h.b16 %v1977
  %v2213 = vunpack.c.l.b16 %v1978
  %v2214 = vunpack.c.h.b16 %v1978
  %v2215 = vunpack.c.l.b16 %v1979
  %v2216 = vunpack.c.h.b16 %v1979
  %v2217 = vunpack.c.l.b16 %v1980
  %v2218 = vunpack.c.h.b16 %v1980
  %v2219 = vunpack.c.l.b16 %v1981
  %v2220 = vunpack.c.h.b16 %v1981
  %v2221 = vunpack.c.l.b16 %v1982
  %v2222 = vunpack.c.h.b16 %v1982
  %v2223 = vunpack.c.l.b16 %v1983
  %v2224 = vunpack.c.h.b16 %v1983
  %v2225 = vunpack.c.l.b16 %v1984
  %v2226 = vunpack.c.h.b16 %v1984
  %v2227 = vunpack.c.l.b16 %v1985
  %v2228 = vunpack.c.h.b16 %v1985
  %v2229 = vunpack.c.l.b16 %v1986
  %v2230 = vunpack.c.h.b16 %v1986
  %v2231 = vunpack.c.l.b16 %v1987
  %v2232 = vunpack.c.h.b16 %v1987
  %v2233 = vunpack.c.l.b16 %v1988
  %v2234 = vunpack.c.h.b16 %v1988
  %v2235 = vunpack.c.l.b16 %v1989
  %v2236 = vunpack.c.h.b16 %v1989
  %v2237 = vunpack.c.l.b16 %v1990
  %v2238 = vunpack.c.h.b16 %v1990
  %v2239 = vunpack.c.l.b16 %v1991
  %v2240 = vunpack.c.h.b16 %v1991
  %v2241 = vunpack.c.l.b16 %v1992
  %v2242 = vunpack.c.h.b16 %v1992
  %v2243 = vunpack.c.l.b16 %v1993
  %v2244 = vunpack.c.h.b16 %v1993
  %v2245 = vunpack.c.l.b16 %v1994
  %v2246 = vunpack.c.h.b16 %v1994
  %v2247 = vunpack.c.l.b16 %v1995
  %v2248 = vunpack.c.h.b16 %v1995
  %v2249 = vunpack.c.l.b16 %v1996
  %v2250 = vunpack.c.h.b16 %v1996
  %v2251 = vunpack.c.l.b16 %v1997
  %v2252 = vunpack.c.h.b16 %v1997
  %v2253 = vunpack.c.l.b16 %v1998
  %v2254 = vunpack.c.h.b16 %v1998
  %v2255 = vunpack.c.l.b16 %v1999
  %v2256 = vunpack.c.h.b16 %v1999
  %v2257 = vunpack.c.l.b16 %v2000
  %v2258 = vunpack.c.h.b16 %v2000
  %v2259 = vunpack.c.l.b16 %v2001
  %v2260 = vunpack.c.h.b16 %v2001
  %v2261 = vunpack.c.l.b16 %v2002
  %v2262 = vunpack.c.h.b16 %v2002
  %v2263 = vunpack.c.l.b16 %v2003
  %v2264 = vunpack.c.h.b16 %v2003
  %v2265 = vunpack.c.l.b16 %v2004
  %v2266 = vunpack.c.h.b16 %v2004
  %v2267 = vunpack.c.l.b16 %v2005
  %v2268 = vunpack.c.h.b16 %v2005
  %v2269 = vunpack.c.l.b16 %v2006
  %v2270 = vunpack.c.h.b16 %v2006
  %v2271 = vunpack.c.l.b16 %v2007
  %v2272 = vunpack.c.h.b16 %v2007
  %v2273 = vunpack.c.l.b16 %v2008
  %v2274 = vunpack.c.h.b16 %v2008
  %v2275 = vunpack.c.l.b16 %v2009
  %v2276 = vunpack.c.h.b16 %v2009
  %v2277 = vunpack.c.l.b16 %v2010
  %v2278 = vunpack.c.h.b16 %v2010
  %v2279 = vunpack.c.l.b16 %v2011
  %v2280 = vunpack.c.h.b16 %v2011
  %v2281 = vunpack.c.l.b16 %v2012
  %v2282 = vunpack.c.h.b16 %v2012
  %v2283 = vpack.c.b16 %v2143, %v2139
  %v2284 = vpack.c.b16 %v2144, %v2140
  %v2285 = vpack.c.b16 %v2145, %v2141
  %v2286 = vpack.c.b16 %v2146, %v2142
  %v2287 = vpack.c.b16 %v2151, %v2147
  %v2288 = vpack.c.b16 %v2152, %v2148
  %v2289 = vpack.c.b16 %v2153, %v2149
  %v2290 = vpack.c.b16 %v2154, %v2150
  %v2291 = vpack.c.b16 %v2159, %v2155
  %v2292 = vpack.c.b16 %v2160, %v2156
  %v2293 = vpack.c.b16 %v2161, %v2157
  %v2294 = vpack.c.b16 %v2162, %v2158
  %v2295 = vpack.c.b16 %v2167, %v2163
  %v2296 = vpack.c.b16 %v2168, %v2164
  %v2297 = vpack.c.b16 %v2169, %v2165
  %v2298 = vpack.c.b16 %v2170, %v2166
  %v2299 = vpack.c.b16 %v2175, %v2171
  %v2300 = vpack.c.b16 %v2176, %v2172
  %v2301 = vpack.c.b16 %v2177, %v2173
  %v2302 = vpack.c.b16 %v2178, %v2174
  %v2303 = vpack.c.b16 %v2183, %v2179
  %v2304 = vpack.c.b16 %v2184, %v2180
  %v2305 = vpack.c.b16 %v2185, %v2181
  %v2306 = vpack.c.b16 %v2186, %v2182
  %v2307 = vpack.c.b16 %v2191, %v2187
  %v2308 = vpack.c.b16 %v2192, %v2188
  %v2309 = vpack.c.b16 %v2193, %v2189
  %v2310 = vpack.c.b16 %v2194, %v2190
  %v2311 = vpack.c.b16 %v2199, %v2195
  %v2312 = vpack.c.b16 %v2200, %v2196
  %v2313 = vpack.c.b16 %v2201, %v2197
  %v2314 = vpack.c.b16 %v2202, %v2198
  %v2315 = vpack.c.b16 %v2207, %v2203
  %v2316 = vpack.c.b16 %v2208, %v2204
  %v2317 = vpack.c.b16 %v2209, %v2205
  %v2318 = vpack.c.b16 %v2210, %v2206
  %v2319 = vpack.c.b16 %v2215, %v2211
  %v2320 = vpack.c.b16 %v2216, %v2212
  %v2321 = vpack.c.b16 %v2217, %v2213
  %v2322 = vpack.c.b16 %v2218, %v2214
  %v2323 = vpack.c.b16 %v2223, %v2219
  %v2324 = vpack.c.b16 %v2224, %v2220
  %v2325 = vpack.c.b16 %v2225, %v2221
  %v2326 = vpack.c.b16 %v2226, %v2222
  %v2327 = vpack.c.b16 %v2231, %v2227
  %v2328 = vpack.c.b16 %v2232, %v2228
  %v2329 = vpack.c.b16 %v2233, %v2229
  %v2330 = vpack.c.b16 %v2234, %v2230
  %v2331 = vpack.c.b16 %v2239, %v2235
  %v2332 = vpack.c.b16 %v2240, %v2236
  %v2333 = vpack.c.b16 %v2241, %v2237
  %v2334 = vpack.c.b16 %v2242, %v2238
  %v2335 = vpack.c.b16 %v2247, %v2243
  %v2336 = vpack.c.b16 %v2248, %v2244
  %v2337 = vpack.c.b16 %v2249, %v2245
  %v2338 = vpack.c.b16 %v2250, %v2246
  %v2339 = vpack.c.b16 %v2255, %v2251
  %v2340 = vpack.c.b16 %v2256, %v2252
  %v2341 = vpack.c.b16 %v2257, %v2253
  %v2342 = vpack.c.b16 %v2258, %v2254
  %v2343 = vpack.c.b16 %v2263, %v2259
  %v2344 = vpack.c.b16 %v2264, %v2260
  %v2345 = vpack.c.b16 %v2265, %v2261
  %v2346 = vpack.c.b16 %v2266, %v2262
  %v2347 = vpack.c.b16 %v2271, %v2267
  %v2348 = vpack.c.b16 %v2272, %v2268
  %v2349 = vpack.c.b16 %v2273, %v2269
  %v2350 = vpack.c.b16 %v2274, %v2270
  %v2351 = vpack.c.b16 %v2279, %v2275
  %v2352 = vpack.c.b16 %v2280, %v2276
  %v2353 = vpack.c.b16 %v2281, %v2277
  %v2354 = vpack.c.b16 %v2282, %v2278
  %v2428 = vsel %vm910, %v2059, 0
  %v2431 = vsel %vm910, %v2062, 0
  %2433 = vmatpush.bf16.msra.mxu0 %v2311
  %2434 = vmatpush.bf16.msra.mxu0 %v2307
  %2435 = vmatpush.bf16.msra.mxu0 %v2303
  %2436 = vmatpush.bf16.msra.mxu0 %v2299
  %2437 = vmatpush.bf16.msra.mxu0 %v2295
  %2438 = vmatpush.bf16.msra.mxu0 %v2291
  %2439 = vmatpush.bf16.msra.mxu0 %v2287
  %2440 = vmatpush.bf16.msra.mxu0 %v2283
  %2441 = vmatmul.bf16.gmra.mxu0 %v2057
  %v2442 = vpop.f32.mrf.mxu0
  %v2443 = vadd.f32 %v2020, %v2442
  %v2444 = vpop.f32.mrf.mxu0
  %v2445 = vadd.f32 %v2025, %v2444
  %2446 = vmatmul.bf16.gmra.mxu0 %v2060
  %v2447 = vpop.f32.mrf.mxu0
  %v2448 = vadd.f32 %v2030, %v2447
  %v2449 = vpop.f32.mrf.mxu0
  %v2450 = vadd.f32 %v2035, %v2449
  %2451 = vdwg.mxu0
  %2452 = vmatpush.bf16.msra.mxu0 %v2343
  %2453 = vmatpush.bf16.msra.mxu0 %v2339
  %2454 = vmatpush.bf16.msra.mxu0 %v2335
  %2455 = vmatpush.bf16.msra.mxu0 %v2331
  %2456 = vmatpush.bf16.msra.mxu0 %v2327
  %2457 = vmatpush.bf16.msra.mxu0 %v2323
  %2458 = vmatpush.bf16.msra.mxu0 %v2319
  %2459 = vmatpush.bf16.msra.mxu0 %v2315
  %2460 = vmatmul.bf16.gmra.mxu0 %v2058
  %v2461 = vpop.f32.mrf.mxu0
  %v2462 = vadd.f32 %v2443, %v2461
  %v2463 = vpop.f32.mrf.mxu0
  %v2464 = vadd.f32 %v2445, %v2463
  %2465 = vmatmul.bf16.gmra.mxu0 %v2061
  %v2466 = vpop.f32.mrf.mxu0
  %v2467 = vadd.f32 %v2448, %v2466
  %v2468 = vpop.f32.mrf.mxu0
  %v2469 = vadd.f32 %v2450, %v2468
  %2470 = vdwg.mxu0
  %2471 = vmatpush.bf16.msra.mxu0 0
  %2472 = vmatpush.bf16.msra.mxu0 0
  %2473 = vmatpush.bf16.msra.mxu0 0
  %2474 = vmatpush.bf16.msra.mxu0 0
  %2475 = vmatpush.bf16.msra.mxu0 0
  %2476 = vmatpush.bf16.msra.mxu0 0
  %2477 = vmatpush.bf16.msra.mxu0 %v2351
  %2478 = vmatpush.bf16.msra.mxu0 %v2347
  %2479 = vmatmul.bf16.gmra.mxu0 %v2428
  %v2480 = vpop.f32.mrf.mxu0
  %v2481 = vadd.f32 %v2462, %v2480
  %v2482 = vpop.f32.mrf.mxu0
  %v2483 = vadd.f32 %v2464, %v2482
  %2484 = vmatmul.bf16.gmra.mxu0 %v2431
  %v2485 = vpop.f32.mrf.mxu0
  %v2486 = vadd.f32 %v2467, %v2485
  %v2487 = vpop.f32.mrf.mxu0
  %v2488 = vadd.f32 %v2469, %v2487
  %2489 = vdwg.mxu0
  %2490 = vmatpush.bf16.msra.mxu0 %v2312
  %2491 = vmatpush.bf16.msra.mxu0 %v2308
  %2492 = vmatpush.bf16.msra.mxu0 %v2304
  %2493 = vmatpush.bf16.msra.mxu0 %v2300
  %2494 = vmatpush.bf16.msra.mxu0 %v2296
  %2495 = vmatpush.bf16.msra.mxu0 %v2292
  %2496 = vmatpush.bf16.msra.mxu0 %v2288
  %2497 = vmatpush.bf16.msra.mxu0 %v2284
  %2498 = vmatmul.bf16.gmra.mxu0 %v2057
  %v2499 = vpop.f32.mrf.mxu0
  %v2500 = vadd.f32 %v2020, %v2499
  %v2501 = vpop.f32.mrf.mxu0
  %v2502 = vadd.f32 %v2025, %v2501
  %2503 = vmatmul.bf16.gmra.mxu0 %v2060
  %v2504 = vpop.f32.mrf.mxu0
  %v2505 = vadd.f32 %v2030, %v2504
  %v2506 = vpop.f32.mrf.mxu0
  %v2507 = vadd.f32 %v2035, %v2506
  %2508 = vdwg.mxu0
  %2509 = vmatpush.bf16.msra.mxu0 %v2344
  %2510 = vmatpush.bf16.msra.mxu0 %v2340
  %2511 = vmatpush.bf16.msra.mxu0 %v2336
  %2512 = vmatpush.bf16.msra.mxu0 %v2332
  %2513 = vmatpush.bf16.msra.mxu0 %v2328
  %2514 = vmatpush.bf16.msra.mxu0 %v2324
  %2515 = vmatpush.bf16.msra.mxu0 %v2320
  %2516 = vmatpush.bf16.msra.mxu0 %v2316
  %2517 = vmatmul.bf16.gmra.mxu0 %v2058
  %v2518 = vpop.f32.mrf.mxu0
  %v2519 = vadd.f32 %v2500, %v2518
  %v2520 = vpop.f32.mrf.mxu0
  %v2521 = vadd.f32 %v2502, %v2520
  %2522 = vmatmul.bf16.gmra.mxu0 %v2061
  %v2523 = vpop.f32.mrf.mxu0
  %v2524 = vadd.f32 %v2505, %v2523
  %v2525 = vpop.f32.mrf.mxu0
  %v2526 = vadd.f32 %v2507, %v2525
  %2527 = vdwg.mxu0
  %2528 = vmatpush.bf16.msra.mxu0 0
  %2529 = vmatpush.bf16.msra.mxu0 0
  %2530 = vmatpush.bf16.msra.mxu0 0
  %2531 = vmatpush.bf16.msra.mxu0 0
  %2532 = vmatpush.bf16.msra.mxu0 0
  %2533 = vmatpush.bf16.msra.mxu0 0
  %2534 = vmatpush.bf16.msra.mxu0 %v2352
  %2535 = vmatpush.bf16.msra.mxu0 %v2348
  %2536 = vmatmul.bf16.gmra.mxu0 %v2428
  %v2537 = vpop.f32.mrf.mxu0
  %v2538 = vadd.f32 %v2519, %v2537
  %v2539 = vpop.f32.mrf.mxu0
  %v2540 = vadd.f32 %v2521, %v2539
  %2541 = vmatmul.bf16.gmra.mxu0 %v2431
  %v2542 = vpop.f32.mrf.mxu0
  %v2543 = vadd.f32 %v2524, %v2542
  %v2544 = vpop.f32.mrf.mxu0
  %v2545 = vadd.f32 %v2526, %v2544
  %2546 = vdwg.mxu0
  %2547 = vmatpush.bf16.msra.mxu0 %v2313
  %2548 = vmatpush.bf16.msra.mxu0 %v2309
  %2549 = vmatpush.bf16.msra.mxu0 %v2305
  %2550 = vmatpush.bf16.msra.mxu0 %v2301
  %2551 = vmatpush.bf16.msra.mxu0 %v2297
  %2552 = vmatpush.bf16.msra.mxu0 %v2293
  %2553 = vmatpush.bf16.msra.mxu0 %v2289
  %2554 = vmatpush.bf16.msra.mxu0 %v2285
  %2555 = vmatmul.bf16.gmra.mxu0 %v2057
  %v2556 = vpop.f32.mrf.mxu0
  %v2557 = vadd.f32 %v2020, %v2556
  %v2558 = vpop.f32.mrf.mxu0
  %v2559 = vadd.f32 %v2025, %v2558
  %2560 = vmatmul.bf16.gmra.mxu0 %v2060
  %v2561 = vpop.f32.mrf.mxu0
  %v2562 = vadd.f32 %v2030, %v2561
  %v2563 = vpop.f32.mrf.mxu0
  %v2564 = vadd.f32 %v2035, %v2563
  %2565 = vdwg.mxu0
  %2566 = vmatpush.bf16.msra.mxu0 %v2345
  %2567 = vmatpush.bf16.msra.mxu0 %v2341
  %2568 = vmatpush.bf16.msra.mxu0 %v2337
  %2569 = vmatpush.bf16.msra.mxu0 %v2333
  %2570 = vmatpush.bf16.msra.mxu0 %v2329
  %2571 = vmatpush.bf16.msra.mxu0 %v2325
  %2572 = vmatpush.bf16.msra.mxu0 %v2321
  %2573 = vmatpush.bf16.msra.mxu0 %v2317
  %2574 = vmatmul.bf16.gmra.mxu0 %v2058
  %v2575 = vpop.f32.mrf.mxu0
  %v2576 = vadd.f32 %v2557, %v2575
  %v2577 = vpop.f32.mrf.mxu0
  %v2578 = vadd.f32 %v2559, %v2577
  %2579 = vmatmul.bf16.gmra.mxu0 %v2061
  %v2580 = vpop.f32.mrf.mxu0
  %v2581 = vadd.f32 %v2562, %v2580
  %v2582 = vpop.f32.mrf.mxu0
  %v2583 = vadd.f32 %v2564, %v2582
  %2584 = vdwg.mxu0
  %2585 = vmatpush.bf16.msra.mxu0 0
  %2586 = vmatpush.bf16.msra.mxu0 0
  %2587 = vmatpush.bf16.msra.mxu0 0
  %2588 = vmatpush.bf16.msra.mxu0 0
  %2589 = vmatpush.bf16.msra.mxu0 0
  %2590 = vmatpush.bf16.msra.mxu0 0
  %2591 = vmatpush.bf16.msra.mxu0 %v2353
  %2592 = vmatpush.bf16.msra.mxu0 %v2349
  %2593 = vmatmul.bf16.gmra.mxu0 %v2428
  %v2594 = vpop.f32.mrf.mxu0
  %v2595 = vadd.f32 %v2576, %v2594
  %v2596 = vpop.f32.mrf.mxu0
  %v2597 = vadd.f32 %v2578, %v2596
  %2598 = vmatmul.bf16.gmra.mxu0 %v2431
  %v2599 = vpop.f32.mrf.mxu0
  %v2600 = vadd.f32 %v2581, %v2599
  %v2601 = vpop.f32.mrf.mxu0
  %v2602 = vadd.f32 %v2583, %v2601
  %2603 = vdwg.mxu0
  %2604 = vmatpush.bf16.msra.mxu0 %v2314
  %2605 = vmatpush.bf16.msra.mxu0 %v2310
  %2606 = vmatpush.bf16.msra.mxu0 %v2306
  %2607 = vmatpush.bf16.msra.mxu0 %v2302
  %2608 = vmatpush.bf16.msra.mxu0 %v2298
  %2609 = vmatpush.bf16.msra.mxu0 %v2294
  %2610 = vmatpush.bf16.msra.mxu0 %v2290
  %2611 = vmatpush.bf16.msra.mxu0 %v2286
  %2612 = vmatmul.bf16.gmra.mxu0 %v2057
  %v2613 = vpop.f32.mrf.mxu0
  %v2614 = vadd.f32 %v2020, %v2613
  %v2615 = vpop.f32.mrf.mxu0
  %v2616 = vadd.f32 %v2025, %v2615
  %2617 = vmatmul.bf16.gmra.mxu0 %v2060
  %v2618 = vpop.f32.mrf.mxu0
  %v2619 = vadd.f32 %v2030, %v2618
  %v2620 = vpop.f32.mrf.mxu0
  %v2621 = vadd.f32 %v2035, %v2620
  %2622 = vdwg.mxu0
  %2623 = vmatpush.bf16.msra.mxu0 %v2346
  %2624 = vmatpush.bf16.msra.mxu0 %v2342
  %2625 = vmatpush.bf16.msra.mxu0 %v2338
  %2626 = vmatpush.bf16.msra.mxu0 %v2334
  %2627 = vmatpush.bf16.msra.mxu0 %v2330
  %2628 = vmatpush.bf16.msra.mxu0 %v2326
  %2629 = vmatpush.bf16.msra.mxu0 %v2322
  %2630 = vmatpush.bf16.msra.mxu0 %v2318
  %2631 = vmatmul.bf16.gmra.mxu0 %v2058
  %v2632 = vpop.f32.mrf.mxu0
  %v2633 = vadd.f32 %v2614, %v2632
  %v2634 = vpop.f32.mrf.mxu0
  %v2635 = vadd.f32 %v2616, %v2634
  %2636 = vmatmul.bf16.gmra.mxu0 %v2061
  %v2637 = vpop.f32.mrf.mxu0
  %v2638 = vadd.f32 %v2619, %v2637
  %v2639 = vpop.f32.mrf.mxu0
  %v2640 = vadd.f32 %v2621, %v2639
  %2641 = vdwg.mxu0
  %2642 = vmatpush.bf16.msra.mxu0 0
  %2643 = vmatpush.bf16.msra.mxu0 0
  %2644 = vmatpush.bf16.msra.mxu0 0
  %2645 = vmatpush.bf16.msra.mxu0 0
  %2646 = vmatpush.bf16.msra.mxu0 0
  %2647 = vmatpush.bf16.msra.mxu0 0
  %2648 = vmatpush.bf16.msra.mxu0 %v2354
  %2649 = vmatpush.bf16.msra.mxu0 %v2350
  %2650 = vmatmul.bf16.gmra.mxu0 %v2428
  %v2651 = vpop.f32.mrf.mxu0
  %v2652 = vadd.f32 %v2633, %v2651
  %v2653 = vpop.f32.mrf.mxu0
  %v2654 = vadd.f32 %v2635, %v2653
  %2655 = vmatmul.bf16.gmra.mxu0 %v2431
  %v2656 = vpop.f32.mrf.mxu0
  %v2657 = vadd.f32 %v2638, %v2656
  %v2658 = vpop.f32.mrf.mxu0
  %v2659 = vadd.f32 %v2640, %v2658
  %2660 = vdwg.mxu0
  %v2661 = vadd.f32 %v2481, %v2538
  %v2662 = vadd.f32 %v2661, %v2595
  %v2663 = vadd.f32 %v2662, %v2652
  %2664 = vadd.xlane.f32.xlu0 %v2663
  %v2665 = vpop.xlane.xlu0 %2664
  %v2666 = vadd.f32 %v2483, %v2540
  %v2667 = vadd.f32 %v2666, %v2597
  %v2668 = vadd.f32 %v2667, %v2654
  %2669 = vadd.xlane.f32.xlu0 %v2668
  %v2670 = vpop.xlane.xlu0 %2669
  %v2671 = vmul.f32 %v2665, 0.001953125
  %v2672 = vmul.f32 %v2670, 0.001953125
  %v2673 = vadd.f32 %v2486, %v2543
  %v2674 = vadd.f32 %v2673, %v2600
  %v2675 = vadd.f32 %v2674, %v2657
  %2676 = vadd.xlane.f32.xlu0 %v2675
  %v2677 = vpop.xlane.xlu0 %2676
  %v2678 = vadd.f32 %v2488, %v2545
  %v2679 = vadd.f32 %v2678, %v2602
  %v2680 = vadd.f32 %v2679, %v2659
  %2681 = vadd.xlane.f32.xlu0 %v2680
  %v2682 = vpop.xlane.xlu0 %2681
  %v2683 = vmul.f32 %v2677, 0.001953125
  %v2684 = vmul.f32 %v2682, 0.001953125
  %v2685 = vmul.f32 %v2481, %v2481
  %v2686 = vmul.f32 %v2538, %v2538
  %v2687 = vmul.f32 %v2595, %v2595
  %v2688 = vmul.f32 %v2652, %v2652
  %v2689 = vmul.f32 %v2483, %v2483
  %v2690 = vmul.f32 %v2540, %v2540
  %v2691 = vmul.f32 %v2597, %v2597
  %v2692 = vmul.f32 %v2654, %v2654
  %v2693 = vadd.f32 %v2685, %v2686
  %v2694 = vadd.f32 %v2693, %v2687
  %v2695 = vadd.f32 %v2694, %v2688
  %2696 = vadd.xlane.f32.xlu0 %v2695
  %v2697 = vpop.xlane.xlu0 %2696
  %v2698 = vadd.f32 %v2689, %v2690
  %v2699 = vadd.f32 %v2698, %v2691
  %v2700 = vadd.f32 %v2699, %v2692
  %2701 = vadd.xlane.f32.xlu0 %v2700
  %v2702 = vpop.xlane.xlu0 %2701
  %v2703 = vmul.f32 %v2697, 0.001953125
  %v2704 = vmul.f32 %v2702, 0.001953125
  %v2705 = vmul.f32 %v2671, %v2671
  %v2706 = vmul.f32 %v2672, %v2672
  %v2707 = vsub.f32 %v2703, %v2705
  %v2708 = vsub.f32 %v2704, %v2706
  %v2709 = vadd.f32 %v2707, 1e-05
  %v2710 = vadd.f32 %v2708, 1e-05
  %v2711 = vmul.f32 %v2486, %v2486
  %v2712 = vmul.f32 %v2543, %v2543
  %v2713 = vmul.f32 %v2600, %v2600
  %v2714 = vmul.f32 %v2657, %v2657
  %v2715 = vmul.f32 %v2488, %v2488
  %v2716 = vmul.f32 %v2545, %v2545
  %v2717 = vmul.f32 %v2602, %v2602
  %v2718 = vmul.f32 %v2659, %v2659
  %v2719 = vadd.f32 %v2711, %v2712
  %v2720 = vadd.f32 %v2719, %v2713
  %v2721 = vadd.f32 %v2720, %v2714
  %2722 = vadd.xlane.f32.xlu0 %v2721
  %v2723 = vpop.xlane.xlu0 %2722
  %v2724 = vadd.f32 %v2715, %v2716
  %v2725 = vadd.f32 %v2724, %v2717
  %v2726 = vadd.f32 %v2725, %v2718
  %2727 = vadd.xlane.f32.xlu0 %v2726
  %v2728 = vpop.xlane.xlu0 %2727
  %v2729 = vmul.f32 %v2723, 0.001953125
  %v2730 = vmul.f32 %v2728, 0.001953125
  %v2731 = vmul.f32 %v2683, %v2683
  %v2732 = vmul.f32 %v2684, %v2684
  %v2733 = vsub.f32 %v2729, %v2731
  %v2734 = vsub.f32 %v2730, %v2732
  %v2735 = vadd.f32 %v2733, 1e-05
  %v2736 = vadd.f32 %v2734, 1e-05
  %v2737 = vmul.f32 %v2481, %v2486
  %v2738 = vmul.f32 %v2538, %v2543
  %v2739 = vmul.f32 %v2595, %v2600
  %v2740 = vmul.f32 %v2652, %v2657
  %v2741 = vmul.f32 %v2483, %v2488
  %v2742 = vmul.f32 %v2540, %v2545
  %v2743 = vmul.f32 %v2597, %v2602
  %v2744 = vmul.f32 %v2654, %v2659
  %v2745 = vadd.f32 %v2737, %v2738
  %v2746 = vadd.f32 %v2745, %v2739
  %v2747 = vadd.f32 %v2746, %v2740
  %2748 = vadd.xlane.f32.xlu0 %v2747
  %v2749 = vpop.xlane.xlu0 %2748
  %v2750 = vadd.f32 %v2741, %v2742
  %v2751 = vadd.f32 %v2750, %v2743
  %v2752 = vadd.f32 %v2751, %v2744
  %2753 = vadd.xlane.f32.xlu0 %v2752
  %v2754 = vpop.xlane.xlu0 %2753
  %v2755 = vmul.f32 %v2749, 0.001953125
  %v2756 = vmul.f32 %v2754, 0.001953125
  %v2757 = vmul.f32 %v2671, %v2683
  %v2758 = vmul.f32 %v2672, %v2684
  %v2759 = vsub.f32 %v2755, %v2757
  %v2760 = vsub.f32 %v2756, %v2758
  %v2761 = vmul.f32 %v2709, %v2735
  %v2762 = vmul.f32 %v2710, %v2736
  %v2763 = vmul.f32 %v2759, %v2759
  %v2764 = vmul.f32 %v2760, %v2760
  %v2765 = vsub.f32 %v2761, %v2763
  %v2766 = vsub.f32 %v2762, %v2764
  %v2767 = vrsqrt.pop %v2765
  %v2768 = vmul.f32 %v2767, %v2765
  %v2769 = vmul.f32 %v2768, %v2767
  %v2770 = vmul.f32 0.5, %v2769
  %v2771 = vsub.f32 1.5, %v2770
  %v2772 = vmul.f32 %v2767, %v2771
  %v2773 = vmul.f32 %v2765, %v2772
  %vm2774 = vcmp.eq.f32.partialorder %v2765, inf
  %v2775 = vsel %vm2774, %v2765, %v2773
  %vm2776 = vcmp.eq.f32.partialorder %v2765, 0.0
  %v2777 = vand.u32 %v2765, 2147483648
  %v2778 = vsel %vm2776, %v2777, %v2775
  %v2779 = vrsqrt.pop %v2766
  %v2780 = vmul.f32 %v2779, %v2766
  %v2781 = vmul.f32 %v2780, %v2779
  %v2782 = vmul.f32 0.5, %v2781
  %v2783 = vsub.f32 1.5, %v2782
  %v2784 = vmul.f32 %v2779, %v2783
  %v2785 = vmul.f32 %v2766, %v2784
  %vm2786 = vcmp.eq.f32.partialorder %v2766, inf
  %v2787 = vsel %vm2786, %v2766, %v2785
  %vm2788 = vcmp.eq.f32.partialorder %v2766, 0.0
  %v2789 = vand.u32 %v2766, 2147483648
  %v2790 = vsel %vm2788, %v2789, %v2787
  %v2791 = vadd.f32 %v2709, %v2735
  %v2792 = vadd.f32 %v2710, %v2736
  %v2793 = vmul.f32 %v2778, 2.0
  %v2794 = vmul.f32 %v2790, 2.0
  %v2795 = vadd.f32 %v2791, %v2793
  %v2796 = vadd.f32 %v2792, %v2794
  %v2797 = vrsqrt.pop %v2795
  %v2798 = vmul.f32 %v2797, %v2795
  %v2799 = vmul.f32 %v2798, %v2797
  %v2800 = vmul.f32 0.5, %v2799
  %v2801 = vsub.f32 1.5, %v2800
  %v2802 = vmul.f32 %v2797, %v2801
  %v2803 = vmul.f32 %v2795, %v2802
  %vm2804 = vcmp.eq.f32.partialorder %v2795, inf
  %v2805 = vsel %vm2804, %v2795, %v2803
  %vm2806 = vcmp.eq.f32.partialorder %v2795, 0.0
  %v2807 = vand.u32 %v2795, 2147483648
  %v2808 = vsel %vm2806, %v2807, %v2805
  %v2809 = vrsqrt.pop %v2796
  %v2810 = vmul.f32 %v2809, %v2796
  %v2811 = vmul.f32 %v2810, %v2809
  %v2812 = vmul.f32 0.5, %v2811
  %v2813 = vsub.f32 1.5, %v2812
  %v2814 = vmul.f32 %v2809, %v2813
  %v2815 = vmul.f32 %v2796, %v2814
  %vm2816 = vcmp.eq.f32.partialorder %v2796, inf
  %v2817 = vsel %vm2816, %v2796, %v2815
  %vm2818 = vcmp.eq.f32.partialorder %v2796, 0.0
  %v2819 = vand.u32 %v2796, 2147483648
  %v2820 = vsel %vm2818, %v2819, %v2817
  %v2821 = vmul.f32 %v2778, %v2808
  %v2822 = vmul.f32 %v2790, %v2820
  %v2823 = vrcp.pop %v2821
  %v2824 = vmul.f32 %v2821, %v2823
  %v2825 = vsub.f32 1.0, %v2824
  %v2826 = vmul.f32 %v2823, %v2825
  %v2827 = vadd.f32 %v2823, %v2826
  %vm2828 = vweird.f32 %v2821
  %vm2829 = vweird.f32 %v2823
  %vm2830 = vmor %vm2828, %vm2829
  %v2831 = vsel %vm2830, %v2823, %v2827
  %v2832 = vand.u32 2147483647, %v2821
  %vm2833 = vcmp.eq.f32.partialorder %v2832, 8.507059e+37
  %v2834 = vand.u32 %v2821, 2147483648
  %v2835 = vor.u32 1.1754944e-38, %v2834
  %v2836 = vsel %vm2833, %v2835, %v2831
  %v2837 = vmul.f32 1.0, %v2836
  %v2838 = vrcp.pop %v2822
  %v2839 = vmul.f32 %v2822, %v2838
  %v2840 = vsub.f32 1.0, %v2839
  %v2841 = vmul.f32 %v2838, %v2840
  %v2842 = vadd.f32 %v2838, %v2841
  %vm2843 = vweird.f32 %v2822
  %vm2844 = vweird.f32 %v2838
  %vm2845 = vmor %vm2843, %vm2844
  %v2846 = vsel %vm2845, %v2838, %v2842
  %v2847 = vand.u32 2147483647, %v2822
  %vm2848 = vcmp.eq.f32.partialorder %v2847, 8.507059e+37
  %v2849 = vand.u32 %v2822, 2147483648
  %v2850 = vor.u32 1.1754944e-38, %v2849
  %v2851 = vsel %vm2848, %v2850, %v2846
  %v2852 = vmul.f32 1.0, %v2851
  %v2853 = vadd.f32 %v2735, %v2778
  %v2854 = vadd.f32 %v2736, %v2790
  %v2855 = vmul.f32 %v2853, %v2837
  %v2856 = vmul.f32 %v2854, %v2852
  %v2857 = vadd.f32 %v2709, %v2778
  %v2858 = vadd.f32 %v2710, %v2790
  %v2859 = vmul.f32 %v2857, %v2837
  %v2860 = vmul.f32 %v2858, %v2852
  %v2861 = vsub.f32 0.0, %v2759
  %v2862 = vsub.f32 0.0, %v2760
  %v2863 = vmul.f32 %v2861, %v2837
  %v2864 = vmul.f32 %v2862, %v2852
  %v2865 = vld [vmem:[%s9] sm:$0xff]
  %v2866 = vld [vmem:[%s9 + $0x8] sm:$0xff]
  %v2867 = vmul.f32 %v2865, %v2855
  %v2868 = vmul.f32 %v2866, %v2856
  %v2869 = vmul.f32 %v2865, %v2863
  %v2870 = vmul.f32 %v2866, %v2864
  %2873 = vrot.lane.b32.xlu0 %v2869, 126
  %v2874 = vpop.permute.xlu0 %2873
  %2875 = vrot.lane.b32.xlu0 %v2870, 126
  %v2876 = vpop.permute.xlu0 %2875
  %v2879 = vadd.f32 %v2867, %v2874
  %v2880 = vadd.f32 %v2868, %v2876
  %v2881 = vmul.f32 %v2865, %v2859
  %v2882 = vmul.f32 %v2866, %v2860
  %2885 = vrot.lane.b32.xlu0 %v2881, 126
  %v2886 = vpop.permute.xlu0 %2885
  %2887 = vrot.lane.b32.xlu0 %v2882, 126
  %v2888 = vpop.permute.xlu0 %2887
  %v2891 = vadd.f32 %v2869, %v2886
  %v2892 = vadd.f32 %v2870, %v2888
  %2893 = vrot.lane.b32.xlu0 %v2869, 1
  %v2894 = vpop.permute.xlu0 %2893
  %2895 = vrot.lane.b32.xlu0 %v2870, 1
  %v2896 = vpop.permute.xlu0 %2895
  %v2899 = vadd.f32 %v2867, %v2894
  %v2900 = vadd.f32 %v2868, %v2896
  %2901 = vrot.lane.b32.xlu0 %v2881, 1
  %v2902 = vpop.permute.xlu0 %2901
  %2903 = vrot.lane.b32.xlu0 %v2882, 1
  %v2904 = vpop.permute.xlu0 %2903
  %v2907 = vadd.f32 %v2869, %v2902
  %v2908 = vadd.f32 %v2870, %v2904
  %v2909 = vmul.f32 %v2879, %v2671
  %v2910 = vmul.f32 %v2880, %v2672
  %2913 = vrot.lane.b32.xlu0 %v2909, 3
  %v2914 = vpop.permute.xlu0 %2913
  %2915 = vrot.lane.b32.xlu0 %v2910, 3
  %v2916 = vpop.permute.xlu0 %2915
  %v2919 = vsub.f32 %v2865, %v2914
  %v2920 = vsub.f32 %v2866, %v2916
  %v2921 = vmul.f32 %v2891, %v2683
  %v2922 = vmul.f32 %v2892, %v2684
  %2925 = vrot.lane.b32.xlu0 %v2921, 3
  %v2926 = vpop.permute.xlu0 %2925
  %2927 = vrot.lane.b32.xlu0 %v2922, 3
  %v2928 = vpop.permute.xlu0 %2927
  %v2931 = vsub.f32 %v2919, %v2926
  %v2932 = vsub.f32 %v2920, %v2928
  %v2933 = vmul.f32 %v2899, %v2671
  %v2934 = vmul.f32 %v2900, %v2672
  %2937 = vrot.lane.b32.xlu0 %v2933, 2
  %v2938 = vpop.permute.xlu0 %2937
  %2939 = vrot.lane.b32.xlu0 %v2934, 2
  %v2940 = vpop.permute.xlu0 %2939
  %v2943 = vsub.f32 %v2865, %v2938
  %v2944 = vsub.f32 %v2866, %v2940
  %v2945 = vmul.f32 %v2907, %v2683
  %v2946 = vmul.f32 %v2908, %v2684
  %2949 = vrot.lane.b32.xlu0 %v2945, 2
  %v2950 = vpop.permute.xlu0 %2949
  %2951 = vrot.lane.b32.xlu0 %v2946, 2
  %v2952 = vpop.permute.xlu0 %2951
  %v2955 = vsub.f32 %v2943, %v2950
  %v2956 = vsub.f32 %v2944, %v2952
  %2958 = vset.pattern.permute.xlu0 0
  %2959 = vperm.xlu0 %2958, %v2879
  %v2960 = vpop.permute.xlu0 %2959
  %2963 = vset.pattern.permute.xlu0 0
  %2964 = vperm.xlu0 %2963, %v2880
  %v2965 = vpop.permute.xlu0 %2964
  %v2967 = vmul.f32 %v2960, %v2481
  %v2968 = vmul.f32 %v2960, %v2538
  %v2969 = vmul.f32 %v2960, %v2595
  %v2970 = vmul.f32 %v2960, %v2652
  %v2971 = vmul.f32 %v2965, %v2483
  %v2972 = vmul.f32 %v2965, %v2540
  %v2973 = vmul.f32 %v2965, %v2597
  %v2974 = vmul.f32 %v2965, %v2654
  %2976 = vset.pattern.permute.xlu0 0
  %2977 = vperm.xlu0 %2976, %v2891
  %v2978 = vpop.permute.xlu0 %2977
  %2981 = vset.pattern.permute.xlu0 0
  %2982 = vperm.xlu0 %2981, %v2892
  %v2983 = vpop.permute.xlu0 %2982
  %v2985 = vmul.f32 %v2978, %v2486
  %v2986 = vmul.f32 %v2978, %v2543
  %v2987 = vmul.f32 %v2978, %v2600
  %v2988 = vmul.f32 %v2978, %v2657
  %v2989 = vmul.f32 %v2983, %v2488
  %v2990 = vmul.f32 %v2983, %v2545
  %v2991 = vmul.f32 %v2983, %v2602
  %v2992 = vmul.f32 %v2983, %v2659
  %v2993 = vadd.f32 %v2967, %v2985
  %v2994 = vadd.f32 %v2968, %v2986
  %v2995 = vadd.f32 %v2969, %v2987
  %v2996 = vadd.f32 %v2970, %v2988
  %v2997 = vadd.f32 %v2971, %v2989
  %v2998 = vadd.f32 %v2972, %v2990
  %v2999 = vadd.f32 %v2973, %v2991
  %v3000 = vadd.f32 %v2974, %v2992
  %3002 = vset.pattern.permute.xlu0 3
  %3003 = vperm.xlu0 %3002, %v2931
  %v3004 = vpop.permute.xlu0 %3003
  %3007 = vset.pattern.permute.xlu0 3
  %3008 = vperm.xlu0 %3007, %v2932
  %v3009 = vpop.permute.xlu0 %3008
  %v3011 = vadd.f32 %v2993, %v3004
  %v3012 = vadd.f32 %v2994, %v3004
  %v3013 = vadd.f32 %v2995, %v3004
  %v3014 = vadd.f32 %v2996, %v3004
  %v3015 = vadd.f32 %v2997, %v3009
  %v3016 = vadd.f32 %v2998, %v3009
  %v3017 = vadd.f32 %v2999, %v3009
  %v3018 = vadd.f32 %v3000, %v3009
  %v3019 = vmax.f32 %v3011, 0.0
  %v3020 = vmax.f32 %v3012, 0.0
  %v3021 = vmax.f32 %v3013, 0.0
  %v3022 = vmax.f32 %v3014, 0.0
  %v3023 = vmax.f32 %v3015, 0.0
  %v3024 = vmax.f32 %v3016, 0.0
  %v3025 = vmax.f32 %v3017, 0.0
  %v3026 = vmax.f32 %v3018, 0.0
  %3028 = vset.pattern.permute.xlu0 2
  %3029 = vperm.xlu0 %3028, %v2899
  %v3030 = vpop.permute.xlu0 %3029
  %3033 = vset.pattern.permute.xlu0 2
  %3034 = vperm.xlu0 %3033, %v2900
  %v3035 = vpop.permute.xlu0 %3034
  %v3037 = vmul.f32 %v3030, %v2481
  %v3038 = vmul.f32 %v3030, %v2538
  %v3039 = vmul.f32 %v3030, %v2595
  %v3040 = vmul.f32 %v3030, %v2652
  %v3041 = vmul.f32 %v3035, %v2483
  %v3042 = vmul.f32 %v3035, %v2540
  %v3043 = vmul.f32 %v3035, %v2597
  %v3044 = vmul.f32 %v3035, %v2654
  %3046 = vset.pattern.permute.xlu0 2
  %3047 = vperm.xlu0 %3046, %v2907
  %v3048 = vpop.permute.xlu0 %3047
  %3051 = vset.pattern.permute.xlu0 2
  %3052 = vperm.xlu0 %3051, %v2908
  %v3053 = vpop.permute.xlu0 %3052
  %v3055 = vmul.f32 %v3048, %v2486
  %v3056 = vmul.f32 %v3048, %v2543
  %v3057 = vmul.f32 %v3048, %v2600
  %v3058 = vmul.f32 %v3048, %v2657
  %v3059 = vmul.f32 %v3053, %v2488
  %v3060 = vmul.f32 %v3053, %v2545
  %v3061 = vmul.f32 %v3053, %v2602
  %v3062 = vmul.f32 %v3053, %v2659
  %v3063 = vadd.f32 %v3037, %v3055
  %v3064 = vadd.f32 %v3038, %v3056
  %v3065 = vadd.f32 %v3039, %v3057
  %v3066 = vadd.f32 %v3040, %v3058
  %v3067 = vadd.f32 %v3041, %v3059
  %v3068 = vadd.f32 %v3042, %v3060
  %v3069 = vadd.f32 %v3043, %v3061
  %v3070 = vadd.f32 %v3044, %v3062
  %3072 = vset.pattern.permute.xlu0 4
  %3073 = vperm.xlu0 %3072, %v2955
  %v3074 = vpop.permute.xlu0 %3073
  %3077 = vset.pattern.permute.xlu0 4
  %3078 = vperm.xlu0 %3077, %v2956
  %v3079 = vpop.permute.xlu0 %3078
  %v3081 = vadd.f32 %v3063, %v3074
  %v3082 = vadd.f32 %v3064, %v3074
  %v3083 = vadd.f32 %v3065, %v3074
  %v3084 = vadd.f32 %v3066, %v3074
  %v3085 = vadd.f32 %v3067, %v3079
  %v3086 = vadd.f32 %v3068, %v3079
  %v3087 = vadd.f32 %v3069, %v3079
  %v3088 = vadd.f32 %v3070, %v3079
  %v3089 = vmax.f32 %v3081, 0.0
  %v3090 = vmax.f32 %v3082, 0.0
  %v3091 = vmax.f32 %v3083, 0.0
  %v3092 = vmax.f32 %v3084, 0.0
  %v3093 = vmax.f32 %v3085, 0.0
  %v3094 = vmax.f32 %v3086, 0.0
  %v3095 = vmax.f32 %v3087, 0.0
  %v3096 = vmax.f32 %v3088, 0.0
  %v3097 = vadd.f32 %v3019, %v3020
  %v3098 = vadd.f32 %v3023, %v3024
  %v3099 = vadd.f32 %v3097, %v3021
  %v3100 = vadd.f32 %v3098, %v3025
  %v3101 = vadd.f32 %v3099, %v3022
  %v3102 = vadd.f32 %v3100, %v3026
  %v3103 = vmul.f32 %v3101, 0.25
  %v3104 = vmul.f32 %v3102, 0.25
  %3105 = vst [vmem:[%s10] sm:$0xff] %v3103
  %3106 = vst [vmem:[%s10 + $0x8] sm:$0xff] %v3104
  %v3107 = vadd.f32 %v3089, %v3090
  %v3108 = vadd.f32 %v3093, %v3094
  %v3109 = vadd.f32 %v3107, %v3091
  %v3110 = vadd.f32 %v3108, %v3095
  %v3111 = vadd.f32 %v3109, %v3092
  %v3112 = vadd.f32 %v3110, %v3096
  %v3113 = vmul.f32 %v3111, 0.25
  %v3114 = vmul.f32 %v3112, 0.25
  %3115 = vst [vmem:[%s11] sm:$0xff] %v3113
  %3116 = vst [vmem:[%s11 + $0x8] sm:$0xff] %v3114
  // Predicated region
  $region42: #{complex_down.1} parent=0 // pred_check
    _
  $region43: #{complex_down.1} parent=0 // pred_check_branch
    %3118 = sbr.rel (0) target = $region45
  $region44: #{complex_down.1} parent=0 // pred_region
    _
  $region45: #{complex_down.1} parent=0 // pred_fallthru
    _
  // Predicated region
  $region46: #{complex_down.1} parent=0 // pred_check
    _
  $region47: #{complex_down.1} parent=0 // pred_check_branch
    %3120 = sbr.rel (0) target = $region49
  $region48: #{complex_down.1} parent=0 // pred_region
    _
  $region49: #{complex_down.1} parent=0 // pred_fallthru
    _
  // Predicated region
  $region50: #{complex_down.1} parent=0 // pred_check
    _
  $region51: #{complex_down.1} parent=0 // pred_check_branch
    %3122 = sbr.rel (0) target = $region53
  $region52: #{complex_down.1} parent=0 // pred_region
    _
  $region53: #{complex_down.1} parent=0 // pred_fallthru
    _
  // Predicated region
  $region54: #{complex_down.1} parent=0 // pred_check
    _
  $region55: #{complex_down.1} parent=0 // pred_check_branch
    %3124 = sbr.rel (0) target = $region57
  $region56: #{complex_down.1} parent=0 // pred_region
    _
  $region57: #{complex_down.1} parent=0 // pred_fallthru
    _

</llo_original>
